<compile_context>
chip_gen: v5e
topology: v5e:2x2
jax: 0.10.0
libtpu: 0.0.40
codegen_flags: <defaults>
</compile_context>

<pallas_src>
import functools

import jax
import jax.numpy as jnp
from jax import lax
from jax.experimental import pallas as pl
from jax.experimental.pallas import tpu as pltpu


# ----------------------------------------------------------------------------
# Static network configuration (pooling=False branch of SimpleCNN).
# ----------------------------------------------------------------------------
_K = 5                                  # conv kernel size
_S = 2                                  # conv stride
_C_IN = 3
_C_MID = 16                             # conv1 / conv2 output channels
_H_IN = 49                              # 49 -> conv1: 23 -> conv2: 10 -> 16*10*10 = 1600
_OH1 = (_H_IN - _K) // _S + 1           # 23
_OH2 = (_OH1 - _K) // _S + 1            # 10
_P2 = _OH2 * _OH2                       # 100 conv2 output positions per image
_KPATCH = _C_IN * _K * _K               # 75 conv1 patch features (c, i1, j1)
_NTAP = _K * _K                         # 25 conv2 taps
_FC_IN = _C_MID * _P2                   # 1600
_FC_OUT = 64
_N_CLASSES = 11


# ----------------------------------------------------------------------------
# Fused Pallas kernel: conv1 -> relu -> conv2 -> relu -> flatten -> fc -> relu -> final
# ----------------------------------------------------------------------------
def _fused_cnn_kernel(p1t_ref, w1_ref, b1_ref, w2_ref, b2_ref,
                      wfc_ref, bfc_ref, wfin_ref, bfin_ref,
                      out_ref, flat_ref, *, batch):
    ncols = batch * _P2                              # B*100 positions on the lane dim

    w1 = w1_ref[...]                                 # (16, 75)
    b1 = b1_ref[...]                                 # (16, 1)

    # conv1 + relu feeding conv2's tap accumulation, one conv2 tap at a time.
    acc = jnp.zeros((_C_MID, ncols), jnp.float32)
    for t in range(_NTAP):
        patches = p1t_ref[t]                         # (75, B*100) conv1 patches for tap t
        y1 = jnp.dot(w1, patches, preferred_element_type=jnp.float32) + b1
        y1 = jnp.maximum(y1, 0.0)                    # relu(conv1) at the positions tap t reads
        acc = acc + jnp.dot(w2_ref[t], y1, preferred_element_type=jnp.float32)
    h2 = jnp.maximum(acc + b2_ref[...], 0.0)         # (16, B*100) = relu(conv2), channel-major

    # Flatten to PyTorch (C, H, W) order through a small VMEM scratch:
    # flat[b, ch*100 + p] = h2[ch, b*100 + p]
    for b in range(batch):
        for ch in range(_C_MID):
            flat_ref[b:b + 1, ch * _P2:(ch + 1) * _P2] = (
                h2[ch:ch + 1, b * _P2:(b + 1) * _P2])

    flat = flat_ref[...]                                                   # (B, 1600)
    h = jnp.dot(flat, wfc_ref[...], preferred_element_type=jnp.float32) + bfc_ref[...]
    h = jnp.maximum(h, 0.0)                                                # (B, 64)
    out = jnp.dot(h, wfin_ref[...], preferred_element_type=jnp.float32) + bfin_ref[...]
    out_ref[...] = out.astype(out_ref.dtype)                               # (B, 11)


# ----------------------------------------------------------------------------
# Wrapper glue (input side only): conv1 patches grouped by conv2 tap.
# p1t[t=(i2,j2), kk=(c,i1,j1), b*100 + r2*10 + c2]
#   = x[b, c, 2*(2*r2+i2)+i1, 2*(2*c2+j2)+j1]
# ----------------------------------------------------------------------------
def _build_tap_patches(x):
    B = x.shape[0]

    # Stage 1: standard conv1 im2col, feature order (c, i1, j1).
    span1 = _S * (_OH1 - 1) + 1                      # 45
    taps1 = []
    for i1 in range(_K):
        for j1 in range(_K):
            taps1.append(x[:, :, i1:i1 + span1:_S, j1:j1 + span1:_S])  # (B, 3, 23, 23)
    p1 = jnp.stack(taps1, axis=2)                    # (B, 3, 25, 23, 23)
    p1 = p1.reshape(B, _KPATCH, _OH1, _OH1)          # (B, 75, 23, 23)

    # Stage 2: for each conv2 tap (i2, j2), gather the conv1 positions it reads.
    span2 = _S * (_OH2 - 1) + 1                      # 19
    blocks = []
    for i2 in range(_K):
        for j2 in range(_K):
            blk = p1[:, :, i2:i2 + span2:_S, j2:j2 + span2:_S]         # (B, 75, 10, 10)
            blocks.append(blk.reshape(B, _KPATCH, _P2))
    p1x = jnp.stack(blocks, axis=0)                  # (25, B, 75, 100)
    return p1x.transpose(0, 2, 1, 3).reshape(_NTAP, _KPATCH, B * _P2)  # (25, 75, B*100)


# ----------------------------------------------------------------------------
# One-time weight re-layout (outside the per-call path).
# ----------------------------------------------------------------------------
def prepare_params(params):
    return {
        "w1": params["conv1_w"].reshape(_C_MID, _KPATCH),                       # (16, 75)
        "b1": params["conv1_b"].reshape(_C_MID, 1),                             # (16, 1)
        "w2": params["conv2_w"].transpose(2, 3, 0, 1).reshape(_NTAP, _C_MID, _C_MID),  # (25,16,16)[t,o,c]
        "b2": params["conv2_b"].reshape(_C_MID, 1),                             # (16, 1)
        "wfc": params["fc_w"].T,                                                # (1600, 64)
        "bfc": params["fc_b"].reshape(1, _FC_OUT),                              # (1, 64)
        "wfin": params["final_w"].T,                                            # (64, 11)
        "bfin": params["final_b"].reshape(1, _N_CLASSES),                       # (1, 11)
    }


# ----------------------------------------------------------------------------
# Forward: one pallas_call for the whole network.
# ----------------------------------------------------------------------------
def simple_cnn_forward(x, prep):
    B = x.shape[0]
    p1t = _build_tap_patches(x)                      # (25, 75, B*100)

    kernel = functools.partial(_fused_cnn_kernel, batch=B)
    vmem = pl.BlockSpec(memory_space=pltpu.MemorySpace.VMEM)
    return pl.pallas_call(
        kernel,
        out_shape=jax.ShapeDtypeStruct((B, _N_CLASSES), jnp.float32),
        in_specs=[vmem] * 9,
        out_specs=vmem,
        scratch_shapes=[pltpu.VMEM((B, _FC_IN), jnp.float32)],
    )(p1t, prep["w1"], prep["b1"], prep["w2"], prep["b2"],
      prep["wfc"], prep["bfc"], prep["wfin"], prep["bfin"])


# ----------------------------------------------------------------------------
# Pure-JAX reference for the correctness check.
# ----------------------------------------------------------------------------
def simple_cnn_reference(x, params):
    dn = ("NCHW", "OIHW", "NCHW")
    h = lax.conv_general_dilated(x, params["conv1_w"], (2, 2), "VALID",
                                 dimension_numbers=dn)
    h = jnp.maximum(h + params["conv1_b"][None, :, None, None], 0.0)
    h = lax.conv_general_dilated(h, params["conv2_w"], (2, 2), "VALID",
                                 dimension_numbers=dn)
    h = jnp.maximum(h + params["conv2_b"][None, :, None, None], 0.0)
    h = h.reshape(h.shape[0], -1)
    h = jnp.maximum(h @ params["fc_w"].T + params["fc_b"], 0.0)
    return h @ params["final_w"].T + params["final_b"]


# ----------------------------------------------------------------------------
# Deterministic parameter init (PyTorch-default-style uniform fan-in bounds).
# ----------------------------------------------------------------------------
def init_params(key):
    def uinit(k, shape, fan_in):
        bound = 1.0 / jnp.sqrt(fan_in)
        return jax.random.uniform(k, shape, jnp.float32, -bound, bound)

    ks = jax.random.split(key, 8)
    return {
        "conv1_w": uinit(ks[0], (16, 3, 5, 5), 3 * 5 * 5),
        "conv1_b": uinit(ks[1], (16,), 3 * 5 * 5),
        "conv2_w": uinit(ks[2], (16, 16, 5, 5), 16 * 5 * 5),
        "conv2_b": uinit(ks[3], (16,), 16 * 5 * 5),
        "fc_w": uinit(ks[4], (64, 1600), 1600),
        "fc_b": uinit(ks[5], (64,), 1600),
        "final_w": uinit(ks[6], (11, 64), 64),
        "final_b": uinit(ks[7], (11,), 64),
    }


if __name__ == "__main__":
    key = jax.random.PRNGKey(0)
    k_param, k_x = jax.random.split(key)
    params = init_params(k_param)
    prep = prepare_params(params)                    # one-time weight re-layout

    # Input spatial size 49 so that the flattened conv2 output is 16*10*10 = 1600,
    # matching nn.Linear(1600, 64) in the pooling=False branch.
    x = jax.random.normal(k_x, (2, 3, 49, 49), jnp.float32)

    fwd = jax.jit(simple_cnn_forward)
    out = jax.block_until_ready(fwd(x, prep))
    assert out.shape == (2, 11), out.shape

    ref = jax.block_until_ready(jax.jit(simple_cnn_reference)(x, params))
    max_err = float(jnp.max(jnp.abs(out - ref)))
    assert jnp.allclose(out, ref, rtol=5e-4, atol=5e-4), max_err

    print("KERNEL_OK")
</pallas_src>

<mosaic_0001>
module attributes {stable_mosaic.version = 11 : i64} {
  func.func @_fused_cnn_kernel(%arg0: memref<25x75x200xf32, #tpu.memory_space<vmem>>, %arg1: memref<16x75xf32, #tpu.memory_space<vmem>>, %arg2: memref<16x1xf32, #tpu.memory_space<vmem>>, %arg3: memref<25x16x16xf32, #tpu.memory_space<vmem>>, %arg4: memref<16x1xf32, #tpu.memory_space<vmem>>, %arg5: memref<1600x64xf32, #tpu.memory_space<vmem>>, %arg6: memref<1x64xf32, #tpu.memory_space<vmem>>, %arg7: memref<64x11xf32, #tpu.memory_space<vmem>>, %arg8: memref<1x11xf32, #tpu.memory_space<vmem>>, %arg9: memref<2x11xf32, #tpu.memory_space<vmem>>, %arg10: memref<2x1600xf32, #tpu.memory_space<vmem>>) attributes {dimension_semantics = [], scalar_prefetch = 0 : i64, scratch_operands = 1 : i64, tpu.core_type = #tpu.core_type<tc>} {
    %c0 = arith.constant 0 : index
    %c0_0 = arith.constant 0 : index
    %0 = vector.load %arg1[%c0, %c0_0] : memref<16x75xf32, #tpu.memory_space<vmem>>, vector<16x75xf32>
    %c0_1 = arith.constant 0 : index
    %c0_2 = arith.constant 0 : index
    %1 = vector.load %arg2[%c0_1, %c0_2] : memref<16x1xf32, #tpu.memory_space<vmem>>, vector<16x1xf32>
    %cst = arith.constant 0.000000e+00 : f32
    %2 = vector.broadcast %cst : f32 to vector<16x200xf32>
    %c0_3 = arith.constant 0 : index
    %c0_4 = arith.constant 0 : index
    %c0_5 = arith.constant 0 : index
    %3 = vector.load %arg0[%c0_3, %c0_4, %c0_5] : memref<25x75x200xf32, #tpu.memory_space<vmem>>, vector<1x75x200xf32>
    %4 = vector.shape_cast %3 : vector<1x75x200xf32> to vector<75x200xf32>
    %cst_6 = arith.constant dense<0.000000e+00> : vector<16x200xf32>
    %5 = tpu.matmul %0, %4, %cst_6 {dimension_numbers = #tpu.dot_dimension_numbers<[1], [0], [0], [1], [0, 0, 1, 1], [], []>} : vector<16x75xf32>, vector<75x200xf32>, vector<16x200xf32> -> vector<16x200xf32>
    %6 = vector.broadcast %1 : vector<16x1xf32> to vector<16x200xf32>
    %7 = arith.addf %5, %6 : vector<16x200xf32>
    %cst_7 = arith.constant 0.000000e+00 : f32
    %8 = vector.broadcast %cst_7 : f32 to vector<16x200xf32>
    %9 = arith.maximumf %7, %8 : vector<16x200xf32>
    %c0_8 = arith.constant 0 : index
    %c0_9 = arith.constant 0 : index
    %c0_10 = arith.constant 0 : index
    %10 = vector.load %arg3[%c0_8, %c0_9, %c0_10] : memref<25x16x16xf32, #tpu.memory_space<vmem>>, vector<1x16x16xf32>
    %11 = vector.shape_cast %10 : vector<1x16x16xf32> to vector<16x16xf32>
    %cst_11 = arith.constant dense<0.000000e+00> : vector<16x200xf32>
    %12 = tpu.matmul %11, %9, %cst_11 {dimension_numbers = #tpu.dot_dimension_numbers<[1], [0], [0], [1], [0, 0, 1, 1], [], []>} : vector<16x16xf32>, vector<16x200xf32>, vector<16x200xf32> -> vector<16x200xf32>
    %13 = arith.addf %2, %12 : vector<16x200xf32>
    %c1 = arith.constant 1 : index
    %c0_12 = arith.constant 0 : index
    %c0_13 = arith.constant 0 : index
    %14 = vector.load %arg0[%c1, %c0_12, %c0_13] : memref<25x75x200xf32, #tpu.memory_space<vmem>>, vector<1x75x200xf32>
    %15 = vector.shape_cast %14 : vector<1x75x200xf32> to vector<75x200xf32>
    %cst_14 = arith.constant dense<0.000000e+00> : vector<16x200xf32>
    %16 = tpu.matmul %0, %15, %cst_14 {dimension_numbers = #tpu.dot_dimension_numbers<[1], [0], [0], [1], [0, 0, 1, 1], [], []>} : vector<16x75xf32>, vector<75x200xf32>, vector<16x200xf32> -> vector<16x200xf32>
    %17 = vector.broadcast %1 : vector<16x1xf32> to vector<16x200xf32>
    %18 = arith.addf %16, %17 : vector<16x200xf32>
    %cst_15 = arith.constant 0.000000e+00 : f32
    %19 = vector.broadcast %cst_15 : f32 to vector<16x200xf32>
    %20 = arith.maximumf %18, %19 : vector<16x200xf32>
    %c1_16 = arith.constant 1 : index
    %c0_17 = arith.constant 0 : index
    %c0_18 = arith.constant 0 : index
    %21 = vector.load %arg3[%c1_16, %c0_17, %c0_18] : memref<25x16x16xf32, #tpu.memory_space<vmem>>, vector<1x16x16xf32>
    %22 = vector.shape_cast %21 : vector<1x16x16xf32> to vector<16x16xf32>
    %cst_19 = arith.constant dense<0.000000e+00> : vector<16x200xf32>
    %23 = tpu.matmul %22, %20, %cst_19 {dimension_numbers = #tpu.dot_dimension_numbers<[1], [0], [0], [1], [0, 0, 1, 1], [], []>} : vector<16x16xf32>, vector<16x200xf32>, vector<16x200xf32> -> vector<16x200xf32>
    %24 = arith.addf %13, %23 : vector<16x200xf32>
    %c2 = arith.constant 2 : index
    %c0_20 = arith.constant 0 : index
    %c0_21 = arith.constant 0 : index
    %25 = vector.load %arg0[%c2, %c0_20, %c0_21] : memref<25x75x200xf32, #tpu.memory_space<vmem>>, vector<1x75x200xf32>
    %26 = vector.shape_cast %25 : vector<1x75x200xf32> to vector<75x200xf32>
    %cst_22 = arith.constant dense<0.000000e+00> : vector<16x200xf32>
    %27 = tpu.matmul %0, %26, %cst_22 {dimension_numbers = #tpu.dot_dimension_numbers<[1], [0], [0], [1], [0, 0, 1, 1], [], []>} : vector<16x75xf32>, vector<75x200xf32>, vector<16x200xf32> -> vector<16x200xf32>
    %28 = vector.broadcast %1 : vector<16x1xf32> to vector<16x200xf32>
    %29 = arith.addf %27, %28 : vector<16x200xf32>
    %cst_23 = arith.constant 0.000000e+00 : f32
    %30 = vector.broadcast %cst_23 : f32 to vector<16x200xf32>
    %31 = arith.maximumf %29, %30 : vector<16x200xf32>
    %c2_24 = arith.constant 2 : index
    %c0_25 = arith.constant 0 : index
    %c0_26 = arith.constant 0 : index
    %32 = vector.load %arg3[%c2_24, %c0_25, %c0_26] : memref<25x16x16xf32, #tpu.memory_space<vmem>>, vector<1x16x16xf32>
    %33 = vector.shape_cast %32 : vector<1x16x16xf32> to vector<16x16xf32>
    %cst_27 = arith.constant dense<0.000000e+00> : vector<16x200xf32>
    %34 = tpu.matmul %33, %31, %cst_27 {dimension_numbers = #tpu.dot_dimension_numbers<[1], [0], [0], [1], [0, 0, 1, 1], [], []>} : vector<16x16xf32>, vector<16x200xf32>, vector<16x200xf32> -> vector<16x200xf32>
    %35 = arith.addf %24, %34 : vector<16x200xf32>
    %c3 = arith.constant 3 : index
    %c0_28 = arith.constant 0 : index
    %c0_29 = arith.constant 0 : index
    %36 = vector.load %arg0[%c3, %c0_28, %c0_29] : memref<25x75x200xf32, #tpu.memory_space<vmem>>, vector<1x75x200xf32>
    %37 = vector.shape_cast %36 : vector<1x75x200xf32> to vector<75x200xf32>
    %cst_30 = arith.constant dense<0.000000e+00> : vector<16x200xf32>
    %38 = tpu.matmul %0, %37, %cst_30 {dimension_numbers = #tpu.dot_dimension_numbers<[1], [0], [0], [1], [0, 0, 1, 1], [], []>} : vector<16x75xf32>, vector<75x200xf32>, vector<16x200xf32> -> vector<16x200xf32>
    %39 = vector.broadcast %1 : vector<16x1xf32> to vector<16x200xf32>
    %40 = arith.addf %38, %39 : vector<16x200xf32>
    %cst_31 = arith.constant 0.000000e+00 : f32
    %41 = vector.broadcast %cst_31 : f32 to vector<16x200xf32>
    %42 = arith.maximumf %40, %41 : vector<16x200xf32>
    %c3_32 = arith.constant 3 : index
    %c0_33 = arith.constant 0 : index
    %c0_34 = arith.constant 0 : index
    %43 = vector.load %arg3[%c3_32, %c0_33, %c0_34] : memref<25x16x16xf32, #tpu.memory_space<vmem>>, vector<1x16x16xf32>
    %44 = vector.shape_cast %43 : vector<1x16x16xf32> to vector<16x16xf32>
    %cst_35 = arith.constant dense<0.000000e+00> : vector<16x200xf32>
    %45 = tpu.matmul %44, %42, %cst_35 {dimension_numbers = #tpu.dot_dimension_numbers<[1], [0], [0], [1], [0, 0, 1, 1], [], []>} : vector<16x16xf32>, vector<16x200xf32>, vector<16x200xf32> -> vector<16x200xf32>
    %46 = arith.addf %35, %45 : vector<16x200xf32>
    %c4 = arith.constant 4 : index
    %c0_36 = arith.constant 0 : index
    %c0_37 = arith.constant 0 : index
    %47 = vector.load %arg0[%c4, %c0_36, %c0_37] : memref<25x75x200xf32, #tpu.memory_space<vmem>>, vector<1x75x200xf32>
    %48 = vector.shape_cast %47 : vector<1x75x200xf32> to vector<75x200xf32>
    %cst_38 = arith.constant dense<0.000000e+00> : vector<16x200xf32>
    %49 = tpu.matmul %0, %48, %cst_38 {dimension_numbers = #tpu.dot_dimension_numbers<[1], [0], [0], [1], [0, 0, 1, 1], [], []>} : vector<16x75xf32>, vector<75x200xf32>, vector<16x200xf32> -> vector<16x200xf32>
    %50 = vector.broadcast %1 : vector<16x1xf32> to vector<16x200xf32>
    %51 = arith.addf %49, %50 : vector<16x200xf32>
    %cst_39 = arith.constant 0.000000e+00 : f32
    %52 = vector.broadcast %cst_39 : f32 to vector<16x200xf32>
    %53 = arith.maximumf %51, %52 : vector<16x200xf32>
    %c4_40 = arith.constant 4 : index
    %c0_41 = arith.constant 0 : index
    %c0_42 = arith.constant 0 : index
    %54 = vector.load %arg3[%c4_40, %c0_41, %c0_42] : memref<25x16x16xf32, #tpu.memory_space<vmem>>, vector<1x16x16xf32>
    %55 = vector.shape_cast %54 : vector<1x16x16xf32> to vector<16x16xf32>
    %cst_43 = arith.constant dense<0.000000e+00> : vector<16x200xf32>
    %56 = tpu.matmul %55, %53, %cst_43 {dimension_numbers = #tpu.dot_dimension_numbers<[1], [0], [0], [1], [0, 0, 1, 1], [], []>} : vector<16x16xf32>, vector<16x200xf32>, vector<16x200xf32> -> vector<16x200xf32>
    %57 = arith.addf %46, %56 : vector<16x200xf32>
    %c5 = arith.constant 5 : index
    %c0_44 = arith.constant 0 : index
    %c0_45 = arith.constant 0 : index
    %58 = vector.load %arg0[%c5, %c0_44, %c0_45] : memref<25x75x200xf32, #tpu.memory_space<vmem>>, vector<1x75x200xf32>
    %59 = vector.shape_cast %58 : vector<1x75x200xf32> to vector<75x200xf32>
    %cst_46 = arith.constant dense<0.000000e+00> : vector<16x200xf32>
    %60 = tpu.matmul %0, %59, %cst_46 {dimension_numbers = #tpu.dot_dimension_numbers<[1], [0], [0], [1], [0, 0, 1, 1], [], []>} : vector<16x75xf32>, vector<75x200xf32>, vector<16x200xf32> -> vector<16x200xf32>
    %61 = vector.broadcast %1 : vector<16x1xf32> to vector<16x200xf32>
    %62 = arith.addf %60, %61 : vector<16x200xf32>
    %cst_47 = arith.constant 0.000000e+00 : f32
    %63 = vector.broadcast %cst_47 : f32 to vector<16x200xf32>
    %64 = arith.maximumf %62, %63 : vector<16x200xf32>
    %c5_48 = arith.constant 5 : index
    %c0_49 = arith.constant 0 : index
    %c0_50 = arith.constant 0 : index
    %65 = vector.load %arg3[%c5_48, %c0_49, %c0_50] : memref<25x16x16xf32, #tpu.memory_space<vmem>>, vector<1x16x16xf32>
    %66 = vector.shape_cast %65 : vector<1x16x16xf32> to vector<16x16xf32>
    %cst_51 = arith.constant dense<0.000000e+00> : vector<16x200xf32>
    %67 = tpu.matmul %66, %64, %cst_51 {dimension_numbers = #tpu.dot_dimension_numbers<[1], [0], [0], [1], [0, 0, 1, 1], [], []>} : vector<16x16xf32>, vector<16x200xf32>, vector<16x200xf32> -> vector<16x200xf32>
    %68 = arith.addf %57, %67 : vector<16x200xf32>
    %c6 = arith.constant 6 : index
    %c0_52 = arith.constant 0 : index
    %c0_53 = arith.constant 0 : index
    %69 = vector.load %arg0[%c6, %c0_52, %c0_53] : memref<25x75x200xf32, #tpu.memory_space<vmem>>, vector<1x75x200xf32>
    %70 = vector.shape_cast %69 : vector<1x75x200xf32> to vector<75x200xf32>
    %cst_54 = arith.constant dense<0.000000e+00> : vector<16x200xf32>
    %71 = tpu.matmul %0, %70, %cst_54 {dimension_numbers = #tpu.dot_dimension_numbers<[1], [0], [0], [1], [0, 0, 1, 1], [], []>} : vector<16x75xf32>, vector<75x200xf32>, vector<16x200xf32> -> vector<16x200xf32>
    %72 = vector.broadcast %1 : vector<16x1xf32> to vector<16x200xf32>
    %73 = arith.addf %71, %72 : vector<16x200xf32>
    %cst_55 = arith.constant 0.000000e+00 : f32
    %74 = vector.broadcast %cst_55 : f32 to vector<16x200xf32>
    %75 = arith.maximumf %73, %74 : vector<16x200xf32>
    %c6_56 = arith.constant 6 : index
    %c0_57 = arith.constant 0 : index
    %c0_58 = arith.constant 0 : index
    %76 = vector.load %arg3[%c6_56, %c0_57, %c0_58] : memref<25x16x16xf32, #tpu.memory_space<vmem>>, vector<1x16x16xf32>
    %77 = vector.shape_cast %76 : vector<1x16x16xf32> to vector<16x16xf32>
    %cst_59 = arith.constant dense<0.000000e+00> : vector<16x200xf32>
    %78 = tpu.matmul %77, %75, %cst_59 {dimension_numbers = #tpu.dot_dimension_numbers<[1], [0], [0], [1], [0, 0, 1, 1], [], []>} : vector<16x16xf32>, vector<16x200xf32>, vector<16x200xf32> -> vector<16x200xf32>
    %79 = arith.addf %68, %78 : vector<16x200xf32>
    %c7 = arith.constant 7 : index
    %c0_60 = arith.constant 0 : index
    %c0_61 = arith.constant 0 : index
    %80 = vector.load %arg0[%c7, %c0_60, %c0_61] : memref<25x75x200xf32, #tpu.memory_space<vmem>>, vector<1x75x200xf32>
    %81 = vector.shape_cast %80 : vector<1x75x200xf32> to vector<75x200xf32>
    %cst_62 = arith.constant dense<0.000000e+00> : vector<16x200xf32>
    %82 = tpu.matmul %0, %81, %cst_62 {dimension_numbers = #tpu.dot_dimension_numbers<[1], [0], [0], [1], [0, 0, 1, 1], [], []>} : vector<16x75xf32>, vector<75x200xf32>, vector<16x200xf32> -> vector<16x200xf32>
    %83 = vector.broadcast %1 : vector<16x1xf32> to vector<16x200xf32>
    %84 = arith.addf %82, %83 : vector<16x200xf32>
    %cst_63 = arith.constant 0.000000e+00 : f32
    %85 = vector.broadcast %cst_63 : f32 to vector<16x200xf32>
    %86 = arith.maximumf %84, %85 : vector<16x200xf32>
    %c7_64 = arith.constant 7 : index
    %c0_65 = arith.constant 0 : index
    %c0_66 = arith.constant 0 : index
    %87 = vector.load %arg3[%c7_64, %c0_65, %c0_66] : memref<25x16x16xf32, #tpu.memory_space<vmem>>, vector<1x16x16xf32>
    %88 = vector.shape_cast %87 : vector<1x16x16xf32> to vector<16x16xf32>
    %cst_67 = arith.constant dense<0.000000e+00> : vector<16x200xf32>
    %89 = tpu.matmul %88, %86, %cst_67 {dimension_numbers = #tpu.dot_dimension_numbers<[1], [0], [0], [1], [0, 0, 1, 1], [], []>} : vector<16x16xf32>, vector<16x200xf32>, vector<16x200xf32> -> vector<16x200xf32>
    %90 = arith.addf %79, %89 : vector<16x200xf32>
    %c8 = arith.constant 8 : index
    %c0_68 = arith.constant 0 : index
    %c0_69 = arith.constant 0 : index
    %91 = vector.load %arg0[%c8, %c0_68, %c0_69] : memref<25x75x200xf32, #tpu.memory_space<vmem>>, vector<1x75x200xf32>
    %92 = vector.shape_cast %91 : vector<1x75x200xf32> to vector<75x200xf32>
    %cst_70 = arith.constant dense<0.000000e+00> : vector<16x200xf32>
    %93 = tpu.matmul %0, %92, %cst_70 {dimension_numbers = #tpu.dot_dimension_numbers<[1], [0], [0], [1], [0, 0, 1, 1], [], []>} : vector<16x75xf32>, vector<75x200xf32>, vector<16x200xf32> -> vector<16x200xf32>
    %94 = vector.broadcast %1 : vector<16x1xf32> to vector<16x200xf32>
    %95 = arith.addf %93, %94 : vector<16x200xf32>
    %cst_71 = arith.constant 0.000000e+00 : f32
    %96 = vector.broadcast %cst_71 : f32 to vector<16x200xf32>
    %97 = arith.maximumf %95, %96 : vector<16x200xf32>
    %c8_72 = arith.constant 8 : index
    %c0_73 = arith.constant 0 : index
    %c0_74 = arith.constant 0 : index
    %98 = vector.load %arg3[%c8_72, %c0_73, %c0_74] : memref<25x16x16xf32, #tpu.memory_space<vmem>>, vector<1x16x16xf32>
    %99 = vector.shape_cast %98 : vector<1x16x16xf32> to vector<16x16xf32>
    %cst_75 = arith.constant dense<0.000000e+00> : vector<16x200xf32>
    %100 = tpu.matmul %99, %97, %cst_75 {dimension_numbers = #tpu.dot_dimension_numbers<[1], [0], [0], [1], [0, 0, 1, 1], [], []>} : vector<16x16xf32>, vector<16x200xf32>, vector<16x200xf32> -> vector<16x200xf32>
    %101 = arith.addf %90, %100 : vector<16x200xf32>
    %c9 = arith.constant 9 : index
    %c0_76 = arith.constant 0 : index
    %c0_77 = arith.constant 0 : index
    %102 = vector.load %arg0[%c9, %c0_76, %c0_77] : memref<25x75x200xf32, #tpu.memory_space<vmem>>, vector<1x75x200xf32>
    %103 = vector.shape_cast %102 : vector<1x75x200xf32> to vector<75x200xf32>
    %cst_78 = arith.constant dense<0.000000e+00> : vector<16x200xf32>
    %104 = tpu.matmul %0, %103, %cst_78 {dimension_numbers = #tpu.dot_dimension_numbers<[1], [0], [0], [1], [0, 0, 1, 1], [], []>} : vector<16x75xf32>, vector<75x200xf32>, vector<16x200xf32> -> vector<16x200xf32>
    %105 = vector.broadcast %1 : vector<16x1xf32> to vector<16x200xf32>
    %106 = arith.addf %104, %105 : vector<16x200xf32>
    %cst_79 = arith.constant 0.000000e+00 : f32
    %107 = vector.broadcast %cst_79 : f32 to vector<16x200xf32>
    %108 = arith.maximumf %106, %107 : vector<16x200xf32>
    %c9_80 = arith.constant 9 : index
    %c0_81 = arith.constant 0 : index
    %c0_82 = arith.constant 0 : index
    %109 = vector.load %arg3[%c9_80, %c0_81, %c0_82] : memref<25x16x16xf32, #tpu.memory_space<vmem>>, vector<1x16x16xf32>
    %110 = vector.shape_cast %109 : vector<1x16x16xf32> to vector<16x16xf32>
    %cst_83 = arith.constant dense<0.000000e+00> : vector<16x200xf32>
    %111 = tpu.matmul %110, %108, %cst_83 {dimension_numbers = #tpu.dot_dimension_numbers<[1], [0], [0], [1], [0, 0, 1, 1], [], []>} : vector<16x16xf32>, vector<16x200xf32>, vector<16x200xf32> -> vector<16x200xf32>
    %112 = arith.addf %101, %111 : vector<16x200xf32>
    %c10 = arith.constant 10 : index
    %c0_84 = arith.constant 0 : index
    %c0_85 = arith.constant 0 : index
    %113 = vector.load %arg0[%c10, %c0_84, %c0_85] : memref<25x75x200xf32, #tpu.memory_space<vmem>>, vector<1x75x200xf32>
    %114 = vector.shape_cast %113 : vector<1x75x200xf32> to vector<75x200xf32>
    %cst_86 = arith.constant dense<0.000000e+00> : vector<16x200xf32>
    %115 = tpu.matmul %0, %114, %cst_86 {dimension_numbers = #tpu.dot_dimension_numbers<[1], [0], [0], [1], [0, 0, 1, 1], [], []>} : vector<16x75xf32>, vector<75x200xf32>, vector<16x200xf32> -> vector<16x200xf32>
    %116 = vector.broadcast %1 : vector<16x1xf32> to vector<16x200xf32>
    %117 = arith.addf %115, %116 : vector<16x200xf32>
    %cst_87 = arith.constant 0.000000e+00 : f32
    %118 = vector.broadcast %cst_87 : f32 to vector<16x200xf32>
    %119 = arith.maximumf %117, %118 : vector<16x200xf32>
    %c10_88 = arith.constant 10 : index
    %c0_89 = arith.constant 0 : index
    %c0_90 = arith.constant 0 : index
    %120 = vector.load %arg3[%c10_88, %c0_89, %c0_90] : memref<25x16x16xf32, #tpu.memory_space<vmem>>, vector<1x16x16xf32>
    %121 = vector.shape_cast %120 : vector<1x16x16xf32> to vector<16x16xf32>
    %cst_91 = arith.constant dense<0.000000e+00> : vector<16x200xf32>
    %122 = tpu.matmul %121, %119, %cst_91 {dimension_numbers = #tpu.dot_dimension_numbers<[1], [0], [0], [1], [0, 0, 1, 1], [], []>} : vector<16x16xf32>, vector<16x200xf32>, vector<16x200xf32> -> vector<16x200xf32>
    %123 = arith.addf %112, %122 : vector<16x200xf32>
    %c11 = arith.constant 11 : index
    %c0_92 = arith.constant 0 : index
    %c0_93 = arith.constant 0 : index
    %124 = vector.load %arg0[%c11, %c0_92, %c0_93] : memref<25x75x200xf32, #tpu.memory_space<vmem>>, vector<1x75x200xf32>
    %125 = vector.shape_cast %124 : vector<1x75x200xf32> to vector<75x200xf32>
    %cst_94 = arith.constant dense<0.000000e+00> : vector<16x200xf32>
    %126 = tpu.matmul %0, %125, %cst_94 {dimension_numbers = #tpu.dot_dimension_numbers<[1], [0], [0], [1], [0, 0, 1, 1], [], []>} : vector<16x75xf32>, vector<75x200xf32>, vector<16x200xf32> -> vector<16x200xf32>
    %127 = vector.broadcast %1 : vector<16x1xf32> to vector<16x200xf32>
    %128 = arith.addf %126, %127 : vector<16x200xf32>
    %cst_95 = arith.constant 0.000000e+00 : f32
    %129 = vector.broadcast %cst_95 : f32 to vector<16x200xf32>
    %130 = arith.maximumf %128, %129 : vector<16x200xf32>
    %c11_96 = arith.constant 11 : index
    %c0_97 = arith.constant 0 : index
    %c0_98 = arith.constant 0 : index
    %131 = vector.load %arg3[%c11_96, %c0_97, %c0_98] : memref<25x16x16xf32, #tpu.memory_space<vmem>>, vector<1x16x16xf32>
    %132 = vector.shape_cast %131 : vector<1x16x16xf32> to vector<16x16xf32>
    %cst_99 = arith.constant dense<0.000000e+00> : vector<16x200xf32>
    %133 = tpu.matmul %132, %130, %cst_99 {dimension_numbers = #tpu.dot_dimension_numbers<[1], [0], [0], [1], [0, 0, 1, 1], [], []>} : vector<16x16xf32>, vector<16x200xf32>, vector<16x200xf32> -> vector<16x200xf32>
    %134 = arith.addf %123, %133 : vector<16x200xf32>
    %c12 = arith.constant 12 : index
    %c0_100 = arith.constant 0 : index
    %c0_101 = arith.constant 0 : index
    %135 = vector.load %arg0[%c12, %c0_100, %c0_101] : memref<25x75x200xf32, #tpu.memory_space<vmem>>, vector<1x75x200xf32>
    %136 = vector.shape_cast %135 : vector<1x75x200xf32> to vector<75x200xf32>
    %cst_102 = arith.constant dense<0.000000e+00> : vector<16x200xf32>
    %137 = tpu.matmul %0, %136, %cst_102 {dimension_numbers = #tpu.dot_dimension_numbers<[1], [0], [0], [1], [0, 0, 1, 1], [], []>} : vector<16x75xf32>, vector<75x200xf32>, vector<16x200xf32> -> vector<16x200xf32>
    %138 = vector.broadcast %1 : vector<16x1xf32> to vector<16x200xf32>
    %139 = arith.addf %137, %138 : vector<16x200xf32>
    %cst_103 = arith.constant 0.000000e+00 : f32
    %140 = vector.broadcast %cst_103 : f32 to vector<16x200xf32>
    %141 = arith.maximumf %139, %140 : vector<16x200xf32>
    %c12_104 = arith.constant 12 : index
    %c0_105 = arith.constant 0 : index
    %c0_106 = arith.constant 0 : index
    %142 = vector.load %arg3[%c12_104, %c0_105, %c0_106] : memref<25x16x16xf32, #tpu.memory_space<vmem>>, vector<1x16x16xf32>
    %143 = vector.shape_cast %142 : vector<1x16x16xf32> to vector<16x16xf32>
    %cst_107 = arith.constant dense<0.000000e+00> : vector<16x200xf32>
    %144 = tpu.matmul %143, %141, %cst_107 {dimension_numbers = #tpu.dot_dimension_numbers<[1], [0], [0], [1], [0, 0, 1, 1], [], []>} : vector<16x16xf32>, vector<16x200xf32>, vector<16x200xf32> -> vector<16x200xf32>
    %145 = arith.addf %134, %144 : vector<16x200xf32>
    %c13 = arith.constant 13 : index
    %c0_108 = arith.constant 0 : index
    %c0_109 = arith.constant 0 : index
    %146 = vector.load %arg0[%c13, %c0_108, %c0_109] : memref<25x75x200xf32, #tpu.memory_space<vmem>>, vector<1x75x200xf32>
    %147 = vector.shape_cast %146 : vector<1x75x200xf32> to vector<75x200xf32>
    %cst_110 = arith.constant dense<0.000000e+00> : vector<16x200xf32>
    %148 = tpu.matmul %0, %147, %cst_110 {dimension_numbers = #tpu.dot_dimension_numbers<[1], [0], [0], [1], [0, 0, 1, 1], [], []>} : vector<16x75xf32>, vector<75x200xf32>, vector<16x200xf32> -> vector<16x200xf32>
    %149 = vector.broadcast %1 : vector<16x1xf32> to vector<16x200xf32>
    %150 = arith.addf %148, %149 : vector<16x200xf32>
    %cst_111 = arith.constant 0.000000e+00 : f32
    %151 = vector.broadcast %cst_111 : f32 to vector<16x200xf32>
    %152 = arith.maximumf %150, %151 : vector<16x200xf32>
    %c13_112 = arith.constant 13 : index
    %c0_113 = arith.constant 0 : index
    %c0_114 = arith.constant 0 : index
    %153 = vector.load %arg3[%c13_112, %c0_113, %c0_114] : memref<25x16x16xf32, #tpu.memory_space<vmem>>, vector<1x16x16xf32>
    %154 = vector.shape_cast %153 : vector<1x16x16xf32> to vector<16x16xf32>
    %cst_115 = arith.constant dense<0.000000e+00> : vector<16x200xf32>
    %155 = tpu.matmul %154, %152, %cst_115 {dimension_numbers = #tpu.dot_dimension_numbers<[1], [0], [0], [1], [0, 0, 1, 1], [], []>} : vector<16x16xf32>, vector<16x200xf32>, vector<16x200xf32> -> vector<16x200xf32>
    %156 = arith.addf %145, %155 : vector<16x200xf32>
    %c14 = arith.constant 14 : index
    %c0_116 = arith.constant 0 : index
    %c0_117 = arith.constant 0 : index
    %157 = vector.load %arg0[%c14, %c0_116, %c0_117] : memref<25x75x200xf32, #tpu.memory_space<vmem>>, vector<1x75x200xf32>
    %158 = vector.shape_cast %157 : vector<1x75x200xf32> to vector<75x200xf32>
    %cst_118 = arith.constant dense<0.000000e+00> : vector<16x200xf32>
    %159 = tpu.matmul %0, %158, %cst_118 {dimension_numbers = #tpu.dot_dimension_numbers<[1], [0], [0], [1], [0, 0, 1, 1], [], []>} : vector<16x75xf32>, vector<75x200xf32>, vector<16x200xf32> -> vector<16x200xf32>
    %160 = vector.broadcast %1 : vector<16x1xf32> to vector<16x200xf32>
    %161 = arith.addf %159, %160 : vector<16x200xf32>
    %cst_119 = arith.constant 0.000000e+00 : f32
    %162 = vector.broadcast %cst_119 : f32 to vector<16x200xf32>
    %163 = arith.maximumf %161, %162 : vector<16x200xf32>
    %c14_120 = arith.constant 14 : index
    %c0_121 = arith.constant 0 : index
    %c0_122 = arith.constant 0 : index
    %164 = vector.load %arg3[%c14_120, %c0_121, %c0_122] : memref<25x16x16xf32, #tpu.memory_space<vmem>>, vector<1x16x16xf32>
    %165 = vector.shape_cast %164 : vector<1x16x16xf32> to vector<16x16xf32>
    %cst_123 = arith.constant dense<0.000000e+00> : vector<16x200xf32>
    %166 = tpu.matmul %165, %163, %cst_123 {dimension_numbers = #tpu.dot_dimension_numbers<[1], [0], [0], [1], [0, 0, 1, 1], [], []>} : vector<16x16xf32>, vector<16x200xf32>, vector<16x200xf32> -> vector<16x200xf32>
    %167 = arith.addf %156, %166 : vector<16x200xf32>
    %c15 = arith.constant 15 : index
    %c0_124 = arith.constant 0 : index
    %c0_125 = arith.constant 0 : index
    %168 = vector.load %arg0[%c15, %c0_124, %c0_125] : memref<25x75x200xf32, #tpu.memory_space<vmem>>, vector<1x75x200xf32>
    %169 = vector.shape_cast %168 : vector<1x75x200xf32> to vector<75x200xf32>
    %cst_126 = arith.constant dense<0.000000e+00> : vector<16x200xf32>
    %170 = tpu.matmul %0, %169, %cst_126 {dimension_numbers = #tpu.dot_dimension_numbers<[1], [0], [0], [1], [0, 0, 1, 1], [], []>} : vector<16x75xf32>, vector<75x200xf32>, vector<16x200xf32> -> vector<16x200xf32>
    %171 = vector.broadcast %1 : vector<16x1xf32> to vector<16x200xf32>
    %172 = arith.addf %170, %171 : vector<16x200xf32>
    %cst_127 = arith.constant 0.000000e+00 : f32
    %173 = vector.broadcast %cst_127 : f32 to vector<16x200xf32>
    %174 = arith.maximumf %172, %173 : vector<16x200xf32>
    %c15_128 = arith.constant 15 : index
    %c0_129 = arith.constant 0 : index
    %c0_130 = arith.constant 0 : index
    %175 = vector.load %arg3[%c15_128, %c0_129, %c0_130] : memref<25x16x16xf32, #tpu.memory_space<vmem>>, vector<1x16x16xf32>
    %176 = vector.shape_cast %175 : vector<1x16x16xf32> to vector<16x16xf32>
    %cst_131 = arith.constant dense<0.000000e+00> : vector<16x200xf32>
    %177 = tpu.matmul %176, %174, %cst_131 {dimension_numbers = #tpu.dot_dimension_numbers<[1], [0], [0], [1], [0, 0, 1, 1], [], []>} : vector<16x16xf32>, vector<16x200xf32>, vector<16x200xf32> -> vector<16x200xf32>
    %178 = arith.addf %167, %177 : vector<16x200xf32>
    %c16 = arith.constant 16 : index
    %c0_132 = arith.constant 0 : index
    %c0_133 = arith.constant 0 : index
    %179 = vector.load %arg0[%c16, %c0_132, %c0_133] : memref<25x75x200xf32, #tpu.memory_space<vmem>>, vector<1x75x200xf32>
    %180 = vector.shape_cast %179 : vector<1x75x200xf32> to vector<75x200xf32>
    %cst_134 = arith.constant dense<0.000000e+00> : vector<16x200xf32>
    %181 = tpu.matmul %0, %180, %cst_134 {dimension_numbers = #tpu.dot_dimension_numbers<[1], [0], [0], [1], [0, 0, 1, 1], [], []>} : vector<16x75xf32>, vector<75x200xf32>, vector<16x200xf32> -> vector<16x200xf32>
    %182 = vector.broadcast %1 : vector<16x1xf32> to vector<16x200xf32>
    %183 = arith.addf %181, %182 : vector<16x200xf32>
    %cst_135 = arith.constant 0.000000e+00 : f32
    %184 = vector.broadcast %cst_135 : f32 to vector<16x200xf32>
    %185 = arith.maximumf %183, %184 : vector<16x200xf32>
    %c16_136 = arith.constant 16 : index
    %c0_137 = arith.constant 0 : index
    %c0_138 = arith.constant 0 : index
    %186 = vector.load %arg3[%c16_136, %c0_137, %c0_138] : memref<25x16x16xf32, #tpu.memory_space<vmem>>, vector<1x16x16xf32>
    %187 = vector.shape_cast %186 : vector<1x16x16xf32> to vector<16x16xf32>
    %cst_139 = arith.constant dense<0.000000e+00> : vector<16x200xf32>
    %188 = tpu.matmul %187, %185, %cst_139 {dimension_numbers = #tpu.dot_dimension_numbers<[1], [0], [0], [1], [0, 0, 1, 1], [], []>} : vector<16x16xf32>, vector<16x200xf32>, vector<16x200xf32> -> vector<16x200xf32>
    %189 = arith.addf %178, %188 : vector<16x200xf32>
    %c17 = arith.constant 17 : index
    %c0_140 = arith.constant 0 : index
    %c0_141 = arith.constant 0 : index
    %190 = vector.load %arg0[%c17, %c0_140, %c0_141] : memref<25x75x200xf32, #tpu.memory_space<vmem>>, vector<1x75x200xf32>
    %191 = vector.shape_cast %190 : vector<1x75x200xf32> to vector<75x200xf32>
    %cst_142 = arith.constant dense<0.000000e+00> : vector<16x200xf32>
    %192 = tpu.matmul %0, %191, %cst_142 {dimension_numbers = #tpu.dot_dimension_numbers<[1], [0], [0], [1], [0, 0, 1, 1], [], []>} : vector<16x75xf32>, vector<75x200xf32>, vector<16x200xf32> -> vector<16x200xf32>
    %193 = vector.broadcast %1 : vector<16x1xf32> to vector<16x200xf32>
    %194 = arith.addf %192, %193 : vector<16x200xf32>
    %cst_143 = arith.constant 0.000000e+00 : f32
    %195 = vector.broadcast %cst_143 : f32 to vector<16x200xf32>
    %196 = arith.maximumf %194, %195 : vector<16x200xf32>
    %c17_144 = arith.constant 17 : index
    %c0_145 = arith.constant 0 : index
    %c0_146 = arith.constant 0 : index
    %197 = vector.load %arg3[%c17_144, %c0_145, %c0_146] : memref<25x16x16xf32, #tpu.memory_space<vmem>>, vector<1x16x16xf32>
    %198 = vector.shape_cast %197 : vector<1x16x16xf32> to vector<16x16xf32>
    %cst_147 = arith.constant dense<0.000000e+00> : vector<16x200xf32>
    %199 = tpu.matmul %198, %196, %cst_147 {dimension_numbers = #tpu.dot_dimension_numbers<[1], [0], [0], [1], [0, 0, 1, 1], [], []>} : vector<16x16xf32>, vector<16x200xf32>, vector<16x200xf32> -> vector<16x200xf32>
    %200 = arith.addf %189, %199 : vector<16x200xf32>
    %c18 = arith.constant 18 : index
    %c0_148 = arith.constant 0 : index
    %c0_149 = arith.constant 0 : index
    %201 = vector.load %arg0[%c18, %c0_148, %c0_149] : memref<25x75x200xf32, #tpu.memory_space<vmem>>, vector<1x75x200xf32>
    %202 = vector.shape_cast %201 : vector<1x75x200xf32> to vector<75x200xf32>
    %cst_150 = arith.constant dense<0.000000e+00> : vector<16x200xf32>
    %203 = tpu.matmul %0, %202, %cst_150 {dimension_numbers = #tpu.dot_dimension_numbers<[1], [0], [0], [1], [0, 0, 1, 1], [], []>} : vector<16x75xf32>, vector<75x200xf32>, vector<16x200xf32> -> vector<16x200xf32>
    %204 = vector.broadcast %1 : vector<16x1xf32> to vector<16x200xf32>
    %205 = arith.addf %203, %204 : vector<16x200xf32>
    %cst_151 = arith.constant 0.000000e+00 : f32
    %206 = vector.broadcast %cst_151 : f32 to vector<16x200xf32>
    %207 = arith.maximumf %205, %206 : vector<16x200xf32>
    %c18_152 = arith.constant 18 : index
    %c0_153 = arith.constant 0 : index
    %c0_154 = arith.constant 0 : index
    %208 = vector.load %arg3[%c18_152, %c0_153, %c0_154] : memref<25x16x16xf32, #tpu.memory_space<vmem>>, vector<1x16x16xf32>
    %209 = vector.shape_cast %208 : vector<1x16x16xf32> to vector<16x16xf32>
    %cst_155 = arith.constant dense<0.000000e+00> : vector<16x200xf32>
    %210 = tpu.matmul %209, %207, %cst_155 {dimension_numbers = #tpu.dot_dimension_numbers<[1], [0], [0], [1], [0, 0, 1, 1], [], []>} : vector<16x16xf32>, vector<16x200xf32>, vector<16x200xf32> -> vector<16x200xf32>
    %211 = arith.addf %200, %210 : vector<16x200xf32>
    %c19 = arith.constant 19 : index
    %c0_156 = arith.constant 0 : index
    %c0_157 = arith.constant 0 : index
    %212 = vector.load %arg0[%c19, %c0_156, %c0_157] : memref<25x75x200xf32, #tpu.memory_space<vmem>>, vector<1x75x200xf32>
    %213 = vector.shape_cast %212 : vector<1x75x200xf32> to vector<75x200xf32>
    %cst_158 = arith.constant dense<0.000000e+00> : vector<16x200xf32>
    %214 = tpu.matmul %0, %213, %cst_158 {dimension_numbers = #tpu.dot_dimension_numbers<[1], [0], [0], [1], [0, 0, 1, 1], [], []>} : vector<16x75xf32>, vector<75x200xf32>, vector<16x200xf32> -> vector<16x200xf32>
    %215 = vector.broadcast %1 : vector<16x1xf32> to vector<16x200xf32>
    %216 = arith.addf %214, %215 : vector<16x200xf32>
    %cst_159 = arith.constant 0.000000e+00 : f32
    %217 = vector.broadcast %cst_159 : f32 to vector<16x200xf32>
    %218 = arith.maximumf %216, %217 : vector<16x200xf32>
    %c19_160 = arith.constant 19 : index
    %c0_161 = arith.constant 0 : index
    %c0_162 = arith.constant 0 : index
    %219 = vector.load %arg3[%c19_160, %c0_161, %c0_162] : memref<25x16x16xf32, #tpu.memory_space<vmem>>, vector<1x16x16xf32>
    %220 = vector.shape_cast %219 : vector<1x16x16xf32> to vector<16x16xf32>
    %cst_163 = arith.constant dense<0.000000e+00> : vector<16x200xf32>
    %221 = tpu.matmul %220, %218, %cst_163 {dimension_numbers = #tpu.dot_dimension_numbers<[1], [0], [0], [1], [0, 0, 1, 1], [], []>} : vector<16x16xf32>, vector<16x200xf32>, vector<16x200xf32> -> vector<16x200xf32>
    %222 = arith.addf %211, %221 : vector<16x200xf32>
    %c20 = arith.constant 20 : index
    %c0_164 = arith.constant 0 : index
    %c0_165 = arith.constant 0 : index
    %223 = vector.load %arg0[%c20, %c0_164, %c0_165] : memref<25x75x200xf32, #tpu.memory_space<vmem>>, vector<1x75x200xf32>
    %224 = vector.shape_cast %223 : vector<1x75x200xf32> to vector<75x200xf32>
    %cst_166 = arith.constant dense<0.000000e+00> : vector<16x200xf32>
    %225 = tpu.matmul %0, %224, %cst_166 {dimension_numbers = #tpu.dot_dimension_numbers<[1], [0], [0], [1], [0, 0, 1, 1], [], []>} : vector<16x75xf32>, vector<75x200xf32>, vector<16x200xf32> -> vector<16x200xf32>
    %226 = vector.broadcast %1 : vector<16x1xf32> to vector<16x200xf32>
    %227 = arith.addf %225, %226 : vector<16x200xf32>
    %cst_167 = arith.constant 0.000000e+00 : f32
    %228 = vector.broadcast %cst_167 : f32 to vector<16x200xf32>
    %229 = arith.maximumf %227, %228 : vector<16x200xf32>
    %c20_168 = arith.constant 20 : index
    %c0_169 = arith.constant 0 : index
    %c0_170 = arith.constant 0 : index
    %230 = vector.load %arg3[%c20_168, %c0_169, %c0_170] : memref<25x16x16xf32, #tpu.memory_space<vmem>>, vector<1x16x16xf32>
    %231 = vector.shape_cast %230 : vector<1x16x16xf32> to vector<16x16xf32>
    %cst_171 = arith.constant dense<0.000000e+00> : vector<16x200xf32>
    %232 = tpu.matmul %231, %229, %cst_171 {dimension_numbers = #tpu.dot_dimension_numbers<[1], [0], [0], [1], [0, 0, 1, 1], [], []>} : vector<16x16xf32>, vector<16x200xf32>, vector<16x200xf32> -> vector<16x200xf32>
    %233 = arith.addf %222, %232 : vector<16x200xf32>
    %c21 = arith.constant 21 : index
    %c0_172 = arith.constant 0 : index
    %c0_173 = arith.constant 0 : index
    %234 = vector.load %arg0[%c21, %c0_172, %c0_173] : memref<25x75x200xf32, #tpu.memory_space<vmem>>, vector<1x75x200xf32>
    %235 = vector.shape_cast %234 : vector<1x75x200xf32> to vector<75x200xf32>
    %cst_174 = arith.constant dense<0.000000e+00> : vector<16x200xf32>
    %236 = tpu.matmul %0, %235, %cst_174 {dimension_numbers = #tpu.dot_dimension_numbers<[1], [0], [0], [1], [0, 0, 1, 1], [], []>} : vector<16x75xf32>, vector<75x200xf32>, vector<16x200xf32> -> vector<16x200xf32>
    %237 = vector.broadcast %1 : vector<16x1xf32> to vector<16x200xf32>
    %238 = arith.addf %236, %237 : vector<16x200xf32>
    %cst_175 = arith.constant 0.000000e+00 : f32
    %239 = vector.broadcast %cst_175 : f32 to vector<16x200xf32>
    %240 = arith.maximumf %238, %239 : vector<16x200xf32>
    %c21_176 = arith.constant 21 : index
    %c0_177 = arith.constant 0 : index
    %c0_178 = arith.constant 0 : index
    %241 = vector.load %arg3[%c21_176, %c0_177, %c0_178] : memref<25x16x16xf32, #tpu.memory_space<vmem>>, vector<1x16x16xf32>
    %242 = vector.shape_cast %241 : vector<1x16x16xf32> to vector<16x16xf32>
    %cst_179 = arith.constant dense<0.000000e+00> : vector<16x200xf32>
    %243 = tpu.matmul %242, %240, %cst_179 {dimension_numbers = #tpu.dot_dimension_numbers<[1], [0], [0], [1], [0, 0, 1, 1], [], []>} : vector<16x16xf32>, vector<16x200xf32>, vector<16x200xf32> -> vector<16x200xf32>
    %244 = arith.addf %233, %243 : vector<16x200xf32>
    %c22 = arith.constant 22 : index
    %c0_180 = arith.constant 0 : index
    %c0_181 = arith.constant 0 : index
    %245 = vector.load %arg0[%c22, %c0_180, %c0_181] : memref<25x75x200xf32, #tpu.memory_space<vmem>>, vector<1x75x200xf32>
    %246 = vector.shape_cast %245 : vector<1x75x200xf32> to vector<75x200xf32>
    %cst_182 = arith.constant dense<0.000000e+00> : vector<16x200xf32>
    %247 = tpu.matmul %0, %246, %cst_182 {dimension_numbers = #tpu.dot_dimension_numbers<[1], [0], [0], [1], [0, 0, 1, 1], [], []>} : vector<16x75xf32>, vector<75x200xf32>, vector<16x200xf32> -> vector<16x200xf32>
    %248 = vector.broadcast %1 : vector<16x1xf32> to vector<16x200xf32>
    %249 = arith.addf %247, %248 : vector<16x200xf32>
    %cst_183 = arith.constant 0.000000e+00 : f32
    %250 = vector.broadcast %cst_183 : f32 to vector<16x200xf32>
    %251 = arith.maximumf %249, %250 : vector<16x200xf32>
    %c22_184 = arith.constant 22 : index
    %c0_185 = arith.constant 0 : index
    %c0_186 = arith.constant 0 : index
    %252 = vector.load %arg3[%c22_184, %c0_185, %c0_186] : memref<25x16x16xf32, #tpu.memory_space<vmem>>, vector<1x16x16xf32>
    %253 = vector.shape_cast %252 : vector<1x16x16xf32> to vector<16x16xf32>
    %cst_187 = arith.constant dense<0.000000e+00> : vector<16x200xf32>
    %254 = tpu.matmul %253, %251, %cst_187 {dimension_numbers = #tpu.dot_dimension_numbers<[1], [0], [0], [1], [0, 0, 1, 1], [], []>} : vector<16x16xf32>, vector<16x200xf32>, vector<16x200xf32> -> vector<16x200xf32>
    %255 = arith.addf %244, %254 : vector<16x200xf32>
    %c23 = arith.constant 23 : index
    %c0_188 = arith.constant 0 : index
    %c0_189 = arith.constant 0 : index
    %256 = vector.load %arg0[%c23, %c0_188, %c0_189] : memref<25x75x200xf32, #tpu.memory_space<vmem>>, vector<1x75x200xf32>
    %257 = vector.shape_cast %256 : vector<1x75x200xf32> to vector<75x200xf32>
    %cst_190 = arith.constant dense<0.000000e+00> : vector<16x200xf32>
    %258 = tpu.matmul %0, %257, %cst_190 {dimension_numbers = #tpu.dot_dimension_numbers<[1], [0], [0], [1], [0, 0, 1, 1], [], []>} : vector<16x75xf32>, vector<75x200xf32>, vector<16x200xf32> -> vector<16x200xf32>
    %259 = vector.broadcast %1 : vector<16x1xf32> to vector<16x200xf32>
    %260 = arith.addf %258, %259 : vector<16x200xf32>
    %cst_191 = arith.constant 0.000000e+00 : f32
    %261 = vector.broadcast %cst_191 : f32 to vector<16x200xf32>
    %262 = arith.maximumf %260, %261 : vector<16x200xf32>
    %c23_192 = arith.constant 23 : index
    %c0_193 = arith.constant 0 : index
    %c0_194 = arith.constant 0 : index
    %263 = vector.load %arg3[%c23_192, %c0_193, %c0_194] : memref<25x16x16xf32, #tpu.memory_space<vmem>>, vector<1x16x16xf32>
    %264 = vector.shape_cast %263 : vector<1x16x16xf32> to vector<16x16xf32>
    %cst_195 = arith.constant dense<0.000000e+00> : vector<16x200xf32>
    %265 = tpu.matmul %264, %262, %cst_195 {dimension_numbers = #tpu.dot_dimension_numbers<[1], [0], [0], [1], [0, 0, 1, 1], [], []>} : vector<16x16xf32>, vector<16x200xf32>, vector<16x200xf32> -> vector<16x200xf32>
    %266 = arith.addf %255, %265 : vector<16x200xf32>
    %c24 = arith.constant 24 : index
    %c0_196 = arith.constant 0 : index
    %c0_197 = arith.constant 0 : index
    %267 = vector.load %arg0[%c24, %c0_196, %c0_197] : memref<25x75x200xf32, #tpu.memory_space<vmem>>, vector<1x75x200xf32>
    %268 = vector.shape_cast %267 : vector<1x75x200xf32> to vector<75x200xf32>
    %cst_198 = arith.constant dense<0.000000e+00> : vector<16x200xf32>
    %269 = tpu.matmul %0, %268, %cst_198 {dimension_numbers = #tpu.dot_dimension_numbers<[1], [0], [0], [1], [0, 0, 1, 1], [], []>} : vector<16x75xf32>, vector<75x200xf32>, vector<16x200xf32> -> vector<16x200xf32>
    %270 = vector.broadcast %1 : vector<16x1xf32> to vector<16x200xf32>
    %271 = arith.addf %269, %270 : vector<16x200xf32>
    %cst_199 = arith.constant 0.000000e+00 : f32
    %272 = vector.broadcast %cst_199 : f32 to vector<16x200xf32>
    %273 = arith.maximumf %271, %272 : vector<16x200xf32>
    %c24_200 = arith.constant 24 : index
    %c0_201 = arith.constant 0 : index
    %c0_202 = arith.constant 0 : index
    %274 = vector.load %arg3[%c24_200, %c0_201, %c0_202] : memref<25x16x16xf32, #tpu.memory_space<vmem>>, vector<1x16x16xf32>
    %275 = vector.shape_cast %274 : vector<1x16x16xf32> to vector<16x16xf32>
    %cst_203 = arith.constant dense<0.000000e+00> : vector<16x200xf32>
    %276 = tpu.matmul %275, %273, %cst_203 {dimension_numbers = #tpu.dot_dimension_numbers<[1], [0], [0], [1], [0, 0, 1, 1], [], []>} : vector<16x16xf32>, vector<16x200xf32>, vector<16x200xf32> -> vector<16x200xf32>
    %277 = arith.addf %266, %276 : vector<16x200xf32>
    %c0_204 = arith.constant 0 : index
    %c0_205 = arith.constant 0 : index
    %278 = vector.load %arg4[%c0_204, %c0_205] : memref<16x1xf32, #tpu.memory_space<vmem>>, vector<16x1xf32>
    %279 = vector.broadcast %278 : vector<16x1xf32> to vector<16x200xf32>
    %280 = arith.addf %277, %279 : vector<16x200xf32>
    %cst_206 = arith.constant 0.000000e+00 : f32
    %281 = vector.broadcast %cst_206 : f32 to vector<16x200xf32>
    %282 = arith.maximumf %280, %281 : vector<16x200xf32>
    %283 = vector.extract_strided_slice %282 {offsets = [0, 0], sizes = [1, 100], strides = [1, 1]} : vector<16x200xf32> to vector<1x100xf32>
    %c0_207 = arith.constant 0 : index
    %c0_208 = arith.constant 0 : index
    %284 = vector.load %arg10[%c0_207, %c0_208] : memref<2x1600xf32, #tpu.memory_space<vmem>>, vector<1x100xf32>
    tpu.vector_store %arg10[%c0_207, %c0_208], %283 {strides = array<i32>} : memref<2x1600xf32, #tpu.memory_space<vmem>>, vector<1x100xf32>,
    %285 = vector.extract_strided_slice %282 {offsets = [1, 0], sizes = [1, 100], strides = [1, 1]} : vector<16x200xf32> to vector<1x100xf32>
    %c0_209 = arith.constant 0 : index
    %c100 = arith.constant 100 : index
    %286 = vector.load %arg10[%c0_209, %c100] : memref<2x1600xf32, #tpu.memory_space<vmem>>, vector<1x100xf32>
    tpu.vector_store %arg10[%c0_209, %c100], %285 {strides = array<i32>} : memref<2x1600xf32, #tpu.memory_space<vmem>>, vector<1x100xf32>,
    %287 = vector.extract_strided_slice %282 {offsets = [2, 0], sizes = [1, 100], strides = [1, 1]} : vector<16x200xf32> to vector<1x100xf32>
    %c0_210 = arith.constant 0 : index
    %c200 = arith.constant 200 : index
    %288 = vector.load %arg10[%c0_210, %c200] : memref<2x1600xf32, #tpu.memory_space<vmem>>, vector<1x100xf32>
    tpu.vector_store %arg10[%c0_210, %c200], %287 {strides = array<i32>} : memref<2x1600xf32, #tpu.memory_space<vmem>>, vector<1x100xf32>,
    %289 = vector.extract_strided_slice %282 {offsets = [3, 0], sizes = [1, 100], strides = [1, 1]} : vector<16x200xf32> to vector<1x100xf32>
    %c0_211 = arith.constant 0 : index
    %c300 = arith.constant 300 : index
    %290 = vector.load %arg10[%c0_211, %c300] : memref<2x1600xf32, #tpu.memory_space<vmem>>, vector<1x100xf32>
    tpu.vector_store %arg10[%c0_211, %c300], %289 {strides = array<i32>} : memref<2x1600xf32, #tpu.memory_space<vmem>>, vector<1x100xf32>,
    %291 = vector.extract_strided_slice %282 {offsets = [4, 0], sizes = [1, 100], strides = [1, 1]} : vector<16x200xf32> to vector<1x100xf32>
    %c0_212 = arith.constant 0 : index
    %c400 = arith.constant 400 : index
    %292 = vector.load %arg10[%c0_212, %c400] : memref<2x1600xf32, #tpu.memory_space<vmem>>, vector<1x100xf32>
    tpu.vector_store %arg10[%c0_212, %c400], %291 {strides = array<i32>} : memref<2x1600xf32, #tpu.memory_space<vmem>>, vector<1x100xf32>,
    %293 = vector.extract_strided_slice %282 {offsets = [5, 0], sizes = [1, 100], strides = [1, 1]} : vector<16x200xf32> to vector<1x100xf32>
    %c0_213 = arith.constant 0 : index
    %c500 = arith.constant 500 : index
    %294 = vector.load %arg10[%c0_213, %c500] : memref<2x1600xf32, #tpu.memory_space<vmem>>, vector<1x100xf32>
    tpu.vector_store %arg10[%c0_213, %c500], %293 {strides = array<i32>} : memref<2x1600xf32, #tpu.memory_space<vmem>>, vector<1x100xf32>,
    %295 = vector.extract_strided_slice %282 {offsets = [6, 0], sizes = [1, 100], strides = [1, 1]} : vector<16x200xf32> to vector<1x100xf32>
    %c0_214 = arith.constant 0 : index
    %c600 = arith.constant 600 : index
    %296 = vector.load %arg10[%c0_214, %c600] : memref<2x1600xf32, #tpu.memory_space<vmem>>, vector<1x100xf32>
    tpu.vector_store %arg10[%c0_214, %c600], %295 {strides = array<i32>} : memref<2x1600xf32, #tpu.memory_space<vmem>>, vector<1x100xf32>,
    %297 = vector.extract_strided_slice %282 {offsets = [7, 0], sizes = [1, 100], strides = [1, 1]} : vector<16x200xf32> to vector<1x100xf32>
    %c0_215 = arith.constant 0 : index
    %c700 = arith.constant 700 : index
    %298 = vector.load %arg10[%c0_215, %c700] : memref<2x1600xf32, #tpu.memory_space<vmem>>, vector<1x100xf32>
    tpu.vector_store %arg10[%c0_215, %c700], %297 {strides = array<i32>} : memref<2x1600xf32, #tpu.memory_space<vmem>>, vector<1x100xf32>,
    %299 = vector.extract_strided_slice %282 {offsets = [8, 0], sizes = [1, 100], strides = [1, 1]} : vector<16x200xf32> to vector<1x100xf32>
    %c0_216 = arith.constant 0 : index
    %c800 = arith.constant 800 : index
    %300 = vector.load %arg10[%c0_216, %c800] : memref<2x1600xf32, #tpu.memory_space<vmem>>, vector<1x100xf32>
    tpu.vector_store %arg10[%c0_216, %c800], %299 {strides = array<i32>} : memref<2x1600xf32, #tpu.memory_space<vmem>>, vector<1x100xf32>,
    %301 = vector.extract_strided_slice %282 {offsets = [9, 0], sizes = [1, 100], strides = [1, 1]} : vector<16x200xf32> to vector<1x100xf32>
    %c0_217 = arith.constant 0 : index
    %c900 = arith.constant 900 : index
    %302 = vector.load %arg10[%c0_217, %c900] : memref<2x1600xf32, #tpu.memory_space<vmem>>, vector<1x100xf32>
    tpu.vector_store %arg10[%c0_217, %c900], %301 {strides = array<i32>} : memref<2x1600xf32, #tpu.memory_space<vmem>>, vector<1x100xf32>,
    %303 = vector.extract_strided_slice %282 {offsets = [10, 0], sizes = [1, 100], strides = [1, 1]} : vector<16x200xf32> to vector<1x100xf32>
    %c0_218 = arith.constant 0 : index
    %c1000 = arith.constant 1000 : index
    %304 = vector.load %arg10[%c0_218, %c1000] : memref<2x1600xf32, #tpu.memory_space<vmem>>, vector<1x100xf32>
    tpu.vector_store %arg10[%c0_218, %c1000], %303 {strides = array<i32>} : memref<2x1600xf32, #tpu.memory_space<vmem>>, vector<1x100xf32>,
    %305 = vector.extract_strided_slice %282 {offsets = [11, 0], sizes = [1, 100], strides = [1, 1]} : vector<16x200xf32> to vector<1x100xf32>
    %c0_219 = arith.constant 0 : index
    %c1100 = arith.constant 1100 : index
    %306 = vector.load %arg10[%c0_219, %c1100] : memref<2x1600xf32, #tpu.memory_space<vmem>>, vector<1x100xf32>
    tpu.vector_store %arg10[%c0_219, %c1100], %305 {strides = array<i32>} : memref<2x1600xf32, #tpu.memory_space<vmem>>, vector<1x100xf32>,
    %307 = vector.extract_strided_slice %282 {offsets = [12, 0], sizes = [1, 100], strides = [1, 1]} : vector<16x200xf32> to vector<1x100xf32>
    %c0_220 = arith.constant 0 : index
    %c1200 = arith.constant 1200 : index
    %308 = vector.load %arg10[%c0_220, %c1200] : memref<2x1600xf32, #tpu.memory_space<vmem>>, vector<1x100xf32>
    tpu.vector_store %arg10[%c0_220, %c1200], %307 {strides = array<i32>} : memref<2x1600xf32, #tpu.memory_space<vmem>>, vector<1x100xf32>,
    %309 = vector.extract_strided_slice %282 {offsets = [13, 0], sizes = [1, 100], strides = [1, 1]} : vector<16x200xf32> to vector<1x100xf32>
    %c0_221 = arith.constant 0 : index
    %c1300 = arith.constant 1300 : index
    %310 = vector.load %arg10[%c0_221, %c1300] : memref<2x1600xf32, #tpu.memory_space<vmem>>, vector<1x100xf32>
    tpu.vector_store %arg10[%c0_221, %c1300], %309 {strides = array<i32>} : memref<2x1600xf32, #tpu.memory_space<vmem>>, vector<1x100xf32>,
    %311 = vector.extract_strided_slice %282 {offsets = [14, 0], sizes = [1, 100], strides = [1, 1]} : vector<16x200xf32> to vector<1x100xf32>
    %c0_222 = arith.constant 0 : index
    %c1400 = arith.constant 1400 : index
    %312 = vector.load %arg10[%c0_222, %c1400] : memref<2x1600xf32, #tpu.memory_space<vmem>>, vector<1x100xf32>
    tpu.vector_store %arg10[%c0_222, %c1400], %311 {strides = array<i32>} : memref<2x1600xf32, #tpu.memory_space<vmem>>, vector<1x100xf32>,
    %313 = vector.extract_strided_slice %282 {offsets = [15, 0], sizes = [1, 100], strides = [1, 1]} : vector<16x200xf32> to vector<1x100xf32>
    %c0_223 = arith.constant 0 : index
    %c1500 = arith.constant 1500 : index
    %314 = vector.load %arg10[%c0_223, %c1500] : memref<2x1600xf32, #tpu.memory_space<vmem>>, vector<1x100xf32>
    tpu.vector_store %arg10[%c0_223, %c1500], %313 {strides = array<i32>} : memref<2x1600xf32, #tpu.memory_space<vmem>>, vector<1x100xf32>,
    %315 = vector.extract_strided_slice %282 {offsets = [0, 100], sizes = [1, 100], strides = [1, 1]} : vector<16x200xf32> to vector<1x100xf32>
    %c1_224 = arith.constant 1 : index
    %c0_225 = arith.constant 0 : index
    %316 = vector.load %arg10[%c1_224, %c0_225] : memref<2x1600xf32, #tpu.memory_space<vmem>>, vector<1x100xf32>
    tpu.vector_store %arg10[%c1_224, %c0_225], %315 {strides = array<i32>} : memref<2x1600xf32, #tpu.memory_space<vmem>>, vector<1x100xf32>,
    %317 = vector.extract_strided_slice %282 {offsets = [1, 100], sizes = [1, 100], strides = [1, 1]} : vector<16x200xf32> to vector<1x100xf32>
    %c1_226 = arith.constant 1 : index
    %c100_227 = arith.constant 100 : index
    %318 = vector.load %arg10[%c1_226, %c100_227] : memref<2x1600xf32, #tpu.memory_space<vmem>>, vector<1x100xf32>
    tpu.vector_store %arg10[%c1_226, %c100_227], %317 {strides = array<i32>} : memref<2x1600xf32, #tpu.memory_space<vmem>>, vector<1x100xf32>,
    %319 = vector.extract_strided_slice %282 {offsets = [2, 100], sizes = [1, 100], strides = [1, 1]} : vector<16x200xf32> to vector<1x100xf32>
    %c1_228 = arith.constant 1 : index
    %c200_229 = arith.constant 200 : index
    %320 = vector.load %arg10[%c1_228, %c200_229] : memref<2x1600xf32, #tpu.memory_space<vmem>>, vector<1x100xf32>
    tpu.vector_store %arg10[%c1_228, %c200_229], %319 {strides = array<i32>} : memref<2x1600xf32, #tpu.memory_space<vmem>>, vector<1x100xf32>,
    %321 = vector.extract_strided_slice %282 {offsets = [3, 100], sizes = [1, 100], strides = [1, 1]} : vector<16x200xf32> to vector<1x100xf32>
    %c1_230 = arith.constant 1 : index
    %c300_231 = arith.constant 300 : index
    %322 = vector.load %arg10[%c1_230, %c300_231] : memref<2x1600xf32, #tpu.memory_space<vmem>>, vector<1x100xf32>
    tpu.vector_store %arg10[%c1_230, %c300_231], %321 {strides = array<i32>} : memref<2x1600xf32, #tpu.memory_space<vmem>>, vector<1x100xf32>,
    %323 = vector.extract_strided_slice %282 {offsets = [4, 100], sizes = [1, 100], strides = [1, 1]} : vector<16x200xf32> to vector<1x100xf32>
    %c1_232 = arith.constant 1 : index
    %c400_233 = arith.constant 400 : index
    %324 = vector.load %arg10[%c1_232, %c400_233] : memref<2x1600xf32, #tpu.memory_space<vmem>>, vector<1x100xf32>
    tpu.vector_store %arg10[%c1_232, %c400_233], %323 {strides = array<i32>} : memref<2x1600xf32, #tpu.memory_space<vmem>>, vector<1x100xf32>,
    %325 = vector.extract_strided_slice %282 {offsets = [5, 100], sizes = [1, 100], strides = [1, 1]} : vector<16x200xf32> to vector<1x100xf32>
    %c1_234 = arith.constant 1 : index
    %c500_235 = arith.constant 500 : index
    %326 = vector.load %arg10[%c1_234, %c500_235] : memref<2x1600xf32, #tpu.memory_space<vmem>>, vector<1x100xf32>
    tpu.vector_store %arg10[%c1_234, %c500_235], %325 {strides = array<i32>} : memref<2x1600xf32, #tpu.memory_space<vmem>>, vector<1x100xf32>,
    %327 = vector.extract_strided_slice %282 {offsets = [6, 100], sizes = [1, 100], strides = [1, 1]} : vector<16x200xf32> to vector<1x100xf32>
    %c1_236 = arith.constant 1 : index
    %c600_237 = arith.constant 600 : index
    %328 = vector.load %arg10[%c1_236, %c600_237] : memref<2x1600xf32, #tpu.memory_space<vmem>>, vector<1x100xf32>
    tpu.vector_store %arg10[%c1_236, %c600_237], %327 {strides = array<i32>} : memref<2x1600xf32, #tpu.memory_space<vmem>>, vector<1x100xf32>,
    %329 = vector.extract_strided_slice %282 {offsets = [7, 100], sizes = [1, 100], strides = [1, 1]} : vector<16x200xf32> to vector<1x100xf32>
    %c1_238 = arith.constant 1 : index
    %c700_239 = arith.constant 700 : index
    %330 = vector.load %arg10[%c1_238, %c700_239] : memref<2x1600xf32, #tpu.memory_space<vmem>>, vector<1x100xf32>
    tpu.vector_store %arg10[%c1_238, %c700_239], %329 {strides = array<i32>} : memref<2x1600xf32, #tpu.memory_space<vmem>>, vector<1x100xf32>,
    %331 = vector.extract_strided_slice %282 {offsets = [8, 100], sizes = [1, 100], strides = [1, 1]} : vector<16x200xf32> to vector<1x100xf32>
    %c1_240 = arith.constant 1 : index
    %c800_241 = arith.constant 800 : index
    %332 = vector.load %arg10[%c1_240, %c800_241] : memref<2x1600xf32, #tpu.memory_space<vmem>>, vector<1x100xf32>
    tpu.vector_store %arg10[%c1_240, %c800_241], %331 {strides = array<i32>} : memref<2x1600xf32, #tpu.memory_space<vmem>>, vector<1x100xf32>,
    %333 = vector.extract_strided_slice %282 {offsets = [9, 100], sizes = [1, 100], strides = [1, 1]} : vector<16x200xf32> to vector<1x100xf32>
    %c1_242 = arith.constant 1 : index
    %c900_243 = arith.constant 900 : index
    %334 = vector.load %arg10[%c1_242, %c900_243] : memref<2x1600xf32, #tpu.memory_space<vmem>>, vector<1x100xf32>
    tpu.vector_store %arg10[%c1_242, %c900_243], %333 {strides = array<i32>} : memref<2x1600xf32, #tpu.memory_space<vmem>>, vector<1x100xf32>,
    %335 = vector.extract_strided_slice %282 {offsets = [10, 100], sizes = [1, 100], strides = [1, 1]} : vector<16x200xf32> to vector<1x100xf32>
    %c1_244 = arith.constant 1 : index
    %c1000_245 = arith.constant 1000 : index
    %336 = vector.load %arg10[%c1_244, %c1000_245] : memref<2x1600xf32, #tpu.memory_space<vmem>>, vector<1x100xf32>
    tpu.vector_store %arg10[%c1_244, %c1000_245], %335 {strides = array<i32>} : memref<2x1600xf32, #tpu.memory_space<vmem>>, vector<1x100xf32>,
    %337 = vector.extract_strided_slice %282 {offsets = [11, 100], sizes = [1, 100], strides = [1, 1]} : vector<16x200xf32> to vector<1x100xf32>
    %c1_246 = arith.constant 1 : index
    %c1100_247 = arith.constant 1100 : index
    %338 = vector.load %arg10[%c1_246, %c1100_247] : memref<2x1600xf32, #tpu.memory_space<vmem>>, vector<1x100xf32>
    tpu.vector_store %arg10[%c1_246, %c1100_247], %337 {strides = array<i32>} : memref<2x1600xf32, #tpu.memory_space<vmem>>, vector<1x100xf32>,
    %339 = vector.extract_strided_slice %282 {offsets = [12, 100], sizes = [1, 100], strides = [1, 1]} : vector<16x200xf32> to vector<1x100xf32>
    %c1_248 = arith.constant 1 : index
    %c1200_249 = arith.constant 1200 : index
    %340 = vector.load %arg10[%c1_248, %c1200_249] : memref<2x1600xf32, #tpu.memory_space<vmem>>, vector<1x100xf32>
    tpu.vector_store %arg10[%c1_248, %c1200_249], %339 {strides = array<i32>} : memref<2x1600xf32, #tpu.memory_space<vmem>>, vector<1x100xf32>,
    %341 = vector.extract_strided_slice %282 {offsets = [13, 100], sizes = [1, 100], strides = [1, 1]} : vector<16x200xf32> to vector<1x100xf32>
    %c1_250 = arith.constant 1 : index
    %c1300_251 = arith.constant 1300 : index
    %342 = vector.load %arg10[%c1_250, %c1300_251] : memref<2x1600xf32, #tpu.memory_space<vmem>>, vector<1x100xf32>
    tpu.vector_store %arg10[%c1_250, %c1300_251], %341 {strides = array<i32>} : memref<2x1600xf32, #tpu.memory_space<vmem>>, vector<1x100xf32>,
    %343 = vector.extract_strided_slice %282 {offsets = [14, 100], sizes = [1, 100], strides = [1, 1]} : vector<16x200xf32> to vector<1x100xf32>
    %c1_252 = arith.constant 1 : index
    %c1400_253 = arith.constant 1400 : index
    %344 = vector.load %arg10[%c1_252, %c1400_253] : memref<2x1600xf32, #tpu.memory_space<vmem>>, vector<1x100xf32>
    tpu.vector_store %arg10[%c1_252, %c1400_253], %343 {strides = array<i32>} : memref<2x1600xf32, #tpu.memory_space<vmem>>, vector<1x100xf32>,
    %345 = vector.extract_strided_slice %282 {offsets = [15, 100], sizes = [1, 100], strides = [1, 1]} : vector<16x200xf32> to vector<1x100xf32>
    %c1_254 = arith.constant 1 : index
    %c1500_255 = arith.constant 1500 : index
    %346 = vector.load %arg10[%c1_254, %c1500_255] : memref<2x1600xf32, #tpu.memory_space<vmem>>, vector<1x100xf32>
    tpu.vector_store %arg10[%c1_254, %c1500_255], %345 {strides = array<i32>} : memref<2x1600xf32, #tpu.memory_space<vmem>>, vector<1x100xf32>,
    %c0_256 = arith.constant 0 : index
    %c0_257 = arith.constant 0 : index
    %347 = vector.load %arg10[%c0_256, %c0_257] : memref<2x1600xf32, #tpu.memory_space<vmem>>, vector<2x1600xf32>
    %c0_258 = arith.constant 0 : index
    %c0_259 = arith.constant 0 : index
    %348 = vector.load %arg5[%c0_258, %c0_259] : memref<1600x64xf32, #tpu.memory_space<vmem>>, vector<1600x64xf32>
    %cst_260 = arith.constant dense<0.000000e+00> : vector<2x64xf32>
    %349 = tpu.matmul %347, %348, %cst_260 {dimension_numbers = #tpu.dot_dimension_numbers<[1], [0], [0], [1], [0, 0, 1, 1], [], []>} : vector<2x1600xf32>, vector<1600x64xf32>, vector<2x64xf32> -> vector<2x64xf32>
    %c0_261 = arith.constant 0 : index
    %c0_262 = arith.constant 0 : index
    %350 = vector.load %arg6[%c0_261, %c0_262] : memref<1x64xf32, #tpu.memory_space<vmem>>, vector<1x64xf32>
    %351 = vector.broadcast %350 : vector<1x64xf32> to vector<2x64xf32>
    %352 = arith.addf %349, %351 : vector<2x64xf32>
    %cst_263 = arith.constant 0.000000e+00 : f32
    %353 = vector.broadcast %cst_263 : f32 to vector<2x64xf32>
    %354 = arith.maximumf %352, %353 : vector<2x64xf32>
    %c0_264 = arith.constant 0 : index
    %c0_265 = arith.constant 0 : index
    %355 = vector.load %arg7[%c0_264, %c0_265] : memref<64x11xf32, #tpu.memory_space<vmem>>, vector<64x11xf32>
    %cst_266 = arith.constant dense<0.000000e+00> : vector<2x11xf32>
    %356 = tpu.matmul %354, %355, %cst_266 {dimension_numbers = #tpu.dot_dimension_numbers<[1], [0], [0], [1], [0, 0, 1, 1], [], []>} : vector<2x64xf32>, vector<64x11xf32>, vector<2x11xf32> -> vector<2x11xf32>
    %c0_267 = arith.constant 0 : index
    %c0_268 = arith.constant 0 : index
    %357 = vector.load %arg8[%c0_267, %c0_268] : memref<1x11xf32, #tpu.memory_space<vmem>>, vector<1x11xf32>
    %358 = vector.broadcast %357 : vector<1x11xf32> to vector<2x11xf32>
    %359 = arith.addf %356, %358 : vector<2x11xf32>
    %c0_269 = arith.constant 0 : index
    %c0_270 = arith.constant 0 : index
    %360 = vector.load %arg9[%c0_269, %c0_270] : memref<2x11xf32, #tpu.memory_space<vmem>>, vector<2x11xf32>
    tpu.vector_store %arg9[%c0_269, %c0_270], %359 {strides = array<i32>} : memref<2x11xf32, #tpu.memory_space<vmem>>, vector<2x11xf32>,
    return
  }
}

</mosaic_0001>

<llo_original>
// kernel: simple_cnn_forward.1
$region0: #{simple_cnn_forward.1}
  #allocation0 [shape = 'u32[]', space=smem, size = 0x4, offset = 0x4, fixed_abs, tag = 'smem constant byte address 0x4 - core index']
  #allocation1 [shape = 'u32[72,128]{1,0:T(1,128)}', space=vmem, size = 0x9000, scoped, tag = 'internal scratch']
  #allocation2 [shape = 'f32[2,1600]{1,0:T(2,128)}', space=vmem, size = 0x3400, scoped, tag = 'scratch operand']
  %s0 = inlined_call_operand.vmem [shape: f32[25,75,200], index: 0, kind: input, shape index: {}]
  %s1 = inlined_call_operand.vmem [shape: f32[16,75], index: 1, kind: input, shape index: {}]
  %s2 = inlined_call_operand.vmem [shape: f32[16,1], index: 2, kind: input, shape index: {}]
  %s3 = inlined_call_operand.vmem [shape: f32[25,16,16], index: 3, kind: input, shape index: {}]
  %s4 = inlined_call_operand.vmem [shape: f32[16,1], index: 4, kind: input, shape index: {}]
  %s5 = inlined_call_operand.vmem [shape: f32[1600,64], index: 5, kind: input, shape index: {}]
  %s6 = inlined_call_operand.vmem [shape: f32[1,64], index: 6, kind: input, shape index: {}]
  %s7 = inlined_call_operand.vmem [shape: f32[64,11], index: 7, kind: input, shape index: {}]
  %s8 = inlined_call_operand.vmem [shape: f32[1,11], index: 8, kind: input, shape index: {}]
  %s9 = inlined_call_operand.hbm [shape: f32[2,11], index: 9, kind: output, shape index: {}]
  %s10 = sld [smem:[#allocation0]]
  $region46: #{simple_cnn_forward.1} parent=0
    _
  %s12 = ssub.s32 1, %s10
  %s13 = scalar_select 0, %s12, %s10
  $region1: #{simple_cnn_forward.1} parent=0
    #allocation3 [shape = 'u8[1024]{0}', space=vmem, size = 0x400, scoped, tag = 'output window, operand 0, single buffered']
    #allocation4 [shape = 's32[1]{0}', space=sflag, size = 0x4, scoped, tag = 'scoped memory for simple_cnn_forward.1']
    %14 = vsyncpa [#allocation4], 0
    // Predicated region
    $region2: #{simple_cnn_forward.1} parent=1 // pred_check
      _
    $region3: #{simple_cnn_forward.1} parent=1 // pred_check_branch
      %16 = sbr.rel (0) target = $region5
    $region4: #{simple_cnn_forward.1} parent=1 // pred_region
      _
    $region5: #{simple_cnn_forward.1} parent=1 // pred_fallthru
      _
    // Predicated region
    $region6: #{simple_cnn_forward.1} parent=1 // pred_check
      _
    $region7: #{simple_cnn_forward.1} parent=1 // pred_check_branch
      %18 = sbr.rel (0) target = $region9
    $region8: #{simple_cnn_forward.1} parent=1 // pred_region
      _
    $region9: #{simple_cnn_forward.1} parent=1 // pred_fallthru
      _
    // Predicated region
    $region10: #{simple_cnn_forward.1} parent=1 // pred_check
      _
    $region11: #{simple_cnn_forward.1} parent=1 // pred_check_branch
      %20 = sbr.rel (0) target = $region13
    $region12: #{simple_cnn_forward.1} parent=1 // pred_region
      _
    $region13: #{simple_cnn_forward.1} parent=1 // pred_fallthru
      _
    // Predicated region
    $region14: #{simple_cnn_forward.1} parent=1 // pred_check
      _
    $region15: #{simple_cnn_forward.1} parent=1 // pred_check_branch
      %22 = sbr.rel (0) target = $region17
    $region16: #{simple_cnn_forward.1} parent=1 // pred_region
      _
    $region17: #{simple_cnn_forward.1} parent=1 // pred_fallthru
      _
    // Predicated region
    $region18: #{simple_cnn_forward.1} parent=1 // pred_check
      _
    $region19: #{simple_cnn_forward.1} parent=1 // pred_check_branch
      %24 = sbr.rel (0) target = $region21
    $region20: #{simple_cnn_forward.1} parent=1 // pred_region
      _
    $region21: #{simple_cnn_forward.1} parent=1 // pred_fallthru
      _
    // Predicated region
    $region22: #{simple_cnn_forward.1} parent=1 // pred_check
      _
    $region23: #{simple_cnn_forward.1} parent=1 // pred_check_branch
      %26 = sbr.rel (0) target = $region25
    $region24: #{simple_cnn_forward.1} parent=1 // pred_region
      _
    $region25: #{simple_cnn_forward.1} parent=1 // pred_fallthru
      _
    // Predicated region
    $region26: #{simple_cnn_forward.1} parent=1 // pred_check
      _
    $region27: #{simple_cnn_forward.1} parent=1 // pred_check_branch
      %28 = sbr.rel (0) target = $region29
    $region28: #{simple_cnn_forward.1} parent=1 // pred_region
      _
    $region29: #{simple_cnn_forward.1} parent=1 // pred_fallthru
      _
    // Predicated region
    $region30: #{simple_cnn_forward.1} parent=1 // pred_check
      _
    $region31: #{simple_cnn_forward.1} parent=1 // pred_check_branch
      %30 = sbr.rel (0) target = $region33
    $region32: #{simple_cnn_forward.1} parent=1 // pred_region
      _
    $region33: #{simple_cnn_forward.1} parent=1 // pred_fallthru
      _
    // Predicated region
    $region34: #{simple_cnn_forward.1} parent=1 // pred_check
      _
    $region35: #{simple_cnn_forward.1} parent=1 // pred_check_branch
      %32 = sbr.rel (0) target = $region37
    $region36: #{simple_cnn_forward.1} parent=1 // pred_region
      _
    $region37: #{simple_cnn_forward.1} parent=1 // pred_fallthru
      _
    %v33 = vld [vmem:[%s1] sm:$0xff]
    %v34 = vld [vmem:[%s1 + $0x8] sm:$0xff]
    %v35 = vld [vmem:[%s2] sm:$0xff]
    %v36 = vld [vmem:[%s2 + $0x8] sm:$0xff]
    %v37 = vld [vmem:[%s0] sm:$0xff]
    %v38 = vld [vmem:[%s0 + $0x8] sm:$0xff]
    %v39 = vld [vmem:[%s0 + $0x10] sm:$0xff]
    %v40 = vld [vmem:[%s0 + $0x18] sm:$0xff]
    %v41 = vld [vmem:[%s0 + $0x20] sm:$0xff]
    %v42 = vld [vmem:[%s0 + $0x28] sm:$0xff]
    %v43 = vld [vmem:[%s0 + $0x30] sm:$0xff]
    %v44 = vld [vmem:[%s0 + $0x38] sm:$0xff]
    %v45 = vld [vmem:[%s0 + $0x40] sm:$0xff]
    %v46 = vld [vmem:[%s0 + $0x48] sm:$0xff]
    %v47 = vld [vmem:[%s0 + $0x50] sm:$0xff]
    %v48 = vld [vmem:[%s0 + $0x58] sm:$0xff]
    %v49 = vld [vmem:[%s0 + $0x60] sm:$0xff]
    %v50 = vld [vmem:[%s0 + $0x68] sm:$0xff]
    %v51 = vld [vmem:[%s0 + $0x70] sm:$0xff]
    %v52 = vld [vmem:[%s0 + $0x78] sm:$0xff]
    %v53 = vld [vmem:[%s0 + $0x80] sm:$0xff]
    %v54 = vld [vmem:[%s0 + $0x88] sm:$0xff]
    %v55 = vld [vmem:[%s0 + $0x90] sm:$0x7]
    %v56 = vld [vmem:[%s0 + $0x98] sm:$0x7]
    %58 = vset.pattern.permute.xlu0 0
    %59 = vperm.xlu0 %58, %v35
    %v60 = vpop.permute.xlu0 %59
    %63 = vset.pattern.permute.xlu0 0
    %64 = vperm.xlu0 %63, %v36
    %v65 = vpop.permute.xlu0 %64
    %vm67 = vcmask 613376
    %v69 = vsel %vm67, %v33, 0
    %v72 = vsel %vm67, %v34, 0
    %vm74 = vcmask 1042432
    %v76 = vsel %vm74, %v55, 0
    %v79 = vsel %vm74, %v56, 0
    %81 = vmatpush.msra.mxu0 0.0
    %82 = vmatpush.msra.mxu0 0.0
    %83 = vmatpush.msra.mxu0 0.0
    %84 = vmatpush.msra.mxu0 0.0
    %85 = vmatpush.msra.mxu0 0.0
    %86 = vmatpush.msra.mxu0 0.0
    %87 = vmatpush.msra.mxu0 %v76
    %88 = vmatpush.msra.mxu0 %v53
    %89 = vmatpush.msra.mxu0 %v51
    %90 = vmatpush.msra.mxu0 %v49
    %91 = vmatpush.msra.mxu0 %v47
    %92 = vmatpush.msra.mxu0 %v45
    %93 = vmatpush.msra.mxu0 %v43
    %94 = vmatpush.msra.mxu0 %v41
    %95 = vmatpush.msra.mxu0 %v39
    %96 = vmatpush.msra.mxu0 %v37
    %97 = vmatmul.f32.gmra.mxu0 %v69
    %v98 = vpop.f32.mrf.mxu0
    %v99 = vadd.f32 %v60, %v98
    %100 = vmatmul.f32.gmra.mxu0 %v72
    %v101 = vpop.f32.mrf.mxu0
    %v102 = vadd.f32 %v65, %v101
    %103 = vdwg.mxu0
    %104 = vmatpush.msra.mxu0 0.0
    %105 = vmatpush.msra.mxu0 0.0
    %106 = vmatpush.msra.mxu0 0.0
    %107 = vmatpush.msra.mxu0 0.0
    %108 = vmatpush.msra.mxu0 0.0
    %109 = vmatpush.msra.mxu0 0.0
    %110 = vmatpush.msra.mxu0 %v79
    %111 = vmatpush.msra.mxu0 %v54
    %112 = vmatpush.msra.mxu0 %v52
    %113 = vmatpush.msra.mxu0 %v50
    %114 = vmatpush.msra.mxu0 %v48
    %115 = vmatpush.msra.mxu0 %v46
    %116 = vmatpush.msra.mxu0 %v44
    %117 = vmatpush.msra.mxu0 %v42
    %118 = vmatpush.msra.mxu0 %v40
    %119 = vmatpush.msra.mxu0 %v38
    %120 = vmatmul.f32.gmra.mxu0 %v69
    %v121 = vpop.f32.mrf.mxu0
    %v122 = vadd.f32 %v60, %v121
    %123 = vmatmul.f32.gmra.mxu0 %v72
    %v124 = vpop.f32.mrf.mxu0
    %v125 = vadd.f32 %v65, %v124
    %126 = vdwg.mxu0
    %v127 = vmax.f32 %v99, 0.0
    %v128 = vmax.f32 %v122, 0.0
    %v129 = vmax.f32 %v102, 0.0
    %v130 = vmax.f32 %v125, 0.0
    %v131 = vld [vmem:[%s3] sm:$0xff]
    %v132 = vld [vmem:[%s3 + $0x8] sm:$0xff]
    %s133 = scalar_lea.vmem %s0, 160
    %v134 = vld [vmem:[%s133] sm:$0xff]
    %v135 = vld [vmem:[%s133 + $0x8] sm:$0xff]
    %v136 = vld [vmem:[%s133 + $0x10] sm:$0xff]
    %v137 = vld [vmem:[%s133 + $0x18] sm:$0xff]
    %v138 = vld [vmem:[%s133 + $0x20] sm:$0xff]
    %v139 = vld [vmem:[%s133 + $0x28] sm:$0xff]
    %v140 = vld [vmem:[%s133 + $0x30] sm:$0xff]
    %v141 = vld [vmem:[%s133 + $0x38] sm:$0xff]
    %v142 = vld [vmem:[%s133 + $0x40] sm:$0xff]
    %v143 = vld [vmem:[%s133 + $0x48] sm:$0xff]
    %v144 = vld [vmem:[%s133 + $0x50] sm:$0xff]
    %v145 = vld [vmem:[%s133 + $0x58] sm:$0xff]
    %v146 = vld [vmem:[%s133 + $0x60] sm:$0xff]
    %v147 = vld [vmem:[%s133 + $0x68] sm:$0xff]
    %v148 = vld [vmem:[%s133 + $0x70] sm:$0xff]
    %v149 = vld [vmem:[%s133 + $0x78] sm:$0xff]
    %v150 = vld [vmem:[%s133 + $0x80] sm:$0xff]
    %v151 = vld [vmem:[%s133 + $0x88] sm:$0xff]
    %v152 = vld [vmem:[%s133 + $0x90] sm:$0x7]
    %v153 = vld [vmem:[%s133 + $0x98] sm:$0x7]
    %v155 = vsel %vm74, %v152, 0
    %v158 = vsel %vm74, %v153, 0
    %160 = vmatpush.msra.mxu0 0.0
    %161 = vmatpush.msra.mxu0 0.0
    %162 = vmatpush.msra.mxu0 0.0
    %163 = vmatpush.msra.mxu0 0.0
    %164 = vmatpush.msra.mxu0 0.0
    %165 = vmatpush.msra.mxu0 0.0
    %166 = vmatpush.msra.mxu0 %v155
    %167 = vmatpush.msra.mxu0 %v150
    %168 = vmatpush.msra.mxu0 %v148
    %169 = vmatpush.msra.mxu0 %v146
    %170 = vmatpush.msra.mxu0 %v144
    %171 = vmatpush.msra.mxu0 %v142
    %172 = vmatpush.msra.mxu0 %v140
    %173 = vmatpush.msra.mxu0 %v138
    %174 = vmatpush.msra.mxu0 %v136
    %175 = vmatpush.msra.mxu0 %v134
    %176 = vmatmul.f32.gmra.mxu0 %v69
    %v177 = vpop.f32.mrf.mxu0
    %v178 = vadd.f32 %v60, %v177
    %179 = vmatmul.f32.gmra.mxu0 %v72
    %v180 = vpop.f32.mrf.mxu0
    %v181 = vadd.f32 %v65, %v180
    %182 = vdwg.mxu0
    %183 = vmatpush.msra.mxu0 0.0
    %184 = vmatpush.msra.mxu0 0.0
    %185 = vmatpush.msra.mxu0 0.0
    %186 = vmatpush.msra.mxu0 0.0
    %187 = vmatpush.msra.mxu0 0.0
    %188 = vmatpush.msra.mxu0 0.0
    %189 = vmatpush.msra.mxu0 %v158
    %190 = vmatpush.msra.mxu0 %v151
    %191 = vmatpush.msra.mxu0 %v149
    %192 = vmatpush.msra.mxu0 %v147
    %193 = vmatpush.msra.mxu0 %v145
    %194 = vmatpush.msra.mxu0 %v143
    %195 = vmatpush.msra.mxu0 %v141
    %196 = vmatpush.msra.mxu0 %v139
    %197 = vmatpush.msra.mxu0 %v137
    %198 = vmatpush.msra.mxu0 %v135
    %199 = vmatmul.f32.gmra.mxu0 %v69
    %v200 = vpop.f32.mrf.mxu0
    %v201 = vadd.f32 %v60, %v200
    %202 = vmatmul.f32.gmra.mxu0 %v72
    %v203 = vpop.f32.mrf.mxu0
    %v204 = vadd.f32 %v65, %v203
    %205 = vdwg.mxu0
    %v206 = vmax.f32 %v178, 0.0
    %v207 = vmax.f32 %v201, 0.0
    %v208 = vmax.f32 %v181, 0.0
    %v209 = vmax.f32 %v204, 0.0
    %s210 = scalar_lea.vmem %s3, 16
    %v211 = vld [vmem:[%s210] sm:$0xff]
    %v212 = vld [vmem:[%s210 + $0x8] sm:$0xff]
    %vm213 = vcmask 130048
    %v215 = vsel %vm213, %v211, 0
    %v218 = vsel %vm213, %v212, 0
    %220 = vmatpush.msra.mxu0 0.0
    %221 = vmatpush.msra.mxu0 0.0
    %222 = vmatpush.msra.mxu0 0.0
    %223 = vmatpush.msra.mxu0 0.0
    %224 = vmatpush.msra.mxu0 0.0
    %225 = vmatpush.msra.mxu0 0.0
    %226 = vmatpush.msra.mxu0 0.0
    %227 = vmatpush.msra.mxu0 0.0
    %228 = vmatpush.msra.mxu0 0.0
    %229 = vmatpush.msra.mxu0 0.0
    %230 = vmatpush.msra.mxu0 0.0
    %231 = vmatpush.msra.mxu0 0.0
    %232 = vmatpush.msra.mxu0 0.0
    %233 = vmatpush.msra.mxu0 0.0
    %234 = vmatpush.msra.mxu0 %v208
    %235 = vmatpush.msra.mxu0 %v206
    %236 = vmatmul.f32.gmra.mxu0 %v215
    %v237 = vpop.f32.mrf.mxu0
    %v238 = vadd.f32 0.0, %v237
    %239 = vmatmul.f32.gmra.mxu0 %v218
    %v240 = vpop.f32.mrf.mxu0
    %v241 = vadd.f32 0.0, %v240
    %242 = vdwg.mxu0
    %243 = vmatpush.msra.mxu0 0.0
    %244 = vmatpush.msra.mxu0 0.0
    %245 = vmatpush.msra.mxu0 0.0
    %246 = vmatpush.msra.mxu0 0.0
    %247 = vmatpush.msra.mxu0 0.0
    %248 = vmatpush.msra.mxu0 0.0
    %249 = vmatpush.msra.mxu0 0.0
    %250 = vmatpush.msra.mxu0 0.0
    %251 = vmatpush.msra.mxu0 0.0
    %252 = vmatpush.msra.mxu0 0.0
    %253 = vmatpush.msra.mxu0 0.0
    %254 = vmatpush.msra.mxu0 0.0
    %255 = vmatpush.msra.mxu0 0.0
    %256 = vmatpush.msra.mxu0 0.0
    %257 = vmatpush.msra.mxu0 %v209
    %258 = vmatpush.msra.mxu0 %v207
    %259 = vmatmul.f32.gmra.mxu0 %v215
    %v260 = vpop.f32.mrf.mxu0
    %v261 = vadd.f32 0.0, %v260
    %262 = vmatmul.f32.gmra.mxu0 %v218
    %v263 = vpop.f32.mrf.mxu0
    %v264 = vadd.f32 0.0, %v263
    %265 = vdwg.mxu0
    %v267 = vsel %vm213, %v131, 0
    %v270 = vsel %vm213, %v132, 0
    %272 = vmatpush.msra.mxu0 0.0
    %273 = vmatpush.msra.mxu0 0.0
    %274 = vmatpush.msra.mxu0 0.0
    %275 = vmatpush.msra.mxu0 0.0
    %276 = vmatpush.msra.mxu0 0.0
    %277 = vmatpush.msra.mxu0 0.0
    %278 = vmatpush.msra.mxu0 0.0
    %279 = vmatpush.msra.mxu0 0.0
    %280 = vmatpush.msra.mxu0 0.0
    %281 = vmatpush.msra.mxu0 0.0
    %282 = vmatpush.msra.mxu0 0.0
    %283 = vmatpush.msra.mxu0 0.0
    %284 = vmatpush.msra.mxu0 0.0
    %285 = vmatpush.msra.mxu0 0.0
    %286 = vmatpush.msra.mxu0 %v129
    %287 = vmatpush.msra.mxu0 %v127
    %288 = vmatmul.f32.gmra.mxu0 %v267
    %v289 = vpop.f32.mrf.mxu0
    %v290 = vadd.f32 %v238, %v289
    %291 = vmatmul.f32.gmra.mxu0 %v270
    %v292 = vpop.f32.mrf.mxu0
    %v293 = vadd.f32 %v241, %v292
    %294 = vdwg.mxu0
    %295 = vmatpush.msra.mxu0 0.0
    %296 = vmatpush.msra.mxu0 0.0
    %297 = vmatpush.msra.mxu0 0.0
    %298 = vmatpush.msra.mxu0 0.0
    %299 = vmatpush.msra.mxu0 0.0
    %300 = vmatpush.msra.mxu0 0.0
    %301 = vmatpush.msra.mxu0 0.0
    %302 = vmatpush.msra.mxu0 0.0
    %303 = vmatpush.msra.mxu0 0.0
    %304 = vmatpush.msra.mxu0 0.0
    %305 = vmatpush.msra.mxu0 0.0
    %306 = vmatpush.msra.mxu0 0.0
    %307 = vmatpush.msra.mxu0 0.0
    %308 = vmatpush.msra.mxu0 0.0
    %309 = vmatpush.msra.mxu0 %v130
    %310 = vmatpush.msra.mxu0 %v128
    %311 = vmatmul.f32.gmra.mxu0 %v267
    %v312 = vpop.f32.mrf.mxu0
    %v313 = vadd.f32 %v261, %v312
    %314 = vmatmul.f32.gmra.mxu0 %v270
    %v315 = vpop.f32.mrf.mxu0
    %v316 = vadd.f32 %v264, %v315
    %317 = vdwg.mxu0
    %s318 = scalar_lea.vmem %s0, 320
    %v319 = vld [vmem:[%s318] sm:$0xff]
    %v320 = vld [vmem:[%s318 + $0x8] sm:$0xff]
    %v321 = vld [vmem:[%s318 + $0x10] sm:$0xff]
    %v322 = vld [vmem:[%s318 + $0x18] sm:$0xff]
    %v323 = vld [vmem:[%s318 + $0x20] sm:$0xff]
    %v324 = vld [vmem:[%s318 + $0x28] sm:$0xff]
    %v325 = vld [vmem:[%s318 + $0x30] sm:$0xff]
    %v326 = vld [vmem:[%s318 + $0x38] sm:$0xff]
    %v327 = vld [vmem:[%s318 + $0x40] sm:$0xff]
    %v328 = vld [vmem:[%s318 + $0x48] sm:$0xff]
    %v329 = vld [vmem:[%s318 + $0x50] sm:$0xff]
    %v330 = vld [vmem:[%s318 + $0x58] sm:$0xff]
    %v331 = vld [vmem:[%s318 + $0x60] sm:$0xff]
    %v332 = vld [vmem:[%s318 + $0x68] sm:$0xff]
    %v333 = vld [vmem:[%s318 + $0x70] sm:$0xff]
    %v334 = vld [vmem:[%s318 + $0x78] sm:$0xff]
    %v335 = vld [vmem:[%s318 + $0x80] sm:$0xff]
    %v336 = vld [vmem:[%s318 + $0x88] sm:$0xff]
    %v337 = vld [vmem:[%s318 + $0x90] sm:$0x7]
    %v338 = vld [vmem:[%s318 + $0x98] sm:$0x7]
    %v340 = vsel %vm74, %v337, 0
    %v343 = vsel %vm74, %v338, 0
    %345 = vmatpush.msra.mxu0 0.0
    %346 = vmatpush.msra.mxu0 0.0
    %347 = vmatpush.msra.mxu0 0.0
    %348 = vmatpush.msra.mxu0 0.0
    %349 = vmatpush.msra.mxu0 0.0
    %350 = vmatpush.msra.mxu0 0.0
    %351 = vmatpush.msra.mxu0 %v340
    %352 = vmatpush.msra.mxu0 %v335
    %353 = vmatpush.msra.mxu0 %v333
    %354 = vmatpush.msra.mxu0 %v331
    %355 = vmatpush.msra.mxu0 %v329
    %356 = vmatpush.msra.mxu0 %v327
    %357 = vmatpush.msra.mxu0 %v325
    %358 = vmatpush.msra.mxu0 %v323
    %359 = vmatpush.msra.mxu0 %v321
    %360 = vmatpush.msra.mxu0 %v319
    %361 = vmatmul.f32.gmra.mxu0 %v69
    %v362 = vpop.f32.mrf.mxu0
    %v363 = vadd.f32 %v60, %v362
    %364 = vmatmul.f32.gmra.mxu0 %v72
    %v365 = vpop.f32.mrf.mxu0
    %v366 = vadd.f32 %v65, %v365
    %367 = vdwg.mxu0
    %368 = vmatpush.msra.mxu0 0.0
    %369 = vmatpush.msra.mxu0 0.0
    %370 = vmatpush.msra.mxu0 0.0
    %371 = vmatpush.msra.mxu0 0.0
    %372 = vmatpush.msra.mxu0 0.0
    %373 = vmatpush.msra.mxu0 0.0
    %374 = vmatpush.msra.mxu0 %v343
    %375 = vmatpush.msra.mxu0 %v336
    %376 = vmatpush.msra.mxu0 %v334
    %377 = vmatpush.msra.mxu0 %v332
    %378 = vmatpush.msra.mxu0 %v330
    %379 = vmatpush.msra.mxu0 %v328
    %380 = vmatpush.msra.mxu0 %v326
    %381 = vmatpush.msra.mxu0 %v324
    %382 = vmatpush.msra.mxu0 %v322
    %383 = vmatpush.msra.mxu0 %v320
    %384 = vmatmul.f32.gmra.mxu0 %v69
    %v385 = vpop.f32.mrf.mxu0
    %v386 = vadd.f32 %v60, %v385
    %387 = vmatmul.f32.gmra.mxu0 %v72
    %v388 = vpop.f32.mrf.mxu0
    %v389 = vadd.f32 %v65, %v388
    %390 = vdwg.mxu0
    %v391 = vmax.f32 %v363, 0.0
    %v392 = vmax.f32 %v386, 0.0
    %v393 = vmax.f32 %v366, 0.0
    %v394 = vmax.f32 %v389, 0.0
    %s395 = scalar_lea.vmem %s3, 32
    %v396 = vld [vmem:[%s395] sm:$0xff]
    %v397 = vld [vmem:[%s395 + $0x8] sm:$0xff]
    %v399 = vsel %vm213, %v396, 0
    %v402 = vsel %vm213, %v397, 0
    %404 = vmatpush.msra.mxu0 0.0
    %405 = vmatpush.msra.mxu0 0.0
    %406 = vmatpush.msra.mxu0 0.0
    %407 = vmatpush.msra.mxu0 0.0
    %408 = vmatpush.msra.mxu0 0.0
    %409 = vmatpush.msra.mxu0 0.0
    %410 = vmatpush.msra.mxu0 0.0
    %411 = vmatpush.msra.mxu0 0.0
    %412 = vmatpush.msra.mxu0 0.0
    %413 = vmatpush.msra.mxu0 0.0
    %414 = vmatpush.msra.mxu0 0.0
    %415 = vmatpush.msra.mxu0 0.0
    %416 = vmatpush.msra.mxu0 0.0
    %417 = vmatpush.msra.mxu0 0.0
    %418 = vmatpush.msra.mxu0 %v393
    %419 = vmatpush.msra.mxu0 %v391
    %420 = vmatmul.f32.gmra.mxu0 %v399
    %v421 = vpop.f32.mrf.mxu0
    %v422 = vadd.f32 0.0, %v421
    %423 = vmatmul.f32.gmra.mxu0 %v402
    %v424 = vpop.f32.mrf.mxu0
    %v425 = vadd.f32 0.0, %v424
    %426 = vdwg.mxu0
    %427 = vmatpush.msra.mxu0 0.0
    %428 = vmatpush.msra.mxu0 0.0
    %429 = vmatpush.msra.mxu0 0.0
    %430 = vmatpush.msra.mxu0 0.0
    %431 = vmatpush.msra.mxu0 0.0
    %432 = vmatpush.msra.mxu0 0.0
    %433 = vmatpush.msra.mxu0 0.0
    %434 = vmatpush.msra.mxu0 0.0
    %435 = vmatpush.msra.mxu0 0.0
    %436 = vmatpush.msra.mxu0 0.0
    %437 = vmatpush.msra.mxu0 0.0
    %438 = vmatpush.msra.mxu0 0.0
    %439 = vmatpush.msra.mxu0 0.0
    %440 = vmatpush.msra.mxu0 0.0
    %441 = vmatpush.msra.mxu0 %v394
    %442 = vmatpush.msra.mxu0 %v392
    %443 = vmatmul.f32.gmra.mxu0 %v399
    %v444 = vpop.f32.mrf.mxu0
    %v445 = vadd.f32 0.0, %v444
    %446 = vmatmul.f32.gmra.mxu0 %v402
    %v447 = vpop.f32.mrf.mxu0
    %v448 = vadd.f32 0.0, %v447
    %449 = vdwg.mxu0
    %v450 = vadd.f32 %v290, %v422
    %v451 = vadd.f32 %v313, %v445
    %v452 = vadd.f32 %v293, %v425
    %v453 = vadd.f32 %v316, %v448
    %s454 = scalar_lea.vmem %s0, 480
    %v455 = vld [vmem:[%s454] sm:$0xff]
    %v456 = vld [vmem:[%s454 + $0x8] sm:$0xff]
    %v457 = vld [vmem:[%s454 + $0x10] sm:$0xff]
    %v458 = vld [vmem:[%s454 + $0x18] sm:$0xff]
    %v459 = vld [vmem:[%s454 + $0x20] sm:$0xff]
    %v460 = vld [vmem:[%s454 + $0x28] sm:$0xff]
    %v461 = vld [vmem:[%s454 + $0x30] sm:$0xff]
    %v462 = vld [vmem:[%s454 + $0x38] sm:$0xff]
    %v463 = vld [vmem:[%s454 + $0x40] sm:$0xff]
    %v464 = vld [vmem:[%s454 + $0x48] sm:$0xff]
    %v465 = vld [vmem:[%s454 + $0x50] sm:$0xff]
    %v466 = vld [vmem:[%s454 + $0x58] sm:$0xff]
    %v467 = vld [vmem:[%s454 + $0x60] sm:$0xff]
    %v468 = vld [vmem:[%s454 + $0x68] sm:$0xff]
    %v469 = vld [vmem:[%s454 + $0x70] sm:$0xff]
    %v470 = vld [vmem:[%s454 + $0x78] sm:$0xff]
    %v471 = vld [vmem:[%s454 + $0x80] sm:$0xff]
    %v472 = vld [vmem:[%s454 + $0x88] sm:$0xff]
    %v473 = vld [vmem:[%s454 + $0x90] sm:$0x7]
    %v474 = vld [vmem:[%s454 + $0x98] sm:$0x7]
    %v476 = vsel %vm74, %v473, 0
    %v479 = vsel %vm74, %v474, 0
    %481 = vmatpush.msra.mxu0 0.0
    %482 = vmatpush.msra.mxu0 0.0
    %483 = vmatpush.msra.mxu0 0.0
    %484 = vmatpush.msra.mxu0 0.0
    %485 = vmatpush.msra.mxu0 0.0
    %486 = vmatpush.msra.mxu0 0.0
    %487 = vmatpush.msra.mxu0 %v476
    %488 = vmatpush.msra.mxu0 %v471
    %489 = vmatpush.msra.mxu0 %v469
    %490 = vmatpush.msra.mxu0 %v467
    %491 = vmatpush.msra.mxu0 %v465
    %492 = vmatpush.msra.mxu0 %v463
    %493 = vmatpush.msra.mxu0 %v461
    %494 = vmatpush.msra.mxu0 %v459
    %495 = vmatpush.msra.mxu0 %v457
    %496 = vmatpush.msra.mxu0 %v455
    %497 = vmatmul.f32.gmra.mxu0 %v69
    %v498 = vpop.f32.mrf.mxu0
    %v499 = vadd.f32 %v60, %v498
    %500 = vmatmul.f32.gmra.mxu0 %v72
    %v501 = vpop.f32.mrf.mxu0
    %v502 = vadd.f32 %v65, %v501
    %503 = vdwg.mxu0
    %504 = vmatpush.msra.mxu0 0.0
    %505 = vmatpush.msra.mxu0 0.0
    %506 = vmatpush.msra.mxu0 0.0
    %507 = vmatpush.msra.mxu0 0.0
    %508 = vmatpush.msra.mxu0 0.0
    %509 = vmatpush.msra.mxu0 0.0
    %510 = vmatpush.msra.mxu0 %v479
    %511 = vmatpush.msra.mxu0 %v472
    %512 = vmatpush.msra.mxu0 %v470
    %513 = vmatpush.msra.mxu0 %v468
    %514 = vmatpush.msra.mxu0 %v466
    %515 = vmatpush.msra.mxu0 %v464
    %516 = vmatpush.msra.mxu0 %v462
    %517 = vmatpush.msra.mxu0 %v460
    %518 = vmatpush.msra.mxu0 %v458
    %519 = vmatpush.msra.mxu0 %v456
    %520 = vmatmul.f32.gmra.mxu0 %v69
    %v521 = vpop.f32.mrf.mxu0
    %v522 = vadd.f32 %v60, %v521
    %523 = vmatmul.f32.gmra.mxu0 %v72
    %v524 = vpop.f32.mrf.mxu0
    %v525 = vadd.f32 %v65, %v524
    %526 = vdwg.mxu0
    %v527 = vmax.f32 %v499, 0.0
    %v528 = vmax.f32 %v522, 0.0
    %v529 = vmax.f32 %v502, 0.0
    %v530 = vmax.f32 %v525, 0.0
    %s531 = scalar_lea.vmem %s3, 48
    %v532 = vld [vmem:[%s531] sm:$0xff]
    %v533 = vld [vmem:[%s531 + $0x8] sm:$0xff]
    %v535 = vsel %vm213, %v532, 0
    %v538 = vsel %vm213, %v533, 0
    %540 = vmatpush.msra.mxu0 0.0
    %541 = vmatpush.msra.mxu0 0.0
    %542 = vmatpush.msra.mxu0 0.0
    %543 = vmatpush.msra.mxu0 0.0
    %544 = vmatpush.msra.mxu0 0.0
    %545 = vmatpush.msra.mxu0 0.0
    %546 = vmatpush.msra.mxu0 0.0
    %547 = vmatpush.msra.mxu0 0.0
    %548 = vmatpush.msra.mxu0 0.0
    %549 = vmatpush.msra.mxu0 0.0
    %550 = vmatpush.msra.mxu0 0.0
    %551 = vmatpush.msra.mxu0 0.0
    %552 = vmatpush.msra.mxu0 0.0
    %553 = vmatpush.msra.mxu0 0.0
    %554 = vmatpush.msra.mxu0 %v529
    %555 = vmatpush.msra.mxu0 %v527
    %556 = vmatmul.f32.gmra.mxu0 %v535
    %v557 = vpop.f32.mrf.mxu0
    %v558 = vadd.f32 0.0, %v557
    %559 = vmatmul.f32.gmra.mxu0 %v538
    %v560 = vpop.f32.mrf.mxu0
    %v561 = vadd.f32 0.0, %v560
    %562 = vdwg.mxu0
    %563 = vmatpush.msra.mxu0 0.0
    %564 = vmatpush.msra.mxu0 0.0
    %565 = vmatpush.msra.mxu0 0.0
    %566 = vmatpush.msra.mxu0 0.0
    %567 = vmatpush.msra.mxu0 0.0
    %568 = vmatpush.msra.mxu0 0.0
    %569 = vmatpush.msra.mxu0 0.0
    %570 = vmatpush.msra.mxu0 0.0
    %571 = vmatpush.msra.mxu0 0.0
    %572 = vmatpush.msra.mxu0 0.0
    %573 = vmatpush.msra.mxu0 0.0
    %574 = vmatpush.msra.mxu0 0.0
    %575 = vmatpush.msra.mxu0 0.0
    %576 = vmatpush.msra.mxu0 0.0
    %577 = vmatpush.msra.mxu0 %v530
    %578 = vmatpush.msra.mxu0 %v528
    %579 = vmatmul.f32.gmra.mxu0 %v535
    %v580 = vpop.f32.mrf.mxu0
    %v581 = vadd.f32 0.0, %v580
    %582 = vmatmul.f32.gmra.mxu0 %v538
    %v583 = vpop.f32.mrf.mxu0
    %v584 = vadd.f32 0.0, %v583
    %585 = vdwg.mxu0
    %v586 = vadd.f32 %v450, %v558
    %v587 = vadd.f32 %v451, %v581
    %v588 = vadd.f32 %v452, %v561
    %v589 = vadd.f32 %v453, %v584
    %s590 = scalar_lea.vmem %s0, 640
    %v591 = vld [vmem:[%s590] sm:$0xff]
    %v592 = vld [vmem:[%s590 + $0x8] sm:$0xff]
    %v593 = vld [vmem:[%s590 + $0x10] sm:$0xff]
    %v594 = vld [vmem:[%s590 + $0x18] sm:$0xff]
    %v595 = vld [vmem:[%s590 + $0x20] sm:$0xff]
    %v596 = vld [vmem:[%s590 + $0x28] sm:$0xff]
    %v597 = vld [vmem:[%s590 + $0x30] sm:$0xff]
    %v598 = vld [vmem:[%s590 + $0x38] sm:$0xff]
    %v599 = vld [vmem:[%s590 + $0x40] sm:$0xff]
    %v600 = vld [vmem:[%s590 + $0x48] sm:$0xff]
    %v601 = vld [vmem:[%s590 + $0x50] sm:$0xff]
    %v602 = vld [vmem:[%s590 + $0x58] sm:$0xff]
    %v603 = vld [vmem:[%s590 + $0x60] sm:$0xff]
    %v604 = vld [vmem:[%s590 + $0x68] sm:$0xff]
    %v605 = vld [vmem:[%s590 + $0x70] sm:$0xff]
    %v606 = vld [vmem:[%s590 + $0x78] sm:$0xff]
    %v607 = vld [vmem:[%s590 + $0x80] sm:$0xff]
    %v608 = vld [vmem:[%s590 + $0x88] sm:$0xff]
    %v609 = vld [vmem:[%s590 + $0x90] sm:$0x7]
    %v610 = vld [vmem:[%s590 + $0x98] sm:$0x7]
    %v612 = vsel %vm74, %v609, 0
    %v615 = vsel %vm74, %v610, 0
    %617 = vmatpush.msra.mxu0 0.0
    %618 = vmatpush.msra.mxu0 0.0
    %619 = vmatpush.msra.mxu0 0.0
    %620 = vmatpush.msra.mxu0 0.0
    %621 = vmatpush.msra.mxu0 0.0
    %622 = vmatpush.msra.mxu0 0.0
    %623 = vmatpush.msra.mxu0 %v612
    %624 = vmatpush.msra.mxu0 %v607
    %625 = vmatpush.msra.mxu0 %v605
    %626 = vmatpush.msra.mxu0 %v603
    %627 = vmatpush.msra.mxu0 %v601
    %628 = vmatpush.msra.mxu0 %v599
    %629 = vmatpush.msra.mxu0 %v597
    %630 = vmatpush.msra.mxu0 %v595
    %631 = vmatpush.msra.mxu0 %v593
    %632 = vmatpush.msra.mxu0 %v591
    %633 = vmatmul.f32.gmra.mxu0 %v69
    %v634 = vpop.f32.mrf.mxu0
    %v635 = vadd.f32 %v60, %v634
    %636 = vmatmul.f32.gmra.mxu0 %v72
    %v637 = vpop.f32.mrf.mxu0
    %v638 = vadd.f32 %v65, %v637
    %639 = vdwg.mxu0
    %640 = vmatpush.msra.mxu0 0.0
    %641 = vmatpush.msra.mxu0 0.0
    %642 = vmatpush.msra.mxu0 0.0
    %643 = vmatpush.msra.mxu0 0.0
    %644 = vmatpush.msra.mxu0 0.0
    %645 = vmatpush.msra.mxu0 0.0
    %646 = vmatpush.msra.mxu0 %v615
    %647 = vmatpush.msra.mxu0 %v608
    %648 = vmatpush.msra.mxu0 %v606
    %649 = vmatpush.msra.mxu0 %v604
    %650 = vmatpush.msra.mxu0 %v602
    %651 = vmatpush.msra.mxu0 %v600
    %652 = vmatpush.msra.mxu0 %v598
    %653 = vmatpush.msra.mxu0 %v596
    %654 = vmatpush.msra.mxu0 %v594
    %655 = vmatpush.msra.mxu0 %v592
    %656 = vmatmul.f32.gmra.mxu0 %v69
    %v657 = vpop.f32.mrf.mxu0
    %v658 = vadd.f32 %v60, %v657
    %659 = vmatmul.f32.gmra.mxu0 %v72
    %v660 = vpop.f32.mrf.mxu0
    %v661 = vadd.f32 %v65, %v660
    %662 = vdwg.mxu0
    %v663 = vmax.f32 %v635, 0.0
    %v664 = vmax.f32 %v658, 0.0
    %v665 = vmax.f32 %v638, 0.0
    %v666 = vmax.f32 %v661, 0.0
    %s667 = scalar_lea.vmem %s3, 64
    %v668 = vld [vmem:[%s667] sm:$0xff]
    %v669 = vld [vmem:[%s667 + $0x8] sm:$0xff]
    %v671 = vsel %vm213, %v668, 0
    %v674 = vsel %vm213, %v669, 0
    %676 = vmatpush.msra.mxu0 0.0
    %677 = vmatpush.msra.mxu0 0.0
    %678 = vmatpush.msra.mxu0 0.0
    %679 = vmatpush.msra.mxu0 0.0
    %680 = vmatpush.msra.mxu0 0.0
    %681 = vmatpush.msra.mxu0 0.0
    %682 = vmatpush.msra.mxu0 0.0
    %683 = vmatpush.msra.mxu0 0.0
    %684 = vmatpush.msra.mxu0 0.0
    %685 = vmatpush.msra.mxu0 0.0
    %686 = vmatpush.msra.mxu0 0.0
    %687 = vmatpush.msra.mxu0 0.0
    %688 = vmatpush.msra.mxu0 0.0
    %689 = vmatpush.msra.mxu0 0.0
    %690 = vmatpush.msra.mxu0 %v665
    %691 = vmatpush.msra.mxu0 %v663
    %692 = vmatmul.f32.gmra.mxu0 %v671
    %v693 = vpop.f32.mrf.mxu0
    %v694 = vadd.f32 0.0, %v693
    %695 = vmatmul.f32.gmra.mxu0 %v674
    %v696 = vpop.f32.mrf.mxu0
    %v697 = vadd.f32 0.0, %v696
    %698 = vdwg.mxu0
    %699 = vmatpush.msra.mxu0 0.0
    %700 = vmatpush.msra.mxu0 0.0
    %701 = vmatpush.msra.mxu0 0.0
    %702 = vmatpush.msra.mxu0 0.0
    %703 = vmatpush.msra.mxu0 0.0
    %704 = vmatpush.msra.mxu0 0.0
    %705 = vmatpush.msra.mxu0 0.0
    %706 = vmatpush.msra.mxu0 0.0
    %707 = vmatpush.msra.mxu0 0.0
    %708 = vmatpush.msra.mxu0 0.0
    %709 = vmatpush.msra.mxu0 0.0
    %710 = vmatpush.msra.mxu0 0.0
    %711 = vmatpush.msra.mxu0 0.0
    %712 = vmatpush.msra.mxu0 0.0
    %713 = vmatpush.msra.mxu0 %v666
    %714 = vmatpush.msra.mxu0 %v664
    %715 = vmatmul.f32.gmra.mxu0 %v671
    %v716 = vpop.f32.mrf.mxu0
    %v717 = vadd.f32 0.0, %v716
    %718 = vmatmul.f32.gmra.mxu0 %v674
    %v719 = vpop.f32.mrf.mxu0
    %v720 = vadd.f32 0.0, %v719
    %721 = vdwg.mxu0
    %v722 = vadd.f32 %v586, %v694
    %v723 = vadd.f32 %v587, %v717
    %v724 = vadd.f32 %v588, %v697
    %v725 = vadd.f32 %v589, %v720
    %s726 = scalar_lea.vmem %s0, 800
    %v727 = vld [vmem:[%s726] sm:$0xff]
    %v728 = vld [vmem:[%s726 + $0x8] sm:$0xff]
    %v729 = vld [vmem:[%s726 + $0x10] sm:$0xff]
    %v730 = vld [vmem:[%s726 + $0x18] sm:$0xff]
    %v731 = vld [vmem:[%s726 + $0x20] sm:$0xff]
    %v732 = vld [vmem:[%s726 + $0x28] sm:$0xff]
    %v733 = vld [vmem:[%s726 + $0x30] sm:$0xff]
    %v734 = vld [vmem:[%s726 + $0x38] sm:$0xff]
    %v735 = vld [vmem:[%s726 + $0x40] sm:$0xff]
    %v736 = vld [vmem:[%s726 + $0x48] sm:$0xff]
    %v737 = vld [vmem:[%s726 + $0x50] sm:$0xff]
    %v738 = vld [vmem:[%s726 + $0x58] sm:$0xff]
    %v739 = vld [vmem:[%s726 + $0x60] sm:$0xff]
    %v740 = vld [vmem:[%s726 + $0x68] sm:$0xff]
    %v741 = vld [vmem:[%s726 + $0x70] sm:$0xff]
    %v742 = vld [vmem:[%s726 + $0x78] sm:$0xff]
    %v743 = vld [vmem:[%s726 + $0x80] sm:$0xff]
    %v744 = vld [vmem:[%s726 + $0x88] sm:$0xff]
    %v745 = vld [vmem:[%s726 + $0x90] sm:$0x7]
    %v746 = vld [vmem:[%s726 + $0x98] sm:$0x7]
    %v748 = vsel %vm74, %v745, 0
    %v751 = vsel %vm74, %v746, 0
    %753 = vmatpush.msra.mxu0 0.0
    %754 = vmatpush.msra.mxu0 0.0
    %755 = vmatpush.msra.mxu0 0.0
    %756 = vmatpush.msra.mxu0 0.0
    %757 = vmatpush.msra.mxu0 0.0
    %758 = vmatpush.msra.mxu0 0.0
    %759 = vmatpush.msra.mxu0 %v748
    %760 = vmatpush.msra.mxu0 %v743
    %761 = vmatpush.msra.mxu0 %v741
    %762 = vmatpush.msra.mxu0 %v739
    %763 = vmatpush.msra.mxu0 %v737
    %764 = vmatpush.msra.mxu0 %v735
    %765 = vmatpush.msra.mxu0 %v733
    %766 = vmatpush.msra.mxu0 %v731
    %767 = vmatpush.msra.mxu0 %v729
    %768 = vmatpush.msra.mxu0 %v727
    %769 = vmatmul.f32.gmra.mxu0 %v69
    %v770 = vpop.f32.mrf.mxu0
    %v771 = vadd.f32 %v60, %v770
    %772 = vmatmul.f32.gmra.mxu0 %v72
    %v773 = vpop.f32.mrf.mxu0
    %v774 = vadd.f32 %v65, %v773
    %775 = vdwg.mxu0
    %776 = vmatpush.msra.mxu0 0.0
    %777 = vmatpush.msra.mxu0 0.0
    %778 = vmatpush.msra.mxu0 0.0
    %779 = vmatpush.msra.mxu0 0.0
    %780 = vmatpush.msra.mxu0 0.0
    %781 = vmatpush.msra.mxu0 0.0
    %782 = vmatpush.msra.mxu0 %v751
    %783 = vmatpush.msra.mxu0 %v744
    %784 = vmatpush.msra.mxu0 %v742
    %785 = vmatpush.msra.mxu0 %v740
    %786 = vmatpush.msra.mxu0 %v738
    %787 = vmatpush.msra.mxu0 %v736
    %788 = vmatpush.msra.mxu0 %v734
    %789 = vmatpush.msra.mxu0 %v732
    %790 = vmatpush.msra.mxu0 %v730
    %791 = vmatpush.msra.mxu0 %v728
    %792 = vmatmul.f32.gmra.mxu0 %v69
    %v793 = vpop.f32.mrf.mxu0
    %v794 = vadd.f32 %v60, %v793
    %795 = vmatmul.f32.gmra.mxu0 %v72
    %v796 = vpop.f32.mrf.mxu0
    %v797 = vadd.f32 %v65, %v796
    %798 = vdwg.mxu0
    %v799 = vmax.f32 %v771, 0.0
    %v800 = vmax.f32 %v794, 0.0
    %v801 = vmax.f32 %v774, 0.0
    %v802 = vmax.f32 %v797, 0.0
    %s803 = scalar_lea.vmem %s3, 80
    %v804 = vld [vmem:[%s803] sm:$0xff]
    %v805 = vld [vmem:[%s803 + $0x8] sm:$0xff]
    %v807 = vsel %vm213, %v804, 0
    %v810 = vsel %vm213, %v805, 0
    %812 = vmatpush.msra.mxu0 0.0
    %813 = vmatpush.msra.mxu0 0.0
    %814 = vmatpush.msra.mxu0 0.0
    %815 = vmatpush.msra.mxu0 0.0
    %816 = vmatpush.msra.mxu0 0.0
    %817 = vmatpush.msra.mxu0 0.0
    %818 = vmatpush.msra.mxu0 0.0
    %819 = vmatpush.msra.mxu0 0.0
    %820 = vmatpush.msra.mxu0 0.0
    %821 = vmatpush.msra.mxu0 0.0
    %822 = vmatpush.msra.mxu0 0.0
    %823 = vmatpush.msra.mxu0 0.0
    %824 = vmatpush.msra.mxu0 0.0
    %825 = vmatpush.msra.mxu0 0.0
    %826 = vmatpush.msra.mxu0 %v801
    %827 = vmatpush.msra.mxu0 %v799
    %828 = vmatmul.f32.gmra.mxu0 %v807
    %v829 = vpop.f32.mrf.mxu0
    %v830 = vadd.f32 0.0, %v829
    %831 = vmatmul.f32.gmra.mxu0 %v810
    %v832 = vpop.f32.mrf.mxu0
    %v833 = vadd.f32 0.0, %v832
    %834 = vdwg.mxu0
    %835 = vmatpush.msra.mxu0 0.0
    %836 = vmatpush.msra.mxu0 0.0
    %837 = vmatpush.msra.mxu0 0.0
    %838 = vmatpush.msra.mxu0 0.0
    %839 = vmatpush.msra.mxu0 0.0
    %840 = vmatpush.msra.mxu0 0.0
    %841 = vmatpush.msra.mxu0 0.0
    %842 = vmatpush.msra.mxu0 0.0
    %843 = vmatpush.msra.mxu0 0.0
    %844 = vmatpush.msra.mxu0 0.0
    %845 = vmatpush.msra.mxu0 0.0
    %846 = vmatpush.msra.mxu0 0.0
    %847 = vmatpush.msra.mxu0 0.0
    %848 = vmatpush.msra.mxu0 0.0
    %849 = vmatpush.msra.mxu0 %v802
    %850 = vmatpush.msra.mxu0 %v800
    %851 = vmatmul.f32.gmra.mxu0 %v807
    %v852 = vpop.f32.mrf.mxu0
    %v853 = vadd.f32 0.0, %v852
    %854 = vmatmul.f32.gmra.mxu0 %v810
    %v855 = vpop.f32.mrf.mxu0
    %v856 = vadd.f32 0.0, %v855
    %857 = vdwg.mxu0
    %v858 = vadd.f32 %v722, %v830
    %v859 = vadd.f32 %v723, %v853
    %v860 = vadd.f32 %v724, %v833
    %v861 = vadd.f32 %v725, %v856
    %s862 = scalar_lea.vmem %s0, 960
    %v863 = vld [vmem:[%s862] sm:$0xff]
    %v864 = vld [vmem:[%s862 + $0x8] sm:$0xff]
    %v865 = vld [vmem:[%s862 + $0x10] sm:$0xff]
    %v866 = vld [vmem:[%s862 + $0x18] sm:$0xff]
    %v867 = vld [vmem:[%s862 + $0x20] sm:$0xff]
    %v868 = vld [vmem:[%s862 + $0x28] sm:$0xff]
    %v869 = vld [vmem:[%s862 + $0x30] sm:$0xff]
    %v870 = vld [vmem:[%s862 + $0x38] sm:$0xff]
    %v871 = vld [vmem:[%s862 + $0x40] sm:$0xff]
    %v872 = vld [vmem:[%s862 + $0x48] sm:$0xff]
    %v873 = vld [vmem:[%s862 + $0x50] sm:$0xff]
    %v874 = vld [vmem:[%s862 + $0x58] sm:$0xff]
    %v875 = vld [vmem:[%s862 + $0x60] sm:$0xff]
    %v876 = vld [vmem:[%s862 + $0x68] sm:$0xff]
    %v877 = vld [vmem:[%s862 + $0x70] sm:$0xff]
    %v878 = vld [vmem:[%s862 + $0x78] sm:$0xff]
    %v879 = vld [vmem:[%s862 + $0x80] sm:$0xff]
    %v880 = vld [vmem:[%s862 + $0x88] sm:$0xff]
    %v881 = vld [vmem:[%s862 + $0x90] sm:$0x7]
    %v882 = vld [vmem:[%s862 + $0x98] sm:$0x7]
    %v884 = vsel %vm74, %v881, 0
    %v887 = vsel %vm74, %v882, 0
    %889 = vmatpush.msra.mxu0 0.0
    %890 = vmatpush.msra.mxu0 0.0
    %891 = vmatpush.msra.mxu0 0.0
    %892 = vmatpush.msra.mxu0 0.0
    %893 = vmatpush.msra.mxu0 0.0
    %894 = vmatpush.msra.mxu0 0.0
    %895 = vmatpush.msra.mxu0 %v884
    %896 = vmatpush.msra.mxu0 %v879
    %897 = vmatpush.msra.mxu0 %v877
    %898 = vmatpush.msra.mxu0 %v875
    %899 = vmatpush.msra.mxu0 %v873
    %900 = vmatpush.msra.mxu0 %v871
    %901 = vmatpush.msra.mxu0 %v869
    %902 = vmatpush.msra.mxu0 %v867
    %903 = vmatpush.msra.mxu0 %v865
    %904 = vmatpush.msra.mxu0 %v863
    %905 = vmatmul.f32.gmra.mxu0 %v69
    %v906 = vpop.f32.mrf.mxu0
    %v907 = vadd.f32 %v60, %v906
    %908 = vmatmul.f32.gmra.mxu0 %v72
    %v909 = vpop.f32.mrf.mxu0
    %v910 = vadd.f32 %v65, %v909
    %911 = vdwg.mxu0
    %912 = vmatpush.msra.mxu0 0.0
    %913 = vmatpush.msra.mxu0 0.0
    %914 = vmatpush.msra.mxu0 0.0
    %915 = vmatpush.msra.mxu0 0.0
    %916 = vmatpush.msra.mxu0 0.0
    %917 = vmatpush.msra.mxu0 0.0
    %918 = vmatpush.msra.mxu0 %v887
    %919 = vmatpush.msra.mxu0 %v880
    %920 = vmatpush.msra.mxu0 %v878
    %921 = vmatpush.msra.mxu0 %v876
    %922 = vmatpush.msra.mxu0 %v874
    %923 = vmatpush.msra.mxu0 %v872
    %924 = vmatpush.msra.mxu0 %v870
    %925 = vmatpush.msra.mxu0 %v868
    %926 = vmatpush.msra.mxu0 %v866
    %927 = vmatpush.msra.mxu0 %v864
    %928 = vmatmul.f32.gmra.mxu0 %v69
    %v929 = vpop.f32.mrf.mxu0
    %v930 = vadd.f32 %v60, %v929
    %931 = vmatmul.f32.gmra.mxu0 %v72
    %v932 = vpop.f32.mrf.mxu0
    %v933 = vadd.f32 %v65, %v932
    %934 = vdwg.mxu0
    %v935 = vmax.f32 %v907, 0.0
    %v936 = vmax.f32 %v930, 0.0
    %v937 = vmax.f32 %v910, 0.0
    %v938 = vmax.f32 %v933, 0.0
    %s939 = scalar_lea.vmem %s3, 96
    %v940 = vld [vmem:[%s939] sm:$0xff]
    %v941 = vld [vmem:[%s939 + $0x8] sm:$0xff]
    %v943 = vsel %vm213, %v940, 0
    %v946 = vsel %vm213, %v941, 0
    %948 = vmatpush.msra.mxu0 0.0
    %949 = vmatpush.msra.mxu0 0.0
    %950 = vmatpush.msra.mxu0 0.0
    %951 = vmatpush.msra.mxu0 0.0
    %952 = vmatpush.msra.mxu0 0.0
    %953 = vmatpush.msra.mxu0 0.0
    %954 = vmatpush.msra.mxu0 0.0
    %955 = vmatpush.msra.mxu0 0.0
    %956 = vmatpush.msra.mxu0 0.0
    %957 = vmatpush.msra.mxu0 0.0
    %958 = vmatpush.msra.mxu0 0.0
    %959 = vmatpush.msra.mxu0 0.0
    %960 = vmatpush.msra.mxu0 0.0
    %961 = vmatpush.msra.mxu0 0.0
    %962 = vmatpush.msra.mxu0 %v937
    %963 = vmatpush.msra.mxu0 %v935
    %964 = vmatmul.f32.gmra.mxu0 %v943
    %v965 = vpop.f32.mrf.mxu0
    %v966 = vadd.f32 0.0, %v965
    %967 = vmatmul.f32.gmra.mxu0 %v946
    %v968 = vpop.f32.mrf.mxu0
    %v969 = vadd.f32 0.0, %v968
    %970 = vdwg.mxu0
    %971 = vmatpush.msra.mxu0 0.0
    %972 = vmatpush.msra.mxu0 0.0
    %973 = vmatpush.msra.mxu0 0.0
    %974 = vmatpush.msra.mxu0 0.0
    %975 = vmatpush.msra.mxu0 0.0
    %976 = vmatpush.msra.mxu0 0.0
    %977 = vmatpush.msra.mxu0 0.0
    %978 = vmatpush.msra.mxu0 0.0
    %979 = vmatpush.msra.mxu0 0.0
    %980 = vmatpush.msra.mxu0 0.0
    %981 = vmatpush.msra.mxu0 0.0
    %982 = vmatpush.msra.mxu0 0.0
    %983 = vmatpush.msra.mxu0 0.0
    %984 = vmatpush.msra.mxu0 0.0
    %985 = vmatpush.msra.mxu0 %v938
    %986 = vmatpush.msra.mxu0 %v936
    %987 = vmatmul.f32.gmra.mxu0 %v943
    %v988 = vpop.f32.mrf.mxu0
    %v989 = vadd.f32 0.0, %v988
    %990 = vmatmul.f32.gmra.mxu0 %v946
    %v991 = vpop.f32.mrf.mxu0
    %v992 = vadd.f32 0.0, %v991
    %993 = vdwg.mxu0
    %v994 = vadd.f32 %v858, %v966
    %v995 = vadd.f32 %v859, %v989
    %v996 = vadd.f32 %v860, %v969
    %v997 = vadd.f32 %v861, %v992
    %s998 = scalar_lea.vmem %s0, 1120
    %v999 = vld [vmem:[%s998] sm:$0xff]
    %v1000 = vld [vmem:[%s998 + $0x8] sm:$0xff]
    %v1001 = vld [vmem:[%s998 + $0x10] sm:$0xff]
    %v1002 = vld [vmem:[%s998 + $0x18] sm:$0xff]
    %v1003 = vld [vmem:[%s998 + $0x20] sm:$0xff]
    %v1004 = vld [vmem:[%s998 + $0x28] sm:$0xff]
    %v1005 = vld [vmem:[%s998 + $0x30] sm:$0xff]
    %v1006 = vld [vmem:[%s998 + $0x38] sm:$0xff]
    %v1007 = vld [vmem:[%s998 + $0x40] sm:$0xff]
    %v1008 = vld [vmem:[%s998 + $0x48] sm:$0xff]
    %v1009 = vld [vmem:[%s998 + $0x50] sm:$0xff]
    %v1010 = vld [vmem:[%s998 + $0x58] sm:$0xff]
    %v1011 = vld [vmem:[%s998 + $0x60] sm:$0xff]
    %v1012 = vld [vmem:[%s998 + $0x68] sm:$0xff]
    %v1013 = vld [vmem:[%s998 + $0x70] sm:$0xff]
    %v1014 = vld [vmem:[%s998 + $0x78] sm:$0xff]
    %v1015 = vld [vmem:[%s998 + $0x80] sm:$0xff]
    %v1016 = vld [vmem:[%s998 + $0x88] sm:$0xff]
    %v1017 = vld [vmem:[%s998 + $0x90] sm:$0x7]
    %v1018 = vld [vmem:[%s998 + $0x98] sm:$0x7]
    %v1020 = vsel %vm74, %v1017, 0
    %v1023 = vsel %vm74, %v1018, 0
    %1025 = vmatpush.msra.mxu0 0.0
    %1026 = vmatpush.msra.mxu0 0.0
    %1027 = vmatpush.msra.mxu0 0.0
    %1028 = vmatpush.msra.mxu0 0.0
    %1029 = vmatpush.msra.mxu0 0.0
    %1030 = vmatpush.msra.mxu0 0.0
    %1031 = vmatpush.msra.mxu0 %v1020
    %1032 = vmatpush.msra.mxu0 %v1015
    %1033 = vmatpush.msra.mxu0 %v1013
    %1034 = vmatpush.msra.mxu0 %v1011
    %1035 = vmatpush.msra.mxu0 %v1009
    %1036 = vmatpush.msra.mxu0 %v1007
    %1037 = vmatpush.msra.mxu0 %v1005
    %1038 = vmatpush.msra.mxu0 %v1003
    %1039 = vmatpush.msra.mxu0 %v1001
    %1040 = vmatpush.msra.mxu0 %v999
    %1041 = vmatmul.f32.gmra.mxu0 %v69
    %v1042 = vpop.f32.mrf.mxu0
    %v1043 = vadd.f32 %v60, %v1042
    %1044 = vmatmul.f32.gmra.mxu0 %v72
    %v1045 = vpop.f32.mrf.mxu0
    %v1046 = vadd.f32 %v65, %v1045
    %1047 = vdwg.mxu0
    %1048 = vmatpush.msra.mxu0 0.0
    %1049 = vmatpush.msra.mxu0 0.0
    %1050 = vmatpush.msra.mxu0 0.0
    %1051 = vmatpush.msra.mxu0 0.0
    %1052 = vmatpush.msra.mxu0 0.0
    %1053 = vmatpush.msra.mxu0 0.0
    %1054 = vmatpush.msra.mxu0 %v1023
    %1055 = vmatpush.msra.mxu0 %v1016
    %1056 = vmatpush.msra.mxu0 %v1014
    %1057 = vmatpush.msra.mxu0 %v1012
    %1058 = vmatpush.msra.mxu0 %v1010
    %1059 = vmatpush.msra.mxu0 %v1008
    %1060 = vmatpush.msra.mxu0 %v1006
    %1061 = vmatpush.msra.mxu0 %v1004
    %1062 = vmatpush.msra.mxu0 %v1002
    %1063 = vmatpush.msra.mxu0 %v1000
    %1064 = vmatmul.f32.gmra.mxu0 %v69
    %v1065 = vpop.f32.mrf.mxu0
    %v1066 = vadd.f32 %v60, %v1065
    %1067 = vmatmul.f32.gmra.mxu0 %v72
    %v1068 = vpop.f32.mrf.mxu0
    %v1069 = vadd.f32 %v65, %v1068
    %1070 = vdwg.mxu0
    %v1071 = vmax.f32 %v1043, 0.0
    %v1072 = vmax.f32 %v1066, 0.0
    %v1073 = vmax.f32 %v1046, 0.0
    %v1074 = vmax.f32 %v1069, 0.0
    %s1075 = scalar_lea.vmem %s3, 112
    %v1076 = vld [vmem:[%s1075] sm:$0xff]
    %v1077 = vld [vmem:[%s1075 + $0x8] sm:$0xff]
    %v1079 = vsel %vm213, %v1076, 0
    %v1082 = vsel %vm213, %v1077, 0
    %1084 = vmatpush.msra.mxu0 0.0
    %1085 = vmatpush.msra.mxu0 0.0
    %1086 = vmatpush.msra.mxu0 0.0
    %1087 = vmatpush.msra.mxu0 0.0
    %1088 = vmatpush.msra.mxu0 0.0
    %1089 = vmatpush.msra.mxu0 0.0
    %1090 = vmatpush.msra.mxu0 0.0
    %1091 = vmatpush.msra.mxu0 0.0
    %1092 = vmatpush.msra.mxu0 0.0
    %1093 = vmatpush.msra.mxu0 0.0
    %1094 = vmatpush.msra.mxu0 0.0
    %1095 = vmatpush.msra.mxu0 0.0
    %1096 = vmatpush.msra.mxu0 0.0
    %1097 = vmatpush.msra.mxu0 0.0
    %1098 = vmatpush.msra.mxu0 %v1073
    %1099 = vmatpush.msra.mxu0 %v1071
    %1100 = vmatmul.f32.gmra.mxu0 %v1079
    %v1101 = vpop.f32.mrf.mxu0
    %v1102 = vadd.f32 0.0, %v1101
    %1103 = vmatmul.f32.gmra.mxu0 %v1082
    %v1104 = vpop.f32.mrf.mxu0
    %v1105 = vadd.f32 0.0, %v1104
    %1106 = vdwg.mxu0
    %1107 = vmatpush.msra.mxu0 0.0
    %1108 = vmatpush.msra.mxu0 0.0
    %1109 = vmatpush.msra.mxu0 0.0
    %1110 = vmatpush.msra.mxu0 0.0
    %1111 = vmatpush.msra.mxu0 0.0
    %1112 = vmatpush.msra.mxu0 0.0
    %1113 = vmatpush.msra.mxu0 0.0
    %1114 = vmatpush.msra.mxu0 0.0
    %1115 = vmatpush.msra.mxu0 0.0
    %1116 = vmatpush.msra.mxu0 0.0
    %1117 = vmatpush.msra.mxu0 0.0
    %1118 = vmatpush.msra.mxu0 0.0
    %1119 = vmatpush.msra.mxu0 0.0
    %1120 = vmatpush.msra.mxu0 0.0
    %1121 = vmatpush.msra.mxu0 %v1074
    %1122 = vmatpush.msra.mxu0 %v1072
    %1123 = vmatmul.f32.gmra.mxu0 %v1079
    %v1124 = vpop.f32.mrf.mxu0
    %v1125 = vadd.f32 0.0, %v1124
    %1126 = vmatmul.f32.gmra.mxu0 %v1082
    %v1127 = vpop.f32.mrf.mxu0
    %v1128 = vadd.f32 0.0, %v1127
    %1129 = vdwg.mxu0
    %v1130 = vadd.f32 %v994, %v1102
    %v1131 = vadd.f32 %v995, %v1125
    %v1132 = vadd.f32 %v996, %v1105
    %v1133 = vadd.f32 %v997, %v1128
    %s1134 = scalar_lea.vmem %s0, 1280
    %v1135 = vld [vmem:[%s1134] sm:$0xff]
    %v1136 = vld [vmem:[%s1134 + $0x8] sm:$0xff]
    %v1137 = vld [vmem:[%s1134 + $0x10] sm:$0xff]
    %v1138 = vld [vmem:[%s1134 + $0x18] sm:$0xff]
    %v1139 = vld [vmem:[%s1134 + $0x20] sm:$0xff]
    %v1140 = vld [vmem:[%s1134 + $0x28] sm:$0xff]
    %v1141 = vld [vmem:[%s1134 + $0x30] sm:$0xff]
    %v1142 = vld [vmem:[%s1134 + $0x38] sm:$0xff]
    %v1143 = vld [vmem:[%s1134 + $0x40] sm:$0xff]
    %v1144 = vld [vmem:[%s1134 + $0x48] sm:$0xff]
    %v1145 = vld [vmem:[%s1134 + $0x50] sm:$0xff]
    %v1146 = vld [vmem:[%s1134 + $0x58] sm:$0xff]
    %v1147 = vld [vmem:[%s1134 + $0x60] sm:$0xff]
    %v1148 = vld [vmem:[%s1134 + $0x68] sm:$0xff]
    %v1149 = vld [vmem:[%s1134 + $0x70] sm:$0xff]
    %v1150 = vld [vmem:[%s1134 + $0x78] sm:$0xff]
    %v1151 = vld [vmem:[%s1134 + $0x80] sm:$0xff]
    %v1152 = vld [vmem:[%s1134 + $0x88] sm:$0xff]
    %v1153 = vld [vmem:[%s1134 + $0x90] sm:$0x7]
    %v1154 = vld [vmem:[%s1134 + $0x98] sm:$0x7]
    %v1156 = vsel %vm74, %v1153, 0
    %v1159 = vsel %vm74, %v1154, 0
    %1161 = vmatpush.msra.mxu0 0.0
    %1162 = vmatpush.msra.mxu0 0.0
    %1163 = vmatpush.msra.mxu0 0.0
    %1164 = vmatpush.msra.mxu0 0.0
    %1165 = vmatpush.msra.mxu0 0.0
    %1166 = vmatpush.msra.mxu0 0.0
    %1167 = vmatpush.msra.mxu0 %v1156
    %1168 = vmatpush.msra.mxu0 %v1151
    %1169 = vmatpush.msra.mxu0 %v1149
    %1170 = vmatpush.msra.mxu0 %v1147
    %1171 = vmatpush.msra.mxu0 %v1145
    %1172 = vmatpush.msra.mxu0 %v1143
    %1173 = vmatpush.msra.mxu0 %v1141
    %1174 = vmatpush.msra.mxu0 %v1139
    %1175 = vmatpush.msra.mxu0 %v1137
    %1176 = vmatpush.msra.mxu0 %v1135
    %1177 = vmatmul.f32.gmra.mxu0 %v69
    %v1178 = vpop.f32.mrf.mxu0
    %v1179 = vadd.f32 %v60, %v1178
    %1180 = vmatmul.f32.gmra.mxu0 %v72
    %v1181 = vpop.f32.mrf.mxu0
    %v1182 = vadd.f32 %v65, %v1181
    %1183 = vdwg.mxu0
    %1184 = vmatpush.msra.mxu0 0.0
    %1185 = vmatpush.msra.mxu0 0.0
    %1186 = vmatpush.msra.mxu0 0.0
    %1187 = vmatpush.msra.mxu0 0.0
    %1188 = vmatpush.msra.mxu0 0.0
    %1189 = vmatpush.msra.mxu0 0.0
    %1190 = vmatpush.msra.mxu0 %v1159
    %1191 = vmatpush.msra.mxu0 %v1152
    %1192 = vmatpush.msra.mxu0 %v1150
    %1193 = vmatpush.msra.mxu0 %v1148
    %1194 = vmatpush.msra.mxu0 %v1146
    %1195 = vmatpush.msra.mxu0 %v1144
    %1196 = vmatpush.msra.mxu0 %v1142
    %1197 = vmatpush.msra.mxu0 %v1140
    %1198 = vmatpush.msra.mxu0 %v1138
    %1199 = vmatpush.msra.mxu0 %v1136
    %1200 = vmatmul.f32.gmra.mxu0 %v69
    %v1201 = vpop.f32.mrf.mxu0
    %v1202 = vadd.f32 %v60, %v1201
    %1203 = vmatmul.f32.gmra.mxu0 %v72
    %v1204 = vpop.f32.mrf.mxu0
    %v1205 = vadd.f32 %v65, %v1204
    %1206 = vdwg.mxu0
    %v1207 = vmax.f32 %v1179, 0.0
    %v1208 = vmax.f32 %v1202, 0.0
    %v1209 = vmax.f32 %v1182, 0.0
    %v1210 = vmax.f32 %v1205, 0.0
    %s1211 = scalar_lea.vmem %s3, 128
    %v1212 = vld [vmem:[%s1211] sm:$0xff]
    %v1213 = vld [vmem:[%s1211 + $0x8] sm:$0xff]
    %v1215 = vsel %vm213, %v1212, 0
    %v1218 = vsel %vm213, %v1213, 0
    %1220 = vmatpush.msra.mxu0 0.0
    %1221 = vmatpush.msra.mxu0 0.0
    %1222 = vmatpush.msra.mxu0 0.0
    %1223 = vmatpush.msra.mxu0 0.0
    %1224 = vmatpush.msra.mxu0 0.0
    %1225 = vmatpush.msra.mxu0 0.0
    %1226 = vmatpush.msra.mxu0 0.0
    %1227 = vmatpush.msra.mxu0 0.0
    %1228 = vmatpush.msra.mxu0 0.0
    %1229 = vmatpush.msra.mxu0 0.0
    %1230 = vmatpush.msra.mxu0 0.0
    %1231 = vmatpush.msra.mxu0 0.0
    %1232 = vmatpush.msra.mxu0 0.0
    %1233 = vmatpush.msra.mxu0 0.0
    %1234 = vmatpush.msra.mxu0 %v1209
    %1235 = vmatpush.msra.mxu0 %v1207
    %1236 = vmatmul.f32.gmra.mxu0 %v1215
    %v1237 = vpop.f32.mrf.mxu0
    %v1238 = vadd.f32 0.0, %v1237
    %1239 = vmatmul.f32.gmra.mxu0 %v1218
    %v1240 = vpop.f32.mrf.mxu0
    %v1241 = vadd.f32 0.0, %v1240
    %1242 = vdwg.mxu0
    %1243 = vmatpush.msra.mxu0 0.0
    %1244 = vmatpush.msra.mxu0 0.0
    %1245 = vmatpush.msra.mxu0 0.0
    %1246 = vmatpush.msra.mxu0 0.0
    %1247 = vmatpush.msra.mxu0 0.0
    %1248 = vmatpush.msra.mxu0 0.0
    %1249 = vmatpush.msra.mxu0 0.0
    %1250 = vmatpush.msra.mxu0 0.0
    %1251 = vmatpush.msra.mxu0 0.0
    %1252 = vmatpush.msra.mxu0 0.0
    %1253 = vmatpush.msra.mxu0 0.0
    %1254 = vmatpush.msra.mxu0 0.0
    %1255 = vmatpush.msra.mxu0 0.0
    %1256 = vmatpush.msra.mxu0 0.0
    %1257 = vmatpush.msra.mxu0 %v1210
    %1258 = vmatpush.msra.mxu0 %v1208
    %1259 = vmatmul.f32.gmra.mxu0 %v1215
    %v1260 = vpop.f32.mrf.mxu0
    %v1261 = vadd.f32 0.0, %v1260
    %1262 = vmatmul.f32.gmra.mxu0 %v1218
    %v1263 = vpop.f32.mrf.mxu0
    %v1264 = vadd.f32 0.0, %v1263
    %1265 = vdwg.mxu0
    %v1266 = vadd.f32 %v1130, %v1238
    %v1267 = vadd.f32 %v1131, %v1261
    %v1268 = vadd.f32 %v1132, %v1241
    %v1269 = vadd.f32 %v1133, %v1264
    %s1270 = scalar_lea.vmem %s0, 1440
    %v1271 = vld [vmem:[%s1270] sm:$0xff]
    %v1272 = vld [vmem:[%s1270 + $0x8] sm:$0xff]
    %v1273 = vld [vmem:[%s1270 + $0x10] sm:$0xff]
    %v1274 = vld [vmem:[%s1270 + $0x18] sm:$0xff]
    %v1275 = vld [vmem:[%s1270 + $0x20] sm:$0xff]
    %v1276 = vld [vmem:[%s1270 + $0x28] sm:$0xff]
    %v1277 = vld [vmem:[%s1270 + $0x30] sm:$0xff]
    %v1278 = vld [vmem:[%s1270 + $0x38] sm:$0xff]
    %v1279 = vld [vmem:[%s1270 + $0x40] sm:$0xff]
    %v1280 = vld [vmem:[%s1270 + $0x48] sm:$0xff]
    %v1281 = vld [vmem:[%s1270 + $0x50] sm:$0xff]
    %v1282 = vld [vmem:[%s1270 + $0x58] sm:$0xff]
    %v1283 = vld [vmem:[%s1270 + $0x60] sm:$0xff]
    %v1284 = vld [vmem:[%s1270 + $0x68] sm:$0xff]
    %v1285 = vld [vmem:[%s1270 + $0x70] sm:$0xff]
    %v1286 = vld [vmem:[%s1270 + $0x78] sm:$0xff]
    %v1287 = vld [vmem:[%s1270 + $0x80] sm:$0xff]
    %v1288 = vld [vmem:[%s1270 + $0x88] sm:$0xff]
    %v1289 = vld [vmem:[%s1270 + $0x90] sm:$0x7]
    %v1290 = vld [vmem:[%s1270 + $0x98] sm:$0x7]
    %v1292 = vsel %vm74, %v1289, 0
    %v1295 = vsel %vm74, %v1290, 0
    %1297 = vmatpush.msra.mxu0 0.0
    %1298 = vmatpush.msra.mxu0 0.0
    %1299 = vmatpush.msra.mxu0 0.0
    %1300 = vmatpush.msra.mxu0 0.0
    %1301 = vmatpush.msra.mxu0 0.0
    %1302 = vmatpush.msra.mxu0 0.0
    %1303 = vmatpush.msra.mxu0 %v1292
    %1304 = vmatpush.msra.mxu0 %v1287
    %1305 = vmatpush.msra.mxu0 %v1285
    %1306 = vmatpush.msra.mxu0 %v1283
    %1307 = vmatpush.msra.mxu0 %v1281
    %1308 = vmatpush.msra.mxu0 %v1279
    %1309 = vmatpush.msra.mxu0 %v1277
    %1310 = vmatpush.msra.mxu0 %v1275
    %1311 = vmatpush.msra.mxu0 %v1273
    %1312 = vmatpush.msra.mxu0 %v1271
    %1313 = vmatmul.f32.gmra.mxu0 %v69
    %v1314 = vpop.f32.mrf.mxu0
    %v1315 = vadd.f32 %v60, %v1314
    %1316 = vmatmul.f32.gmra.mxu0 %v72
    %v1317 = vpop.f32.mrf.mxu0
    %v1318 = vadd.f32 %v65, %v1317
    %1319 = vdwg.mxu0
    %1320 = vmatpush.msra.mxu0 0.0
    %1321 = vmatpush.msra.mxu0 0.0
    %1322 = vmatpush.msra.mxu0 0.0
    %1323 = vmatpush.msra.mxu0 0.0
    %1324 = vmatpush.msra.mxu0 0.0
    %1325 = vmatpush.msra.mxu0 0.0
    %1326 = vmatpush.msra.mxu0 %v1295
    %1327 = vmatpush.msra.mxu0 %v1288
    %1328 = vmatpush.msra.mxu0 %v1286
    %1329 = vmatpush.msra.mxu0 %v1284
    %1330 = vmatpush.msra.mxu0 %v1282
    %1331 = vmatpush.msra.mxu0 %v1280
    %1332 = vmatpush.msra.mxu0 %v1278
    %1333 = vmatpush.msra.mxu0 %v1276
    %1334 = vmatpush.msra.mxu0 %v1274
    %1335 = vmatpush.msra.mxu0 %v1272
    %1336 = vmatmul.f32.gmra.mxu0 %v69
    %v1337 = vpop.f32.mrf.mxu0
    %v1338 = vadd.f32 %v60, %v1337
    %1339 = vmatmul.f32.gmra.mxu0 %v72
    %v1340 = vpop.f32.mrf.mxu0
    %v1341 = vadd.f32 %v65, %v1340
    %1342 = vdwg.mxu0
    %v1343 = vmax.f32 %v1315, 0.0
    %v1344 = vmax.f32 %v1338, 0.0
    %v1345 = vmax.f32 %v1318, 0.0
    %v1346 = vmax.f32 %v1341, 0.0
    %s1347 = scalar_lea.vmem %s3, 144
    %v1348 = vld [vmem:[%s1347] sm:$0xff]
    %v1349 = vld [vmem:[%s1347 + $0x8] sm:$0xff]
    %v1351 = vsel %vm213, %v1348, 0
    %v1354 = vsel %vm213, %v1349, 0
    %1356 = vmatpush.msra.mxu0 0.0
    %1357 = vmatpush.msra.mxu0 0.0
    %1358 = vmatpush.msra.mxu0 0.0
    %1359 = vmatpush.msra.mxu0 0.0
    %1360 = vmatpush.msra.mxu0 0.0
    %1361 = vmatpush.msra.mxu0 0.0
    %1362 = vmatpush.msra.mxu0 0.0
    %1363 = vmatpush.msra.mxu0 0.0
    %1364 = vmatpush.msra.mxu0 0.0
    %1365 = vmatpush.msra.mxu0 0.0
    %1366 = vmatpush.msra.mxu0 0.0
    %1367 = vmatpush.msra.mxu0 0.0
    %1368 = vmatpush.msra.mxu0 0.0
    %1369 = vmatpush.msra.mxu0 0.0
    %1370 = vmatpush.msra.mxu0 %v1345
    %1371 = vmatpush.msra.mxu0 %v1343
    %1372 = vmatmul.f32.gmra.mxu0 %v1351
    %v1373 = vpop.f32.mrf.mxu0
    %v1374 = vadd.f32 0.0, %v1373
    %1375 = vmatmul.f32.gmra.mxu0 %v1354
    %v1376 = vpop.f32.mrf.mxu0
    %v1377 = vadd.f32 0.0, %v1376
    %1378 = vdwg.mxu0
    %1379 = vmatpush.msra.mxu0 0.0
    %1380 = vmatpush.msra.mxu0 0.0
    %1381 = vmatpush.msra.mxu0 0.0
    %1382 = vmatpush.msra.mxu0 0.0
    %1383 = vmatpush.msra.mxu0 0.0
    %1384 = vmatpush.msra.mxu0 0.0
    %1385 = vmatpush.msra.mxu0 0.0
    %1386 = vmatpush.msra.mxu0 0.0
    %1387 = vmatpush.msra.mxu0 0.0
    %1388 = vmatpush.msra.mxu0 0.0
    %1389 = vmatpush.msra.mxu0 0.0
    %1390 = vmatpush.msra.mxu0 0.0
    %1391 = vmatpush.msra.mxu0 0.0
    %1392 = vmatpush.msra.mxu0 0.0
    %1393 = vmatpush.msra.mxu0 %v1346
    %1394 = vmatpush.msra.mxu0 %v1344
    %1395 = vmatmul.f32.gmra.mxu0 %v1351
    %v1396 = vpop.f32.mrf.mxu0
    %v1397 = vadd.f32 0.0, %v1396
    %1398 = vmatmul.f32.gmra.mxu0 %v1354
    %v1399 = vpop.f32.mrf.mxu0
    %v1400 = vadd.f32 0.0, %v1399
    %1401 = vdwg.mxu0
    %v1402 = vadd.f32 %v1266, %v1374
    %v1403 = vadd.f32 %v1267, %v1397
    %v1404 = vadd.f32 %v1268, %v1377
    %v1405 = vadd.f32 %v1269, %v1400
    %s1406 = scalar_lea.vmem %s0, 1600
    %v1407 = vld [vmem:[%s1406] sm:$0xff]
    %v1408 = vld [vmem:[%s1406 + $0x8] sm:$0xff]
    %v1409 = vld [vmem:[%s1406 + $0x10] sm:$0xff]
    %v1410 = vld [vmem:[%s1406 + $0x18] sm:$0xff]
    %v1411 = vld [vmem:[%s1406 + $0x20] sm:$0xff]
    %v1412 = vld [vmem:[%s1406 + $0x28] sm:$0xff]
    %v1413 = vld [vmem:[%s1406 + $0x30] sm:$0xff]
    %v1414 = vld [vmem:[%s1406 + $0x38] sm:$0xff]
    %v1415 = vld [vmem:[%s1406 + $0x40] sm:$0xff]
    %v1416 = vld [vmem:[%s1406 + $0x48] sm:$0xff]
    %v1417 = vld [vmem:[%s1406 + $0x50] sm:$0xff]
    %v1418 = vld [vmem:[%s1406 + $0x58] sm:$0xff]
    %v1419 = vld [vmem:[%s1406 + $0x60] sm:$0xff]
    %v1420 = vld [vmem:[%s1406 + $0x68] sm:$0xff]
    %v1421 = vld [vmem:[%s1406 + $0x70] sm:$0xff]
    %v1422 = vld [vmem:[%s1406 + $0x78] sm:$0xff]
    %v1423 = vld [vmem:[%s1406 + $0x80] sm:$0xff]
    %v1424 = vld [vmem:[%s1406 + $0x88] sm:$0xff]
    %v1425 = vld [vmem:[%s1406 + $0x90] sm:$0x7]
    %v1426 = vld [vmem:[%s1406 + $0x98] sm:$0x7]
    %v1428 = vsel %vm74, %v1425, 0
    %v1431 = vsel %vm74, %v1426, 0
    %1433 = vmatpush.msra.mxu0 0.0
    %1434 = vmatpush.msra.mxu0 0.0
    %1435 = vmatpush.msra.mxu0 0.0
    %1436 = vmatpush.msra.mxu0 0.0
    %1437 = vmatpush.msra.mxu0 0.0
    %1438 = vmatpush.msra.mxu0 0.0
    %1439 = vmatpush.msra.mxu0 %v1428
    %1440 = vmatpush.msra.mxu0 %v1423
    %1441 = vmatpush.msra.mxu0 %v1421
    %1442 = vmatpush.msra.mxu0 %v1419
    %1443 = vmatpush.msra.mxu0 %v1417
    %1444 = vmatpush.msra.mxu0 %v1415
    %1445 = vmatpush.msra.mxu0 %v1413
    %1446 = vmatpush.msra.mxu0 %v1411
    %1447 = vmatpush.msra.mxu0 %v1409
    %1448 = vmatpush.msra.mxu0 %v1407
    %1449 = vmatmul.f32.gmra.mxu0 %v69
    %v1450 = vpop.f32.mrf.mxu0
    %v1451 = vadd.f32 %v60, %v1450
    %1452 = vmatmul.f32.gmra.mxu0 %v72
    %v1453 = vpop.f32.mrf.mxu0
    %v1454 = vadd.f32 %v65, %v1453
    %1455 = vdwg.mxu0
    %1456 = vmatpush.msra.mxu0 0.0
    %1457 = vmatpush.msra.mxu0 0.0
    %1458 = vmatpush.msra.mxu0 0.0
    %1459 = vmatpush.msra.mxu0 0.0
    %1460 = vmatpush.msra.mxu0 0.0
    %1461 = vmatpush.msra.mxu0 0.0
    %1462 = vmatpush.msra.mxu0 %v1431
    %1463 = vmatpush.msra.mxu0 %v1424
    %1464 = vmatpush.msra.mxu0 %v1422
    %1465 = vmatpush.msra.mxu0 %v1420
    %1466 = vmatpush.msra.mxu0 %v1418
    %1467 = vmatpush.msra.mxu0 %v1416
    %1468 = vmatpush.msra.mxu0 %v1414
    %1469 = vmatpush.msra.mxu0 %v1412
    %1470 = vmatpush.msra.mxu0 %v1410
    %1471 = vmatpush.msra.mxu0 %v1408
    %1472 = vmatmul.f32.gmra.mxu0 %v69
    %v1473 = vpop.f32.mrf.mxu0
    %v1474 = vadd.f32 %v60, %v1473
    %1475 = vmatmul.f32.gmra.mxu0 %v72
    %v1476 = vpop.f32.mrf.mxu0
    %v1477 = vadd.f32 %v65, %v1476
    %1478 = vdwg.mxu0
    %v1479 = vmax.f32 %v1451, 0.0
    %v1480 = vmax.f32 %v1474, 0.0
    %v1481 = vmax.f32 %v1454, 0.0
    %v1482 = vmax.f32 %v1477, 0.0
    %s1483 = scalar_lea.vmem %s3, 160
    %v1484 = vld [vmem:[%s1483] sm:$0xff]
    %v1485 = vld [vmem:[%s1483 + $0x8] sm:$0xff]
    %v1487 = vsel %vm213, %v1484, 0
    %v1490 = vsel %vm213, %v1485, 0
    %1492 = vmatpush.msra.mxu0 0.0
    %1493 = vmatpush.msra.mxu0 0.0
    %1494 = vmatpush.msra.mxu0 0.0
    %1495 = vmatpush.msra.mxu0 0.0
    %1496 = vmatpush.msra.mxu0 0.0
    %1497 = vmatpush.msra.mxu0 0.0
    %1498 = vmatpush.msra.mxu0 0.0
    %1499 = vmatpush.msra.mxu0 0.0
    %1500 = vmatpush.msra.mxu0 0.0
    %1501 = vmatpush.msra.mxu0 0.0
    %1502 = vmatpush.msra.mxu0 0.0
    %1503 = vmatpush.msra.mxu0 0.0
    %1504 = vmatpush.msra.mxu0 0.0
    %1505 = vmatpush.msra.mxu0 0.0
    %1506 = vmatpush.msra.mxu0 %v1481
    %1507 = vmatpush.msra.mxu0 %v1479
    %1508 = vmatmul.f32.gmra.mxu0 %v1487
    %v1509 = vpop.f32.mrf.mxu0
    %v1510 = vadd.f32 0.0, %v1509
    %1511 = vmatmul.f32.gmra.mxu0 %v1490
    %v1512 = vpop.f32.mrf.mxu0
    %v1513 = vadd.f32 0.0, %v1512
    %1514 = vdwg.mxu0
    %1515 = vmatpush.msra.mxu0 0.0
    %1516 = vmatpush.msra.mxu0 0.0
    %1517 = vmatpush.msra.mxu0 0.0
    %1518 = vmatpush.msra.mxu0 0.0
    %1519 = vmatpush.msra.mxu0 0.0
    %1520 = vmatpush.msra.mxu0 0.0
    %1521 = vmatpush.msra.mxu0 0.0
    %1522 = vmatpush.msra.mxu0 0.0
    %1523 = vmatpush.msra.mxu0 0.0
    %1524 = vmatpush.msra.mxu0 0.0
    %1525 = vmatpush.msra.mxu0 0.0
    %1526 = vmatpush.msra.mxu0 0.0
    %1527 = vmatpush.msra.mxu0 0.0
    %1528 = vmatpush.msra.mxu0 0.0
    %1529 = vmatpush.msra.mxu0 %v1482
    %1530 = vmatpush.msra.mxu0 %v1480
    %1531 = vmatmul.f32.gmra.mxu0 %v1487
    %v1532 = vpop.f32.mrf.mxu0
    %v1533 = vadd.f32 0.0, %v1532
    %1534 = vmatmul.f32.gmra.mxu0 %v1490
    %v1535 = vpop.f32.mrf.mxu0
    %v1536 = vadd.f32 0.0, %v1535
    %1537 = vdwg.mxu0
    %v1538 = vadd.f32 %v1402, %v1510
    %v1539 = vadd.f32 %v1403, %v1533
    %v1540 = vadd.f32 %v1404, %v1513
    %v1541 = vadd.f32 %v1405, %v1536
    %s1542 = scalar_lea.vmem %s0, 1760
    %v1543 = vld [vmem:[%s1542] sm:$0xff]
    %v1544 = vld [vmem:[%s1542 + $0x8] sm:$0xff]
    %v1545 = vld [vmem:[%s1542 + $0x10] sm:$0xff]
    %v1546 = vld [vmem:[%s1542 + $0x18] sm:$0xff]
    %v1547 = vld [vmem:[%s1542 + $0x20] sm:$0xff]
    %v1548 = vld [vmem:[%s1542 + $0x28] sm:$0xff]
    %v1549 = vld [vmem:[%s1542 + $0x30] sm:$0xff]
    %v1550 = vld [vmem:[%s1542 + $0x38] sm:$0xff]
    %v1551 = vld [vmem:[%s1542 + $0x40] sm:$0xff]
    %v1552 = vld [vmem:[%s1542 + $0x48] sm:$0xff]
    %v1553 = vld [vmem:[%s1542 + $0x50] sm:$0xff]
    %v1554 = vld [vmem:[%s1542 + $0x58] sm:$0xff]
    %v1555 = vld [vmem:[%s1542 + $0x60] sm:$0xff]
    %v1556 = vld [vmem:[%s1542 + $0x68] sm:$0xff]
    %v1557 = vld [vmem:[%s1542 + $0x70] sm:$0xff]
    %v1558 = vld [vmem:[%s1542 + $0x78] sm:$0xff]
    %v1559 = vld [vmem:[%s1542 + $0x80] sm:$0xff]
    %v1560 = vld [vmem:[%s1542 + $0x88] sm:$0xff]
    %v1561 = vld [vmem:[%s1542 + $0x90] sm:$0x7]
    %v1562 = vld [vmem:[%s1542 + $0x98] sm:$0x7]
    %v1564 = vsel %vm74, %v1561, 0
    %v1567 = vsel %vm74, %v1562, 0
    %1569 = vmatpush.msra.mxu0 0.0
    %1570 = vmatpush.msra.mxu0 0.0
    %1571 = vmatpush.msra.mxu0 0.0
    %1572 = vmatpush.msra.mxu0 0.0
    %1573 = vmatpush.msra.mxu0 0.0
    %1574 = vmatpush.msra.mxu0 0.0
    %1575 = vmatpush.msra.mxu0 %v1564
    %1576 = vmatpush.msra.mxu0 %v1559
    %1577 = vmatpush.msra.mxu0 %v1557
    %1578 = vmatpush.msra.mxu0 %v1555
    %1579 = vmatpush.msra.mxu0 %v1553
    %1580 = vmatpush.msra.mxu0 %v1551
    %1581 = vmatpush.msra.mxu0 %v1549
    %1582 = vmatpush.msra.mxu0 %v1547
    %1583 = vmatpush.msra.mxu0 %v1545
    %1584 = vmatpush.msra.mxu0 %v1543
    %1585 = vmatmul.f32.gmra.mxu0 %v69
    %v1586 = vpop.f32.mrf.mxu0
    %v1587 = vadd.f32 %v60, %v1586
    %1588 = vmatmul.f32.gmra.mxu0 %v72
    %v1589 = vpop.f32.mrf.mxu0
    %v1590 = vadd.f32 %v65, %v1589
    %1591 = vdwg.mxu0
    %1592 = vmatpush.msra.mxu0 0.0
    %1593 = vmatpush.msra.mxu0 0.0
    %1594 = vmatpush.msra.mxu0 0.0
    %1595 = vmatpush.msra.mxu0 0.0
    %1596 = vmatpush.msra.mxu0 0.0
    %1597 = vmatpush.msra.mxu0 0.0
    %1598 = vmatpush.msra.mxu0 %v1567
    %1599 = vmatpush.msra.mxu0 %v1560
    %1600 = vmatpush.msra.mxu0 %v1558
    %1601 = vmatpush.msra.mxu0 %v1556
    %1602 = vmatpush.msra.mxu0 %v1554
    %1603 = vmatpush.msra.mxu0 %v1552
    %1604 = vmatpush.msra.mxu0 %v1550
    %1605 = vmatpush.msra.mxu0 %v1548
    %1606 = vmatpush.msra.mxu0 %v1546
    %1607 = vmatpush.msra.mxu0 %v1544
    %1608 = vmatmul.f32.gmra.mxu0 %v69
    %v1609 = vpop.f32.mrf.mxu0
    %v1610 = vadd.f32 %v60, %v1609
    %1611 = vmatmul.f32.gmra.mxu0 %v72
    %v1612 = vpop.f32.mrf.mxu0
    %v1613 = vadd.f32 %v65, %v1612
    %1614 = vdwg.mxu0
    %v1615 = vmax.f32 %v1587, 0.0
    %v1616 = vmax.f32 %v1610, 0.0
    %v1617 = vmax.f32 %v1590, 0.0
    %v1618 = vmax.f32 %v1613, 0.0
    %s1619 = scalar_lea.vmem %s3, 176
    %v1620 = vld [vmem:[%s1619] sm:$0xff]
    %v1621 = vld [vmem:[%s1619 + $0x8] sm:$0xff]
    %v1623 = vsel %vm213, %v1620, 0
    %v1626 = vsel %vm213, %v1621, 0
    %1628 = vmatpush.msra.mxu0 0.0
    %1629 = vmatpush.msra.mxu0 0.0
    %1630 = vmatpush.msra.mxu0 0.0
    %1631 = vmatpush.msra.mxu0 0.0
    %1632 = vmatpush.msra.mxu0 0.0
    %1633 = vmatpush.msra.mxu0 0.0
    %1634 = vmatpush.msra.mxu0 0.0
    %1635 = vmatpush.msra.mxu0 0.0
    %1636 = vmatpush.msra.mxu0 0.0
    %1637 = vmatpush.msra.mxu0 0.0
    %1638 = vmatpush.msra.mxu0 0.0
    %1639 = vmatpush.msra.mxu0 0.0
    %1640 = vmatpush.msra.mxu0 0.0
    %1641 = vmatpush.msra.mxu0 0.0
    %1642 = vmatpush.msra.mxu0 %v1617
    %1643 = vmatpush.msra.mxu0 %v1615
    %1644 = vmatmul.f32.gmra.mxu0 %v1623
    %v1645 = vpop.f32.mrf.mxu0
    %v1646 = vadd.f32 0.0, %v1645
    %1647 = vmatmul.f32.gmra.mxu0 %v1626
    %v1648 = vpop.f32.mrf.mxu0
    %v1649 = vadd.f32 0.0, %v1648
    %1650 = vdwg.mxu0
    %1651 = vmatpush.msra.mxu0 0.0
    %1652 = vmatpush.msra.mxu0 0.0
    %1653 = vmatpush.msra.mxu0 0.0
    %1654 = vmatpush.msra.mxu0 0.0
    %1655 = vmatpush.msra.mxu0 0.0
    %1656 = vmatpush.msra.mxu0 0.0
    %1657 = vmatpush.msra.mxu0 0.0
    %1658 = vmatpush.msra.mxu0 0.0
    %1659 = vmatpush.msra.mxu0 0.0
    %1660 = vmatpush.msra.mxu0 0.0
    %1661 = vmatpush.msra.mxu0 0.0
    %1662 = vmatpush.msra.mxu0 0.0
    %1663 = vmatpush.msra.mxu0 0.0
    %1664 = vmatpush.msra.mxu0 0.0
    %1665 = vmatpush.msra.mxu0 %v1618
    %1666 = vmatpush.msra.mxu0 %v1616
    %1667 = vmatmul.f32.gmra.mxu0 %v1623
    %v1668 = vpop.f32.mrf.mxu0
    %v1669 = vadd.f32 0.0, %v1668
    %1670 = vmatmul.f32.gmra.mxu0 %v1626
    %v1671 = vpop.f32.mrf.mxu0
    %v1672 = vadd.f32 0.0, %v1671
    %1673 = vdwg.mxu0
    %v1674 = vadd.f32 %v1538, %v1646
    %v1675 = vadd.f32 %v1539, %v1669
    %v1676 = vadd.f32 %v1540, %v1649
    %v1677 = vadd.f32 %v1541, %v1672
    %s1678 = scalar_lea.vmem %s0, 1920
    %v1679 = vld [vmem:[%s1678] sm:$0xff]
    %v1680 = vld [vmem:[%s1678 + $0x8] sm:$0xff]
    %v1681 = vld [vmem:[%s1678 + $0x10] sm:$0xff]
    %v1682 = vld [vmem:[%s1678 + $0x18] sm:$0xff]
    %v1683 = vld [vmem:[%s1678 + $0x20] sm:$0xff]
    %v1684 = vld [vmem:[%s1678 + $0x28] sm:$0xff]
    %v1685 = vld [vmem:[%s1678 + $0x30] sm:$0xff]
    %v1686 = vld [vmem:[%s1678 + $0x38] sm:$0xff]
    %v1687 = vld [vmem:[%s1678 + $0x40] sm:$0xff]
    %v1688 = vld [vmem:[%s1678 + $0x48] sm:$0xff]
    %v1689 = vld [vmem:[%s1678 + $0x50] sm:$0xff]
    %v1690 = vld [vmem:[%s1678 + $0x58] sm:$0xff]
    %v1691 = vld [vmem:[%s1678 + $0x60] sm:$0xff]
    %v1692 = vld [vmem:[%s1678 + $0x68] sm:$0xff]
    %v1693 = vld [vmem:[%s1678 + $0x70] sm:$0xff]
    %v1694 = vld [vmem:[%s1678 + $0x78] sm:$0xff]
    %v1695 = vld [vmem:[%s1678 + $0x80] sm:$0xff]
    %v1696 = vld [vmem:[%s1678 + $0x88] sm:$0xff]
    %v1697 = vld [vmem:[%s1678 + $0x90] sm:$0x7]
    %v1698 = vld [vmem:[%s1678 + $0x98] sm:$0x7]
    %v1700 = vsel %vm74, %v1697, 0
    %v1703 = vsel %vm74, %v1698, 0
    %1705 = vmatpush.msra.mxu0 0.0
    %1706 = vmatpush.msra.mxu0 0.0
    %1707 = vmatpush.msra.mxu0 0.0
    %1708 = vmatpush.msra.mxu0 0.0
    %1709 = vmatpush.msra.mxu0 0.0
    %1710 = vmatpush.msra.mxu0 0.0
    %1711 = vmatpush.msra.mxu0 %v1700
    %1712 = vmatpush.msra.mxu0 %v1695
    %1713 = vmatpush.msra.mxu0 %v1693
    %1714 = vmatpush.msra.mxu0 %v1691
    %1715 = vmatpush.msra.mxu0 %v1689
    %1716 = vmatpush.msra.mxu0 %v1687
    %1717 = vmatpush.msra.mxu0 %v1685
    %1718 = vmatpush.msra.mxu0 %v1683
    %1719 = vmatpush.msra.mxu0 %v1681
    %1720 = vmatpush.msra.mxu0 %v1679
    %1721 = vmatmul.f32.gmra.mxu0 %v69
    %v1722 = vpop.f32.mrf.mxu0
    %v1723 = vadd.f32 %v60, %v1722
    %1724 = vmatmul.f32.gmra.mxu0 %v72
    %v1725 = vpop.f32.mrf.mxu0
    %v1726 = vadd.f32 %v65, %v1725
    %1727 = vdwg.mxu0
    %1728 = vmatpush.msra.mxu0 0.0
    %1729 = vmatpush.msra.mxu0 0.0
    %1730 = vmatpush.msra.mxu0 0.0
    %1731 = vmatpush.msra.mxu0 0.0
    %1732 = vmatpush.msra.mxu0 0.0
    %1733 = vmatpush.msra.mxu0 0.0
    %1734 = vmatpush.msra.mxu0 %v1703
    %1735 = vmatpush.msra.mxu0 %v1696
    %1736 = vmatpush.msra.mxu0 %v1694
    %1737 = vmatpush.msra.mxu0 %v1692
    %1738 = vmatpush.msra.mxu0 %v1690
    %1739 = vmatpush.msra.mxu0 %v1688
    %1740 = vmatpush.msra.mxu0 %v1686
    %1741 = vmatpush.msra.mxu0 %v1684
    %1742 = vmatpush.msra.mxu0 %v1682
    %1743 = vmatpush.msra.mxu0 %v1680
    %1744 = vmatmul.f32.gmra.mxu0 %v69
    %v1745 = vpop.f32.mrf.mxu0
    %v1746 = vadd.f32 %v60, %v1745
    %1747 = vmatmul.f32.gmra.mxu0 %v72
    %v1748 = vpop.f32.mrf.mxu0
    %v1749 = vadd.f32 %v65, %v1748
    %1750 = vdwg.mxu0
    %v1751 = vmax.f32 %v1723, 0.0
    %v1752 = vmax.f32 %v1746, 0.0
    %v1753 = vmax.f32 %v1726, 0.0
    %v1754 = vmax.f32 %v1749, 0.0
    %s1755 = scalar_lea.vmem %s3, 192
    %v1756 = vld [vmem:[%s1755] sm:$0xff]
    %v1757 = vld [vmem:[%s1755 + $0x8] sm:$0xff]
    %v1759 = vsel %vm213, %v1756, 0
    %v1762 = vsel %vm213, %v1757, 0
    %1764 = vmatpush.msra.mxu0 0.0
    %1765 = vmatpush.msra.mxu0 0.0
    %1766 = vmatpush.msra.mxu0 0.0
    %1767 = vmatpush.msra.mxu0 0.0
    %1768 = vmatpush.msra.mxu0 0.0
    %1769 = vmatpush.msra.mxu0 0.0
    %1770 = vmatpush.msra.mxu0 0.0
    %1771 = vmatpush.msra.mxu0 0.0
    %1772 = vmatpush.msra.mxu0 0.0
    %1773 = vmatpush.msra.mxu0 0.0
    %1774 = vmatpush.msra.mxu0 0.0
    %1775 = vmatpush.msra.mxu0 0.0
    %1776 = vmatpush.msra.mxu0 0.0
    %1777 = vmatpush.msra.mxu0 0.0
    %1778 = vmatpush.msra.mxu0 %v1753
    %1779 = vmatpush.msra.mxu0 %v1751
    %1780 = vmatmul.f32.gmra.mxu0 %v1759
    %v1781 = vpop.f32.mrf.mxu0
    %v1782 = vadd.f32 0.0, %v1781
    %1783 = vmatmul.f32.gmra.mxu0 %v1762
    %v1784 = vpop.f32.mrf.mxu0
    %v1785 = vadd.f32 0.0, %v1784
    %1786 = vdwg.mxu0
    %1787 = vmatpush.msra.mxu0 0.0
    %1788 = vmatpush.msra.mxu0 0.0
    %1789 = vmatpush.msra.mxu0 0.0
    %1790 = vmatpush.msra.mxu0 0.0
    %1791 = vmatpush.msra.mxu0 0.0
    %1792 = vmatpush.msra.mxu0 0.0
    %1793 = vmatpush.msra.mxu0 0.0
    %1794 = vmatpush.msra.mxu0 0.0
    %1795 = vmatpush.msra.mxu0 0.0
    %1796 = vmatpush.msra.mxu0 0.0
    %1797 = vmatpush.msra.mxu0 0.0
    %1798 = vmatpush.msra.mxu0 0.0
    %1799 = vmatpush.msra.mxu0 0.0
    %1800 = vmatpush.msra.mxu0 0.0
    %1801 = vmatpush.msra.mxu0 %v1754
    %1802 = vmatpush.msra.mxu0 %v1752
    %1803 = vmatmul.f32.gmra.mxu0 %v1759
    %v1804 = vpop.f32.mrf.mxu0
    %v1805 = vadd.f32 0.0, %v1804
    %1806 = vmatmul.f32.gmra.mxu0 %v1762
    %v1807 = vpop.f32.mrf.mxu0
    %v1808 = vadd.f32 0.0, %v1807
    %1809 = vdwg.mxu0
    %v1810 = vadd.f32 %v1674, %v1782
    %v1811 = vadd.f32 %v1675, %v1805
    %v1812 = vadd.f32 %v1676, %v1785
    %v1813 = vadd.f32 %v1677, %v1808
    %s1814 = scalar_lea.vmem %s0, 2080
    %v1815 = vld [vmem:[%s1814] sm:$0xff]
    %v1816 = vld [vmem:[%s1814 + $0x8] sm:$0xff]
    %v1817 = vld [vmem:[%s1814 + $0x10] sm:$0xff]
    %v1818 = vld [vmem:[%s1814 + $0x18] sm:$0xff]
    %v1819 = vld [vmem:[%s1814 + $0x20] sm:$0xff]
    %v1820 = vld [vmem:[%s1814 + $0x28] sm:$0xff]
    %v1821 = vld [vmem:[%s1814 + $0x30] sm:$0xff]
    %v1822 = vld [vmem:[%s1814 + $0x38] sm:$0xff]
    %v1823 = vld [vmem:[%s1814 + $0x40] sm:$0xff]
    %v1824 = vld [vmem:[%s1814 + $0x48] sm:$0xff]
    %v1825 = vld [vmem:[%s1814 + $0x50] sm:$0xff]
    %v1826 = vld [vmem:[%s1814 + $0x58] sm:$0xff]
    %v1827 = vld [vmem:[%s1814 + $0x60] sm:$0xff]
    %v1828 = vld [vmem:[%s1814 + $0x68] sm:$0xff]
    %v1829 = vld [vmem:[%s1814 + $0x70] sm:$0xff]
    %v1830 = vld [vmem:[%s1814 + $0x78] sm:$0xff]
    %v1831 = vld [vmem:[%s1814 + $0x80] sm:$0xff]
    %v1832 = vld [vmem:[%s1814 + $0x88] sm:$0xff]
    %v1833 = vld [vmem:[%s1814 + $0x90] sm:$0x7]
    %v1834 = vld [vmem:[%s1814 + $0x98] sm:$0x7]
    %v1836 = vsel %vm74, %v1833, 0
    %v1839 = vsel %vm74, %v1834, 0
    %1841 = vmatpush.msra.mxu0 0.0
    %1842 = vmatpush.msra.mxu0 0.0
    %1843 = vmatpush.msra.mxu0 0.0
    %1844 = vmatpush.msra.mxu0 0.0
    %1845 = vmatpush.msra.mxu0 0.0
    %1846 = vmatpush.msra.mxu0 0.0
    %1847 = vmatpush.msra.mxu0 %v1836
    %1848 = vmatpush.msra.mxu0 %v1831
    %1849 = vmatpush.msra.mxu0 %v1829
    %1850 = vmatpush.msra.mxu0 %v1827
    %1851 = vmatpush.msra.mxu0 %v1825
    %1852 = vmatpush.msra.mxu0 %v1823
    %1853 = vmatpush.msra.mxu0 %v1821
    %1854 = vmatpush.msra.mxu0 %v1819
    %1855 = vmatpush.msra.mxu0 %v1817
    %1856 = vmatpush.msra.mxu0 %v1815
    %1857 = vmatmul.f32.gmra.mxu0 %v69
    %v1858 = vpop.f32.mrf.mxu0
    %v1859 = vadd.f32 %v60, %v1858
    %1860 = vmatmul.f32.gmra.mxu0 %v72
    %v1861 = vpop.f32.mrf.mxu0
    %v1862 = vadd.f32 %v65, %v1861
    %1863 = vdwg.mxu0
    %1864 = vmatpush.msra.mxu0 0.0
    %1865 = vmatpush.msra.mxu0 0.0
    %1866 = vmatpush.msra.mxu0 0.0
    %1867 = vmatpush.msra.mxu0 0.0
    %1868 = vmatpush.msra.mxu0 0.0
    %1869 = vmatpush.msra.mxu0 0.0
    %1870 = vmatpush.msra.mxu0 %v1839
    %1871 = vmatpush.msra.mxu0 %v1832
    %1872 = vmatpush.msra.mxu0 %v1830
    %1873 = vmatpush.msra.mxu0 %v1828
    %1874 = vmatpush.msra.mxu0 %v1826
    %1875 = vmatpush.msra.mxu0 %v1824
    %1876 = vmatpush.msra.mxu0 %v1822
    %1877 = vmatpush.msra.mxu0 %v1820
    %1878 = vmatpush.msra.mxu0 %v1818
    %1879 = vmatpush.msra.mxu0 %v1816
    %1880 = vmatmul.f32.gmra.mxu0 %v69
    %v1881 = vpop.f32.mrf.mxu0
    %v1882 = vadd.f32 %v60, %v1881
    %1883 = vmatmul.f32.gmra.mxu0 %v72
    %v1884 = vpop.f32.mrf.mxu0
    %v1885 = vadd.f32 %v65, %v1884
    %1886 = vdwg.mxu0
    %v1887 = vmax.f32 %v1859, 0.0
    %v1888 = vmax.f32 %v1882, 0.0
    %v1889 = vmax.f32 %v1862, 0.0
    %v1890 = vmax.f32 %v1885, 0.0
    %s1891 = scalar_lea.vmem %s3, 208
    %v1892 = vld [vmem:[%s1891] sm:$0xff]
    %v1893 = vld [vmem:[%s1891 + $0x8] sm:$0xff]
    %v1895 = vsel %vm213, %v1892, 0
    %v1898 = vsel %vm213, %v1893, 0
    %1900 = vmatpush.msra.mxu0 0.0
    %1901 = vmatpush.msra.mxu0 0.0
    %1902 = vmatpush.msra.mxu0 0.0
    %1903 = vmatpush.msra.mxu0 0.0
    %1904 = vmatpush.msra.mxu0 0.0
    %1905 = vmatpush.msra.mxu0 0.0
    %1906 = vmatpush.msra.mxu0 0.0
    %1907 = vmatpush.msra.mxu0 0.0
    %1908 = vmatpush.msra.mxu0 0.0
    %1909 = vmatpush.msra.mxu0 0.0
    %1910 = vmatpush.msra.mxu0 0.0
    %1911 = vmatpush.msra.mxu0 0.0
    %1912 = vmatpush.msra.mxu0 0.0
    %1913 = vmatpush.msra.mxu0 0.0
    %1914 = vmatpush.msra.mxu0 %v1889
    %1915 = vmatpush.msra.mxu0 %v1887
    %1916 = vmatmul.f32.gmra.mxu0 %v1895
    %v1917 = vpop.f32.mrf.mxu0
    %v1918 = vadd.f32 0.0, %v1917
    %1919 = vmatmul.f32.gmra.mxu0 %v1898
    %v1920 = vpop.f32.mrf.mxu0
    %v1921 = vadd.f32 0.0, %v1920
    %1922 = vdwg.mxu0
    %1923 = vmatpush.msra.mxu0 0.0
    %1924 = vmatpush.msra.mxu0 0.0
    %1925 = vmatpush.msra.mxu0 0.0
    %1926 = vmatpush.msra.mxu0 0.0
    %1927 = vmatpush.msra.mxu0 0.0
    %1928 = vmatpush.msra.mxu0 0.0
    %1929 = vmatpush.msra.mxu0 0.0
    %1930 = vmatpush.msra.mxu0 0.0
    %1931 = vmatpush.msra.mxu0 0.0
    %1932 = vmatpush.msra.mxu0 0.0
    %1933 = vmatpush.msra.mxu0 0.0
    %1934 = vmatpush.msra.mxu0 0.0
    %1935 = vmatpush.msra.mxu0 0.0
    %1936 = vmatpush.msra.mxu0 0.0
    %1937 = vmatpush.msra.mxu0 %v1890
    %1938 = vmatpush.msra.mxu0 %v1888
    %1939 = vmatmul.f32.gmra.mxu0 %v1895
    %v1940 = vpop.f32.mrf.mxu0
    %v1941 = vadd.f32 0.0, %v1940
    %1942 = vmatmul.f32.gmra.mxu0 %v1898
    %v1943 = vpop.f32.mrf.mxu0
    %v1944 = vadd.f32 0.0, %v1943
    %1945 = vdwg.mxu0
    %v1946 = vadd.f32 %v1810, %v1918
    %v1947 = vadd.f32 %v1811, %v1941
    %v1948 = vadd.f32 %v1812, %v1921
    %v1949 = vadd.f32 %v1813, %v1944
    %s1950 = scalar_lea.vmem %s0, 2240
    %v1951 = vld [vmem:[%s1950] sm:$0xff]
    %v1952 = vld [vmem:[%s1950 + $0x8] sm:$0xff]
    %v1953 = vld [vmem:[%s1950 + $0x10] sm:$0xff]
    %v1954 = vld [vmem:[%s1950 + $0x18] sm:$0xff]
    %v1955 = vld [vmem:[%s1950 + $0x20] sm:$0xff]
    %v1956 = vld [vmem:[%s1950 + $0x28] sm:$0xff]
    %v1957 = vld [vmem:[%s1950 + $0x30] sm:$0xff]
    %v1958 = vld [vmem:[%s1950 + $0x38] sm:$0xff]
    %v1959 = vld [vmem:[%s1950 + $0x40] sm:$0xff]
    %v1960 = vld [vmem:[%s1950 + $0x48] sm:$0xff]
    %v1961 = vld [vmem:[%s1950 + $0x50] sm:$0xff]
    %v1962 = vld [vmem:[%s1950 + $0x58] sm:$0xff]
    %v1963 = vld [vmem:[%s1950 + $0x60] sm:$0xff]
    %v1964 = vld [vmem:[%s1950 + $0x68] sm:$0xff]
    %v1965 = vld [vmem:[%s1950 + $0x70] sm:$0xff]
    %v1966 = vld [vmem:[%s1950 + $0x78] sm:$0xff]
    %v1967 = vld [vmem:[%s1950 + $0x80] sm:$0xff]
    %v1968 = vld [vmem:[%s1950 + $0x88] sm:$0xff]
    %v1969 = vld [vmem:[%s1950 + $0x90] sm:$0x7]
    %v1970 = vld [vmem:[%s1950 + $0x98] sm:$0x7]
    %v1972 = vsel %vm74, %v1969, 0
    %v1975 = vsel %vm74, %v1970, 0
    %1977 = vmatpush.msra.mxu0 0.0
    %1978 = vmatpush.msra.mxu0 0.0
    %1979 = vmatpush.msra.mxu0 0.0
    %1980 = vmatpush.msra.mxu0 0.0
    %1981 = vmatpush.msra.mxu0 0.0
    %1982 = vmatpush.msra.mxu0 0.0
    %1983 = vmatpush.msra.mxu0 %v1972
    %1984 = vmatpush.msra.mxu0 %v1967
    %1985 = vmatpush.msra.mxu0 %v1965
    %1986 = vmatpush.msra.mxu0 %v1963
    %1987 = vmatpush.msra.mxu0 %v1961
    %1988 = vmatpush.msra.mxu0 %v1959
    %1989 = vmatpush.msra.mxu0 %v1957
    %1990 = vmatpush.msra.mxu0 %v1955
    %1991 = vmatpush.msra.mxu0 %v1953
    %1992 = vmatpush.msra.mxu0 %v1951
    %1993 = vmatmul.f32.gmra.mxu0 %v69
    %v1994 = vpop.f32.mrf.mxu0
    %v1995 = vadd.f32 %v60, %v1994
    %1996 = vmatmul.f32.gmra.mxu0 %v72
    %v1997 = vpop.f32.mrf.mxu0
    %v1998 = vadd.f32 %v65, %v1997
    %1999 = vdwg.mxu0
    %2000 = vmatpush.msra.mxu0 0.0
    %2001 = vmatpush.msra.mxu0 0.0
    %2002 = vmatpush.msra.mxu0 0.0
    %2003 = vmatpush.msra.mxu0 0.0
    %2004 = vmatpush.msra.mxu0 0.0
    %2005 = vmatpush.msra.mxu0 0.0
    %2006 = vmatpush.msra.mxu0 %v1975
    %2007 = vmatpush.msra.mxu0 %v1968
    %2008 = vmatpush.msra.mxu0 %v1966
    %2009 = vmatpush.msra.mxu0 %v1964
    %2010 = vmatpush.msra.mxu0 %v1962
    %2011 = vmatpush.msra.mxu0 %v1960
    %2012 = vmatpush.msra.mxu0 %v1958
    %2013 = vmatpush.msra.mxu0 %v1956
    %2014 = vmatpush.msra.mxu0 %v1954
    %2015 = vmatpush.msra.mxu0 %v1952
    %2016 = vmatmul.f32.gmra.mxu0 %v69
    %v2017 = vpop.f32.mrf.mxu0
    %v2018 = vadd.f32 %v60, %v2017
    %2019 = vmatmul.f32.gmra.mxu0 %v72
    %v2020 = vpop.f32.mrf.mxu0
    %v2021 = vadd.f32 %v65, %v2020
    %2022 = vdwg.mxu0
    %v2023 = vmax.f32 %v1995, 0.0
    %v2024 = vmax.f32 %v2018, 0.0
    %v2025 = vmax.f32 %v1998, 0.0
    %v2026 = vmax.f32 %v2021, 0.0
    %s2027 = scalar_lea.vmem %s3, 224
    %v2028 = vld [vmem:[%s2027] sm:$0xff]
    %v2029 = vld [vmem:[%s2027 + $0x8] sm:$0xff]
    %v2031 = vsel %vm213, %v2028, 0
    %v2034 = vsel %vm213, %v2029, 0
    %2036 = vmatpush.msra.mxu0 0.0
    %2037 = vmatpush.msra.mxu0 0.0
    %2038 = vmatpush.msra.mxu0 0.0
    %2039 = vmatpush.msra.mxu0 0.0
    %2040 = vmatpush.msra.mxu0 0.0
    %2041 = vmatpush.msra.mxu0 0.0
    %2042 = vmatpush.msra.mxu0 0.0
    %2043 = vmatpush.msra.mxu0 0.0
    %2044 = vmatpush.msra.mxu0 0.0
    %2045 = vmatpush.msra.mxu0 0.0
    %2046 = vmatpush.msra.mxu0 0.0
    %2047 = vmatpush.msra.mxu0 0.0
    %2048 = vmatpush.msra.mxu0 0.0
    %2049 = vmatpush.msra.mxu0 0.0
    %2050 = vmatpush.msra.mxu0 %v2025
    %2051 = vmatpush.msra.mxu0 %v2023
    %2052 = vmatmul.f32.gmra.mxu0 %v2031
    %v2053 = vpop.f32.mrf.mxu0
    %v2054 = vadd.f32 0.0, %v2053
    %2055 = vmatmul.f32.gmra.mxu0 %v2034
    %v2056 = vpop.f32.mrf.mxu0
    %v2057 = vadd.f32 0.0, %v2056
    %2058 = vdwg.mxu0
    %2059 = vmatpush.msra.mxu0 0.0
    %2060 = vmatpush.msra.mxu0 0.0
    %2061 = vmatpush.msra.mxu0 0.0
    %2062 = vmatpush.msra.mxu0 0.0
    %2063 = vmatpush.msra.mxu0 0.0
    %2064 = vmatpush.msra.mxu0 0.0
    %2065 = vmatpush.msra.mxu0 0.0
    %2066 = vmatpush.msra.mxu0 0.0
    %2067 = vmatpush.msra.mxu0 0.0
    %2068 = vmatpush.msra.mxu0 0.0
    %2069 = vmatpush.msra.mxu0 0.0
    %2070 = vmatpush.msra.mxu0 0.0
    %2071 = vmatpush.msra.mxu0 0.0
    %2072 = vmatpush.msra.mxu0 0.0
    %2073 = vmatpush.msra.mxu0 %v2026
    %2074 = vmatpush.msra.mxu0 %v2024
    %2075 = vmatmul.f32.gmra.mxu0 %v2031
    %v2076 = vpop.f32.mrf.mxu0
    %v2077 = vadd.f32 0.0, %v2076
    %2078 = vmatmul.f32.gmra.mxu0 %v2034
    %v2079 = vpop.f32.mrf.mxu0
    %v2080 = vadd.f32 0.0, %v2079
    %2081 = vdwg.mxu0
    %v2082 = vadd.f32 %v1946, %v2054
    %v2083 = vadd.f32 %v1947, %v2077
    %v2084 = vadd.f32 %v1948, %v2057
    %v2085 = vadd.f32 %v1949, %v2080
    %s2086 = scalar_lea.vmem %s0, 2400
    %v2087 = vld [vmem:[%s2086] sm:$0xff]
    %v2088 = vld [vmem:[%s2086 + $0x8] sm:$0xff]
    %v2089 = vld [vmem:[%s2086 + $0x10] sm:$0xff]
    %v2090 = vld [vmem:[%s2086 + $0x18] sm:$0xff]
    %v2091 = vld [vmem:[%s2086 + $0x20] sm:$0xff]
    %v2092 = vld [vmem:[%s2086 + $0x28] sm:$0xff]
    %v2093 = vld [vmem:[%s2086 + $0x30] sm:$0xff]
    %v2094 = vld [vmem:[%s2086 + $0x38] sm:$0xff]
    %v2095 = vld [vmem:[%s2086 + $0x40] sm:$0xff]
    %v2096 = vld [vmem:[%s2086 + $0x48] sm:$0xff]
    %v2097 = vld [vmem:[%s2086 + $0x50] sm:$0xff]
    %v2098 = vld [vmem:[%s2086 + $0x58] sm:$0xff]
    %v2099 = vld [vmem:[%s2086 + $0x60] sm:$0xff]
    %v2100 = vld [vmem:[%s2086 + $0x68] sm:$0xff]
    %v2101 = vld [vmem:[%s2086 + $0x70] sm:$0xff]
    %v2102 = vld [vmem:[%s2086 + $0x78] sm:$0xff]
    %v2103 = vld [vmem:[%s2086 + $0x80] sm:$0xff]
    %v2104 = vld [vmem:[%s2086 + $0x88] sm:$0xff]
    %v2105 = vld [vmem:[%s2086 + $0x90] sm:$0x7]
    %v2106 = vld [vmem:[%s2086 + $0x98] sm:$0x7]
    %v2108 = vsel %vm74, %v2105, 0
    %v2111 = vsel %vm74, %v2106, 0
    %2113 = vmatpush.msra.mxu0 0.0
    %2114 = vmatpush.msra.mxu0 0.0
    %2115 = vmatpush.msra.mxu0 0.0
    %2116 = vmatpush.msra.mxu0 0.0
    %2117 = vmatpush.msra.mxu0 0.0
    %2118 = vmatpush.msra.mxu0 0.0
    %2119 = vmatpush.msra.mxu0 %v2108
    %2120 = vmatpush.msra.mxu0 %v2103
    %2121 = vmatpush.msra.mxu0 %v2101
    %2122 = vmatpush.msra.mxu0 %v2099
    %2123 = vmatpush.msra.mxu0 %v2097
    %2124 = vmatpush.msra.mxu0 %v2095
    %2125 = vmatpush.msra.mxu0 %v2093
    %2126 = vmatpush.msra.mxu0 %v2091
    %2127 = vmatpush.msra.mxu0 %v2089
    %2128 = vmatpush.msra.mxu0 %v2087
    %2129 = vmatmul.f32.gmra.mxu0 %v69
    %v2130 = vpop.f32.mrf.mxu0
    %v2131 = vadd.f32 %v60, %v2130
    %2132 = vmatmul.f32.gmra.mxu0 %v72
    %v2133 = vpop.f32.mrf.mxu0
    %v2134 = vadd.f32 %v65, %v2133
    %2135 = vdwg.mxu0
    %2136 = vmatpush.msra.mxu0 0.0
    %2137 = vmatpush.msra.mxu0 0.0
    %2138 = vmatpush.msra.mxu0 0.0
    %2139 = vmatpush.msra.mxu0 0.0
    %2140 = vmatpush.msra.mxu0 0.0
    %2141 = vmatpush.msra.mxu0 0.0
    %2142 = vmatpush.msra.mxu0 %v2111
    %2143 = vmatpush.msra.mxu0 %v2104
    %2144 = vmatpush.msra.mxu0 %v2102
    %2145 = vmatpush.msra.mxu0 %v2100
    %2146 = vmatpush.msra.mxu0 %v2098
    %2147 = vmatpush.msra.mxu0 %v2096
    %2148 = vmatpush.msra.mxu0 %v2094
    %2149 = vmatpush.msra.mxu0 %v2092
    %2150 = vmatpush.msra.mxu0 %v2090
    %2151 = vmatpush.msra.mxu0 %v2088
    %2152 = vmatmul.f32.gmra.mxu0 %v69
    %v2153 = vpop.f32.mrf.mxu0
    %v2154 = vadd.f32 %v60, %v2153
    %2155 = vmatmul.f32.gmra.mxu0 %v72
    %v2156 = vpop.f32.mrf.mxu0
    %v2157 = vadd.f32 %v65, %v2156
    %2158 = vdwg.mxu0
    %v2159 = vmax.f32 %v2131, 0.0
    %v2160 = vmax.f32 %v2154, 0.0
    %v2161 = vmax.f32 %v2134, 0.0
    %v2162 = vmax.f32 %v2157, 0.0
    %s2163 = scalar_lea.vmem %s3, 240
    %v2164 = vld [vmem:[%s2163] sm:$0xff]
    %v2165 = vld [vmem:[%s2163 + $0x8] sm:$0xff]
    %v2167 = vsel %vm213, %v2164, 0
    %v2170 = vsel %vm213, %v2165, 0
    %2172 = vmatpush.msra.mxu0 0.0
    %2173 = vmatpush.msra.mxu0 0.0
    %2174 = vmatpush.msra.mxu0 0.0
    %2175 = vmatpush.msra.mxu0 0.0
    %2176 = vmatpush.msra.mxu0 0.0
    %2177 = vmatpush.msra.mxu0 0.0
    %2178 = vmatpush.msra.mxu0 0.0
    %2179 = vmatpush.msra.mxu0 0.0
    %2180 = vmatpush.msra.mxu0 0.0
    %2181 = vmatpush.msra.mxu0 0.0
    %2182 = vmatpush.msra.mxu0 0.0
    %2183 = vmatpush.msra.mxu0 0.0
    %2184 = vmatpush.msra.mxu0 0.0
    %2185 = vmatpush.msra.mxu0 0.0
    %2186 = vmatpush.msra.mxu0 %v2161
    %2187 = vmatpush.msra.mxu0 %v2159
    %2188 = vmatmul.f32.gmra.mxu0 %v2167
    %v2189 = vpop.f32.mrf.mxu0
    %v2190 = vadd.f32 0.0, %v2189
    %2191 = vmatmul.f32.gmra.mxu0 %v2170
    %v2192 = vpop.f32.mrf.mxu0
    %v2193 = vadd.f32 0.0, %v2192
    %2194 = vdwg.mxu0
    %2195 = vmatpush.msra.mxu0 0.0
    %2196 = vmatpush.msra.mxu0 0.0
    %2197 = vmatpush.msra.mxu0 0.0
    %2198 = vmatpush.msra.mxu0 0.0
    %2199 = vmatpush.msra.mxu0 0.0
    %2200 = vmatpush.msra.mxu0 0.0
    %2201 = vmatpush.msra.mxu0 0.0
    %2202 = vmatpush.msra.mxu0 0.0
    %2203 = vmatpush.msra.mxu0 0.0
    %2204 = vmatpush.msra.mxu0 0.0
    %2205 = vmatpush.msra.mxu0 0.0
    %2206 = vmatpush.msra.mxu0 0.0
    %2207 = vmatpush.msra.mxu0 0.0
    %2208 = vmatpush.msra.mxu0 0.0
    %2209 = vmatpush.msra.mxu0 %v2162
    %2210 = vmatpush.msra.mxu0 %v2160
    %2211 = vmatmul.f32.gmra.mxu0 %v2167
    %v2212 = vpop.f32.mrf.mxu0
    %v2213 = vadd.f32 0.0, %v2212
    %2214 = vmatmul.f32.gmra.mxu0 %v2170
    %v2215 = vpop.f32.mrf.mxu0
    %v2216 = vadd.f32 0.0, %v2215
    %2217 = vdwg.mxu0
    %v2218 = vadd.f32 %v2082, %v2190
    %v2219 = vadd.f32 %v2083, %v2213
    %v2220 = vadd.f32 %v2084, %v2193
    %v2221 = vadd.f32 %v2085, %v2216
    %s2222 = scalar_lea.vmem %s0, 2560
    %v2223 = vld [vmem:[%s2222] sm:$0xff]
    %v2224 = vld [vmem:[%s2222 + $0x8] sm:$0xff]
    %v2225 = vld [vmem:[%s2222 + $0x10] sm:$0xff]
    %v2226 = vld [vmem:[%s2222 + $0x18] sm:$0xff]
    %v2227 = vld [vmem:[%s2222 + $0x20] sm:$0xff]
    %v2228 = vld [vmem:[%s2222 + $0x28] sm:$0xff]
    %v2229 = vld [vmem:[%s2222 + $0x30] sm:$0xff]
    %v2230 = vld [vmem:[%s2222 + $0x38] sm:$0xff]
    %v2231 = vld [vmem:[%s2222 + $0x40] sm:$0xff]
    %v2232 = vld [vmem:[%s2222 + $0x48] sm:$0xff]
    %v2233 = vld [vmem:[%s2222 + $0x50] sm:$0xff]
    %v2234 = vld [vmem:[%s2222 + $0x58] sm:$0xff]
    %v2235 = vld [vmem:[%s2222 + $0x60] sm:$0xff]
    %v2236 = vld [vmem:[%s2222 + $0x68] sm:$0xff]
    %v2237 = vld [vmem:[%s2222 + $0x70] sm:$0xff]
    %v2238 = vld [vmem:[%s2222 + $0x78] sm:$0xff]
    %v2239 = vld [vmem:[%s2222 + $0x80] sm:$0xff]
    %v2240 = vld [vmem:[%s2222 + $0x88] sm:$0xff]
    %v2241 = vld [vmem:[%s2222 + $0x90] sm:$0x7]
    %v2242 = vld [vmem:[%s2222 + $0x98] sm:$0x7]
    %v2244 = vsel %vm74, %v2241, 0
    %v2247 = vsel %vm74, %v2242, 0
    %2249 = vmatpush.msra.mxu0 0.0
    %2250 = vmatpush.msra.mxu0 0.0
    %2251 = vmatpush.msra.mxu0 0.0
    %2252 = vmatpush.msra.mxu0 0.0
    %2253 = vmatpush.msra.mxu0 0.0
    %2254 = vmatpush.msra.mxu0 0.0
    %2255 = vmatpush.msra.mxu0 %v2244
    %2256 = vmatpush.msra.mxu0 %v2239
    %2257 = vmatpush.msra.mxu0 %v2237
    %2258 = vmatpush.msra.mxu0 %v2235
    %2259 = vmatpush.msra.mxu0 %v2233
    %2260 = vmatpush.msra.mxu0 %v2231
    %2261 = vmatpush.msra.mxu0 %v2229
    %2262 = vmatpush.msra.mxu0 %v2227
    %2263 = vmatpush.msra.mxu0 %v2225
    %2264 = vmatpush.msra.mxu0 %v2223
    %2265 = vmatmul.f32.gmra.mxu0 %v69
    %v2266 = vpop.f32.mrf.mxu0
    %v2267 = vadd.f32 %v60, %v2266
    %2268 = vmatmul.f32.gmra.mxu0 %v72
    %v2269 = vpop.f32.mrf.mxu0
    %v2270 = vadd.f32 %v65, %v2269
    %2271 = vdwg.mxu0
    %2272 = vmatpush.msra.mxu0 0.0
    %2273 = vmatpush.msra.mxu0 0.0
    %2274 = vmatpush.msra.mxu0 0.0
    %2275 = vmatpush.msra.mxu0 0.0
    %2276 = vmatpush.msra.mxu0 0.0
    %2277 = vmatpush.msra.mxu0 0.0
    %2278 = vmatpush.msra.mxu0 %v2247
    %2279 = vmatpush.msra.mxu0 %v2240
    %2280 = vmatpush.msra.mxu0 %v2238
    %2281 = vmatpush.msra.mxu0 %v2236
    %2282 = vmatpush.msra.mxu0 %v2234
    %2283 = vmatpush.msra.mxu0 %v2232
    %2284 = vmatpush.msra.mxu0 %v2230
    %2285 = vmatpush.msra.mxu0 %v2228
    %2286 = vmatpush.msra.mxu0 %v2226
    %2287 = vmatpush.msra.mxu0 %v2224
    %2288 = vmatmul.f32.gmra.mxu0 %v69
    %v2289 = vpop.f32.mrf.mxu0
    %v2290 = vadd.f32 %v60, %v2289
    %2291 = vmatmul.f32.gmra.mxu0 %v72
    %v2292 = vpop.f32.mrf.mxu0
    %v2293 = vadd.f32 %v65, %v2292
    %2294 = vdwg.mxu0
    %v2295 = vmax.f32 %v2267, 0.0
    %v2296 = vmax.f32 %v2290, 0.0
    %v2297 = vmax.f32 %v2270, 0.0
    %v2298 = vmax.f32 %v2293, 0.0
    %s2299 = scalar_lea.vmem %s3, 256
    %v2300 = vld [vmem:[%s2299] sm:$0xff]
    %v2301 = vld [vmem:[%s2299 + $0x8] sm:$0xff]
    %v2303 = vsel %vm213, %v2300, 0
    %v2306 = vsel %vm213, %v2301, 0
    %2308 = vmatpush.msra.mxu0 0.0
    %2309 = vmatpush.msra.mxu0 0.0
    %2310 = vmatpush.msra.mxu0 0.0
    %2311 = vmatpush.msra.mxu0 0.0
    %2312 = vmatpush.msra.mxu0 0.0
    %2313 = vmatpush.msra.mxu0 0.0
    %2314 = vmatpush.msra.mxu0 0.0
    %2315 = vmatpush.msra.mxu0 0.0
    %2316 = vmatpush.msra.mxu0 0.0
    %2317 = vmatpush.msra.mxu0 0.0
    %2318 = vmatpush.msra.mxu0 0.0
    %2319 = vmatpush.msra.mxu0 0.0
    %2320 = vmatpush.msra.mxu0 0.0
    %2321 = vmatpush.msra.mxu0 0.0
    %2322 = vmatpush.msra.mxu0 %v2297
    %2323 = vmatpush.msra.mxu0 %v2295
    %2324 = vmatmul.f32.gmra.mxu0 %v2303
    %v2325 = vpop.f32.mrf.mxu0
    %v2326 = vadd.f32 0.0, %v2325
    %2327 = vmatmul.f32.gmra.mxu0 %v2306
    %v2328 = vpop.f32.mrf.mxu0
    %v2329 = vadd.f32 0.0, %v2328
    %2330 = vdwg.mxu0
    %2331 = vmatpush.msra.mxu0 0.0
    %2332 = vmatpush.msra.mxu0 0.0
    %2333 = vmatpush.msra.mxu0 0.0
    %2334 = vmatpush.msra.mxu0 0.0
    %2335 = vmatpush.msra.mxu0 0.0
    %2336 = vmatpush.msra.mxu0 0.0
    %2337 = vmatpush.msra.mxu0 0.0
    %2338 = vmatpush.msra.mxu0 0.0
    %2339 = vmatpush.msra.mxu0 0.0
    %2340 = vmatpush.msra.mxu0 0.0
    %2341 = vmatpush.msra.mxu0 0.0
    %2342 = vmatpush.msra.mxu0 0.0
    %2343 = vmatpush.msra.mxu0 0.0
    %2344 = vmatpush.msra.mxu0 0.0
    %2345 = vmatpush.msra.mxu0 %v2298
    %2346 = vmatpush.msra.mxu0 %v2296
    %2347 = vmatmul.f32.gmra.mxu0 %v2303
    %v2348 = vpop.f32.mrf.mxu0
    %v2349 = vadd.f32 0.0, %v2348
    %2350 = vmatmul.f32.gmra.mxu0 %v2306
    %v2351 = vpop.f32.mrf.mxu0
    %v2352 = vadd.f32 0.0, %v2351
    %2353 = vdwg.mxu0
    %v2354 = vadd.f32 %v2218, %v2326
    %v2355 = vadd.f32 %v2219, %v2349
    %v2356 = vadd.f32 %v2220, %v2329
    %v2357 = vadd.f32 %v2221, %v2352
    %s2358 = scalar_lea.vmem %s0, 2720
    %v2359 = vld [vmem:[%s2358] sm:$0xff]
    %v2360 = vld [vmem:[%s2358 + $0x8] sm:$0xff]
    %v2361 = vld [vmem:[%s2358 + $0x10] sm:$0xff]
    %v2362 = vld [vmem:[%s2358 + $0x18] sm:$0xff]
    %v2363 = vld [vmem:[%s2358 + $0x20] sm:$0xff]
    %v2364 = vld [vmem:[%s2358 + $0x28] sm:$0xff]
    %v2365 = vld [vmem:[%s2358 + $0x30] sm:$0xff]
    %v2366 = vld [vmem:[%s2358 + $0x38] sm:$0xff]
    %v2367 = vld [vmem:[%s2358 + $0x40] sm:$0xff]
    %v2368 = vld [vmem:[%s2358 + $0x48] sm:$0xff]
    %v2369 = vld [vmem:[%s2358 + $0x50] sm:$0xff]
    %v2370 = vld [vmem:[%s2358 + $0x58] sm:$0xff]
    %v2371 = vld [vmem:[%s2358 + $0x60] sm:$0xff]
    %v2372 = vld [vmem:[%s2358 + $0x68] sm:$0xff]
    %v2373 = vld [vmem:[%s2358 + $0x70] sm:$0xff]
    %v2374 = vld [vmem:[%s2358 + $0x78] sm:$0xff]
    %v2375 = vld [vmem:[%s2358 + $0x80] sm:$0xff]
    %v2376 = vld [vmem:[%s2358 + $0x88] sm:$0xff]
    %v2377 = vld [vmem:[%s2358 + $0x90] sm:$0x7]
    %v2378 = vld [vmem:[%s2358 + $0x98] sm:$0x7]
    %v2380 = vsel %vm74, %v2377, 0
    %v2383 = vsel %vm74, %v2378, 0
    %2385 = vmatpush.msra.mxu0 0.0
    %2386 = vmatpush.msra.mxu0 0.0
    %2387 = vmatpush.msra.mxu0 0.0
    %2388 = vmatpush.msra.mxu0 0.0
    %2389 = vmatpush.msra.mxu0 0.0
    %2390 = vmatpush.msra.mxu0 0.0
    %2391 = vmatpush.msra.mxu0 %v2380
    %2392 = vmatpush.msra.mxu0 %v2375
    %2393 = vmatpush.msra.mxu0 %v2373
    %2394 = vmatpush.msra.mxu0 %v2371
    %2395 = vmatpush.msra.mxu0 %v2369
    %2396 = vmatpush.msra.mxu0 %v2367
    %2397 = vmatpush.msra.mxu0 %v2365
    %2398 = vmatpush.msra.mxu0 %v2363
    %2399 = vmatpush.msra.mxu0 %v2361
    %2400 = vmatpush.msra.mxu0 %v2359
    %2401 = vmatmul.f32.gmra.mxu0 %v69
    %v2402 = vpop.f32.mrf.mxu0
    %v2403 = vadd.f32 %v60, %v2402
    %2404 = vmatmul.f32.gmra.mxu0 %v72
    %v2405 = vpop.f32.mrf.mxu0
    %v2406 = vadd.f32 %v65, %v2405
    %2407 = vdwg.mxu0
    %2408 = vmatpush.msra.mxu0 0.0
    %2409 = vmatpush.msra.mxu0 0.0
    %2410 = vmatpush.msra.mxu0 0.0
    %2411 = vmatpush.msra.mxu0 0.0
    %2412 = vmatpush.msra.mxu0 0.0
    %2413 = vmatpush.msra.mxu0 0.0
    %2414 = vmatpush.msra.mxu0 %v2383
    %2415 = vmatpush.msra.mxu0 %v2376
    %2416 = vmatpush.msra.mxu0 %v2374
    %2417 = vmatpush.msra.mxu0 %v2372
    %2418 = vmatpush.msra.mxu0 %v2370
    %2419 = vmatpush.msra.mxu0 %v2368
    %2420 = vmatpush.msra.mxu0 %v2366
    %2421 = vmatpush.msra.mxu0 %v2364
    %2422 = vmatpush.msra.mxu0 %v2362
    %2423 = vmatpush.msra.mxu0 %v2360
    %2424 = vmatmul.f32.gmra.mxu0 %v69
    %v2425 = vpop.f32.mrf.mxu0
    %v2426 = vadd.f32 %v60, %v2425
    %2427 = vmatmul.f32.gmra.mxu0 %v72
    %v2428 = vpop.f32.mrf.mxu0
    %v2429 = vadd.f32 %v65, %v2428
    %2430 = vdwg.mxu0
    %v2431 = vmax.f32 %v2403, 0.0
    %v2432 = vmax.f32 %v2426, 0.0
    %v2433 = vmax.f32 %v2406, 0.0
    %v2434 = vmax.f32 %v2429, 0.0
    %s2435 = scalar_lea.vmem %s3, 272
    %v2436 = vld [vmem:[%s2435] sm:$0xff]
    %v2437 = vld [vmem:[%s2435 + $0x8] sm:$0xff]
    %v2439 = vsel %vm213, %v2436, 0
    %v2442 = vsel %vm213, %v2437, 0
    %2444 = vmatpush.msra.mxu0 0.0
    %2445 = vmatpush.msra.mxu0 0.0
    %2446 = vmatpush.msra.mxu0 0.0
    %2447 = vmatpush.msra.mxu0 0.0
    %2448 = vmatpush.msra.mxu0 0.0
    %2449 = vmatpush.msra.mxu0 0.0
    %2450 = vmatpush.msra.mxu0 0.0
    %2451 = vmatpush.msra.mxu0 0.0
    %2452 = vmatpush.msra.mxu0 0.0
    %2453 = vmatpush.msra.mxu0 0.0
    %2454 = vmatpush.msra.mxu0 0.0
    %2455 = vmatpush.msra.mxu0 0.0
    %2456 = vmatpush.msra.mxu0 0.0
    %2457 = vmatpush.msra.mxu0 0.0
    %2458 = vmatpush.msra.mxu0 %v2433
    %2459 = vmatpush.msra.mxu0 %v2431
    %2460 = vmatmul.f32.gmra.mxu0 %v2439
    %v2461 = vpop.f32.mrf.mxu0
    %v2462 = vadd.f32 0.0, %v2461
    %2463 = vmatmul.f32.gmra.mxu0 %v2442
    %v2464 = vpop.f32.mrf.mxu0
    %v2465 = vadd.f32 0.0, %v2464
    %2466 = vdwg.mxu0
    %2467 = vmatpush.msra.mxu0 0.0
    %2468 = vmatpush.msra.mxu0 0.0
    %2469 = vmatpush.msra.mxu0 0.0
    %2470 = vmatpush.msra.mxu0 0.0
    %2471 = vmatpush.msra.mxu0 0.0
    %2472 = vmatpush.msra.mxu0 0.0
    %2473 = vmatpush.msra.mxu0 0.0
    %2474 = vmatpush.msra.mxu0 0.0
    %2475 = vmatpush.msra.mxu0 0.0
    %2476 = vmatpush.msra.mxu0 0.0
    %2477 = vmatpush.msra.mxu0 0.0
    %2478 = vmatpush.msra.mxu0 0.0
    %2479 = vmatpush.msra.mxu0 0.0
    %2480 = vmatpush.msra.mxu0 0.0
    %2481 = vmatpush.msra.mxu0 %v2434
    %2482 = vmatpush.msra.mxu0 %v2432
    %2483 = vmatmul.f32.gmra.mxu0 %v2439
    %v2484 = vpop.f32.mrf.mxu0
    %v2485 = vadd.f32 0.0, %v2484
    %2486 = vmatmul.f32.gmra.mxu0 %v2442
    %v2487 = vpop.f32.mrf.mxu0
    %v2488 = vadd.f32 0.0, %v2487
    %2489 = vdwg.mxu0
    %v2490 = vadd.f32 %v2354, %v2462
    %v2491 = vadd.f32 %v2355, %v2485
    %v2492 = vadd.f32 %v2356, %v2465
    %v2493 = vadd.f32 %v2357, %v2488
    %s2494 = scalar_lea.vmem %s0, 2880
    %v2495 = vld [vmem:[%s2494] sm:$0xff]
    %v2496 = vld [vmem:[%s2494 + $0x8] sm:$0xff]
    %v2497 = vld [vmem:[%s2494 + $0x10] sm:$0xff]
    %v2498 = vld [vmem:[%s2494 + $0x18] sm:$0xff]
    %v2499 = vld [vmem:[%s2494 + $0x20] sm:$0xff]
    %v2500 = vld [vmem:[%s2494 + $0x28] sm:$0xff]
    %v2501 = vld [vmem:[%s2494 + $0x30] sm:$0xff]
    %v2502 = vld [vmem:[%s2494 + $0x38] sm:$0xff]
    %v2503 = vld [vmem:[%s2494 + $0x40] sm:$0xff]
    %v2504 = vld [vmem:[%s2494 + $0x48] sm:$0xff]
    %v2505 = vld [vmem:[%s2494 + $0x50] sm:$0xff]
    %v2506 = vld [vmem:[%s2494 + $0x58] sm:$0xff]
    %v2507 = vld [vmem:[%s2494 + $0x60] sm:$0xff]
    %v2508 = vld [vmem:[%s2494 + $0x68] sm:$0xff]
    %v2509 = vld [vmem:[%s2494 + $0x70] sm:$0xff]
    %v2510 = vld [vmem:[%s2494 + $0x78] sm:$0xff]
    %v2511 = vld [vmem:[%s2494 + $0x80] sm:$0xff]
    %v2512 = vld [vmem:[%s2494 + $0x88] sm:$0xff]
    %v2513 = vld [vmem:[%s2494 + $0x90] sm:$0x7]
    %v2514 = vld [vmem:[%s2494 + $0x98] sm:$0x7]
    %v2516 = vsel %vm74, %v2513, 0
    %v2519 = vsel %vm74, %v2514, 0
    %2521 = vmatpush.msra.mxu0 0.0
    %2522 = vmatpush.msra.mxu0 0.0
    %2523 = vmatpush.msra.mxu0 0.0
    %2524 = vmatpush.msra.mxu0 0.0
    %2525 = vmatpush.msra.mxu0 0.0
    %2526 = vmatpush.msra.mxu0 0.0
    %2527 = vmatpush.msra.mxu0 %v2516
    %2528 = vmatpush.msra.mxu0 %v2511
    %2529 = vmatpush.msra.mxu0 %v2509
    %2530 = vmatpush.msra.mxu0 %v2507
    %2531 = vmatpush.msra.mxu0 %v2505
    %2532 = vmatpush.msra.mxu0 %v2503
    %2533 = vmatpush.msra.mxu0 %v2501
    %2534 = vmatpush.msra.mxu0 %v2499
    %2535 = vmatpush.msra.mxu0 %v2497
    %2536 = vmatpush.msra.mxu0 %v2495
    %2537 = vmatmul.f32.gmra.mxu0 %v69
    %v2538 = vpop.f32.mrf.mxu0
    %v2539 = vadd.f32 %v60, %v2538
    %2540 = vmatmul.f32.gmra.mxu0 %v72
    %v2541 = vpop.f32.mrf.mxu0
    %v2542 = vadd.f32 %v65, %v2541
    %2543 = vdwg.mxu0
    %2544 = vmatpush.msra.mxu0 0.0
    %2545 = vmatpush.msra.mxu0 0.0
    %2546 = vmatpush.msra.mxu0 0.0
    %2547 = vmatpush.msra.mxu0 0.0
    %2548 = vmatpush.msra.mxu0 0.0
    %2549 = vmatpush.msra.mxu0 0.0
    %2550 = vmatpush.msra.mxu0 %v2519
    %2551 = vmatpush.msra.mxu0 %v2512
    %2552 = vmatpush.msra.mxu0 %v2510
    %2553 = vmatpush.msra.mxu0 %v2508
    %2554 = vmatpush.msra.mxu0 %v2506
    %2555 = vmatpush.msra.mxu0 %v2504
    %2556 = vmatpush.msra.mxu0 %v2502
    %2557 = vmatpush.msra.mxu0 %v2500
    %2558 = vmatpush.msra.mxu0 %v2498
    %2559 = vmatpush.msra.mxu0 %v2496
    %2560 = vmatmul.f32.gmra.mxu0 %v69
    %v2561 = vpop.f32.mrf.mxu0
    %v2562 = vadd.f32 %v60, %v2561
    %2563 = vmatmul.f32.gmra.mxu0 %v72
    %v2564 = vpop.f32.mrf.mxu0
    %v2565 = vadd.f32 %v65, %v2564
    %2566 = vdwg.mxu0
    %v2567 = vmax.f32 %v2539, 0.0
    %v2568 = vmax.f32 %v2562, 0.0
    %v2569 = vmax.f32 %v2542, 0.0
    %v2570 = vmax.f32 %v2565, 0.0
    %s2571 = scalar_lea.vmem %s3, 288
    %v2572 = vld [vmem:[%s2571] sm:$0xff]
    %v2573 = vld [vmem:[%s2571 + $0x8] sm:$0xff]
    %v2575 = vsel %vm213, %v2572, 0
    %v2578 = vsel %vm213, %v2573, 0
    %2580 = vmatpush.msra.mxu0 0.0
    %2581 = vmatpush.msra.mxu0 0.0
    %2582 = vmatpush.msra.mxu0 0.0
    %2583 = vmatpush.msra.mxu0 0.0
    %2584 = vmatpush.msra.mxu0 0.0
    %2585 = vmatpush.msra.mxu0 0.0
    %2586 = vmatpush.msra.mxu0 0.0
    %2587 = vmatpush.msra.mxu0 0.0
    %2588 = vmatpush.msra.mxu0 0.0
    %2589 = vmatpush.msra.mxu0 0.0
    %2590 = vmatpush.msra.mxu0 0.0
    %2591 = vmatpush.msra.mxu0 0.0
    %2592 = vmatpush.msra.mxu0 0.0
    %2593 = vmatpush.msra.mxu0 0.0
    %2594 = vmatpush.msra.mxu0 %v2569
    %2595 = vmatpush.msra.mxu0 %v2567
    %2596 = vmatmul.f32.gmra.mxu0 %v2575
    %v2597 = vpop.f32.mrf.mxu0
    %v2598 = vadd.f32 0.0, %v2597
    %2599 = vmatmul.f32.gmra.mxu0 %v2578
    %v2600 = vpop.f32.mrf.mxu0
    %v2601 = vadd.f32 0.0, %v2600
    %2602 = vdwg.mxu0
    %2603 = vmatpush.msra.mxu0 0.0
    %2604 = vmatpush.msra.mxu0 0.0
    %2605 = vmatpush.msra.mxu0 0.0
    %2606 = vmatpush.msra.mxu0 0.0
    %2607 = vmatpush.msra.mxu0 0.0
    %2608 = vmatpush.msra.mxu0 0.0
    %2609 = vmatpush.msra.mxu0 0.0
    %2610 = vmatpush.msra.mxu0 0.0
    %2611 = vmatpush.msra.mxu0 0.0
    %2612 = vmatpush.msra.mxu0 0.0
    %2613 = vmatpush.msra.mxu0 0.0
    %2614 = vmatpush.msra.mxu0 0.0
    %2615 = vmatpush.msra.mxu0 0.0
    %2616 = vmatpush.msra.mxu0 0.0
    %2617 = vmatpush.msra.mxu0 %v2570
    %2618 = vmatpush.msra.mxu0 %v2568
    %2619 = vmatmul.f32.gmra.mxu0 %v2575
    %v2620 = vpop.f32.mrf.mxu0
    %v2621 = vadd.f32 0.0, %v2620
    %2622 = vmatmul.f32.gmra.mxu0 %v2578
    %v2623 = vpop.f32.mrf.mxu0
    %v2624 = vadd.f32 0.0, %v2623
    %2625 = vdwg.mxu0
    %v2626 = vadd.f32 %v2490, %v2598
    %v2627 = vadd.f32 %v2491, %v2621
    %v2628 = vadd.f32 %v2492, %v2601
    %v2629 = vadd.f32 %v2493, %v2624
    %s2630 = scalar_lea.vmem %s0, 3040
    %v2631 = vld [vmem:[%s2630] sm:$0xff]
    %v2632 = vld [vmem:[%s2630 + $0x8] sm:$0xff]
    %v2633 = vld [vmem:[%s2630 + $0x10] sm:$0xff]
    %v2634 = vld [vmem:[%s2630 + $0x18] sm:$0xff]
    %v2635 = vld [vmem:[%s2630 + $0x20] sm:$0xff]
    %v2636 = vld [vmem:[%s2630 + $0x28] sm:$0xff]
    %v2637 = vld [vmem:[%s2630 + $0x30] sm:$0xff]
    %v2638 = vld [vmem:[%s2630 + $0x38] sm:$0xff]
    %v2639 = vld [vmem:[%s2630 + $0x40] sm:$0xff]
    %v2640 = vld [vmem:[%s2630 + $0x48] sm:$0xff]
    %v2641 = vld [vmem:[%s2630 + $0x50] sm:$0xff]
    %v2642 = vld [vmem:[%s2630 + $0x58] sm:$0xff]
    %v2643 = vld [vmem:[%s2630 + $0x60] sm:$0xff]
    %v2644 = vld [vmem:[%s2630 + $0x68] sm:$0xff]
    %v2645 = vld [vmem:[%s2630 + $0x70] sm:$0xff]
    %v2646 = vld [vmem:[%s2630 + $0x78] sm:$0xff]
    %v2647 = vld [vmem:[%s2630 + $0x80] sm:$0xff]
    %v2648 = vld [vmem:[%s2630 + $0x88] sm:$0xff]
    %v2649 = vld [vmem:[%s2630 + $0x90] sm:$0x7]
    %v2650 = vld [vmem:[%s2630 + $0x98] sm:$0x7]
    %v2652 = vsel %vm74, %v2649, 0
    %v2655 = vsel %vm74, %v2650, 0
    %2657 = vmatpush.msra.mxu0 0.0
    %2658 = vmatpush.msra.mxu0 0.0
    %2659 = vmatpush.msra.mxu0 0.0
    %2660 = vmatpush.msra.mxu0 0.0
    %2661 = vmatpush.msra.mxu0 0.0
    %2662 = vmatpush.msra.mxu0 0.0
    %2663 = vmatpush.msra.mxu0 %v2652
    %2664 = vmatpush.msra.mxu0 %v2647
    %2665 = vmatpush.msra.mxu0 %v2645
    %2666 = vmatpush.msra.mxu0 %v2643
    %2667 = vmatpush.msra.mxu0 %v2641
    %2668 = vmatpush.msra.mxu0 %v2639
    %2669 = vmatpush.msra.mxu0 %v2637
    %2670 = vmatpush.msra.mxu0 %v2635
    %2671 = vmatpush.msra.mxu0 %v2633
    %2672 = vmatpush.msra.mxu0 %v2631
    %2673 = vmatmul.f32.gmra.mxu0 %v69
    %v2674 = vpop.f32.mrf.mxu0
    %v2675 = vadd.f32 %v60, %v2674
    %2676 = vmatmul.f32.gmra.mxu0 %v72
    %v2677 = vpop.f32.mrf.mxu0
    %v2678 = vadd.f32 %v65, %v2677
    %2679 = vdwg.mxu0
    %2680 = vmatpush.msra.mxu0 0.0
    %2681 = vmatpush.msra.mxu0 0.0
    %2682 = vmatpush.msra.mxu0 0.0
    %2683 = vmatpush.msra.mxu0 0.0
    %2684 = vmatpush.msra.mxu0 0.0
    %2685 = vmatpush.msra.mxu0 0.0
    %2686 = vmatpush.msra.mxu0 %v2655
    %2687 = vmatpush.msra.mxu0 %v2648
    %2688 = vmatpush.msra.mxu0 %v2646
    %2689 = vmatpush.msra.mxu0 %v2644
    %2690 = vmatpush.msra.mxu0 %v2642
    %2691 = vmatpush.msra.mxu0 %v2640
    %2692 = vmatpush.msra.mxu0 %v2638
    %2693 = vmatpush.msra.mxu0 %v2636
    %2694 = vmatpush.msra.mxu0 %v2634
    %2695 = vmatpush.msra.mxu0 %v2632
    %2696 = vmatmul.f32.gmra.mxu0 %v69
    %v2697 = vpop.f32.mrf.mxu0
    %v2698 = vadd.f32 %v60, %v2697
    %2699 = vmatmul.f32.gmra.mxu0 %v72
    %v2700 = vpop.f32.mrf.mxu0
    %v2701 = vadd.f32 %v65, %v2700
    %2702 = vdwg.mxu0
    %v2703 = vmax.f32 %v2675, 0.0
    %v2704 = vmax.f32 %v2698, 0.0
    %v2705 = vmax.f32 %v2678, 0.0
    %v2706 = vmax.f32 %v2701, 0.0
    %s2707 = scalar_lea.vmem %s3, 304
    %v2708 = vld [vmem:[%s2707] sm:$0xff]
    %v2709 = vld [vmem:[%s2707 + $0x8] sm:$0xff]
    %v2711 = vsel %vm213, %v2708, 0
    %v2714 = vsel %vm213, %v2709, 0
    %2716 = vmatpush.msra.mxu0 0.0
    %2717 = vmatpush.msra.mxu0 0.0
    %2718 = vmatpush.msra.mxu0 0.0
    %2719 = vmatpush.msra.mxu0 0.0
    %2720 = vmatpush.msra.mxu0 0.0
    %2721 = vmatpush.msra.mxu0 0.0
    %2722 = vmatpush.msra.mxu0 0.0
    %2723 = vmatpush.msra.mxu0 0.0
    %2724 = vmatpush.msra.mxu0 0.0
    %2725 = vmatpush.msra.mxu0 0.0
    %2726 = vmatpush.msra.mxu0 0.0
    %2727 = vmatpush.msra.mxu0 0.0
    %2728 = vmatpush.msra.mxu0 0.0
    %2729 = vmatpush.msra.mxu0 0.0
    %2730 = vmatpush.msra.mxu0 %v2705
    %2731 = vmatpush.msra.mxu0 %v2703
    %2732 = vmatmul.f32.gmra.mxu0 %v2711
    %v2733 = vpop.f32.mrf.mxu0
    %v2734 = vadd.f32 0.0, %v2733
    %2735 = vmatmul.f32.gmra.mxu0 %v2714
    %v2736 = vpop.f32.mrf.mxu0
    %v2737 = vadd.f32 0.0, %v2736
    %2738 = vdwg.mxu0
    %2739 = vmatpush.msra.mxu0 0.0
    %2740 = vmatpush.msra.mxu0 0.0
    %2741 = vmatpush.msra.mxu0 0.0
    %2742 = vmatpush.msra.mxu0 0.0
    %2743 = vmatpush.msra.mxu0 0.0
    %2744 = vmatpush.msra.mxu0 0.0
    %2745 = vmatpush.msra.mxu0 0.0
    %2746 = vmatpush.msra.mxu0 0.0
    %2747 = vmatpush.msra.mxu0 0.0
    %2748 = vmatpush.msra.mxu0 0.0
    %2749 = vmatpush.msra.mxu0 0.0
    %2750 = vmatpush.msra.mxu0 0.0
    %2751 = vmatpush.msra.mxu0 0.0
    %2752 = vmatpush.msra.mxu0 0.0
    %2753 = vmatpush.msra.mxu0 %v2706
    %2754 = vmatpush.msra.mxu0 %v2704
    %2755 = vmatmul.f32.gmra.mxu0 %v2711
    %v2756 = vpop.f32.mrf.mxu0
    %v2757 = vadd.f32 0.0, %v2756
    %2758 = vmatmul.f32.gmra.mxu0 %v2714
    %v2759 = vpop.f32.mrf.mxu0
    %v2760 = vadd.f32 0.0, %v2759
    %2761 = vdwg.mxu0
    %v2762 = vadd.f32 %v2626, %v2734
    %v2763 = vadd.f32 %v2627, %v2757
    %v2764 = vadd.f32 %v2628, %v2737
    %v2765 = vadd.f32 %v2629, %v2760
    %s2766 = scalar_lea.vmem %s0, 3200
    %v2767 = vld [vmem:[%s2766] sm:$0xff]
    %v2768 = vld [vmem:[%s2766 + $0x8] sm:$0xff]
    %v2769 = vld [vmem:[%s2766 + $0x10] sm:$0xff]
    %v2770 = vld [vmem:[%s2766 + $0x18] sm:$0xff]
    %v2771 = vld [vmem:[%s2766 + $0x20] sm:$0xff]
    %v2772 = vld [vmem:[%s2766 + $0x28] sm:$0xff]
    %v2773 = vld [vmem:[%s2766 + $0x30] sm:$0xff]
    %v2774 = vld [vmem:[%s2766 + $0x38] sm:$0xff]
    %v2775 = vld [vmem:[%s2766 + $0x40] sm:$0xff]
    %v2776 = vld [vmem:[%s2766 + $0x48] sm:$0xff]
    %v2777 = vld [vmem:[%s2766 + $0x50] sm:$0xff]
    %v2778 = vld [vmem:[%s2766 + $0x58] sm:$0xff]
    %v2779 = vld [vmem:[%s2766 + $0x60] sm:$0xff]
    %v2780 = vld [vmem:[%s2766 + $0x68] sm:$0xff]
    %v2781 = vld [vmem:[%s2766 + $0x70] sm:$0xff]
    %v2782 = vld [vmem:[%s2766 + $0x78] sm:$0xff]
    %v2783 = vld [vmem:[%s2766 + $0x80] sm:$0xff]
    %v2784 = vld [vmem:[%s2766 + $0x88] sm:$0xff]
    %v2785 = vld [vmem:[%s2766 + $0x90] sm:$0x7]
    %v2786 = vld [vmem:[%s2766 + $0x98] sm:$0x7]
    %v2788 = vsel %vm74, %v2785, 0
    %v2791 = vsel %vm74, %v2786, 0
    %2793 = vmatpush.msra.mxu0 0.0
    %2794 = vmatpush.msra.mxu0 0.0
    %2795 = vmatpush.msra.mxu0 0.0
    %2796 = vmatpush.msra.mxu0 0.0
    %2797 = vmatpush.msra.mxu0 0.0
    %2798 = vmatpush.msra.mxu0 0.0
    %2799 = vmatpush.msra.mxu0 %v2788
    %2800 = vmatpush.msra.mxu0 %v2783
    %2801 = vmatpush.msra.mxu0 %v2781
    %2802 = vmatpush.msra.mxu0 %v2779
    %2803 = vmatpush.msra.mxu0 %v2777
    %2804 = vmatpush.msra.mxu0 %v2775
    %2805 = vmatpush.msra.mxu0 %v2773
    %2806 = vmatpush.msra.mxu0 %v2771
    %2807 = vmatpush.msra.mxu0 %v2769
    %2808 = vmatpush.msra.mxu0 %v2767
    %2809 = vmatmul.f32.gmra.mxu0 %v69
    %v2810 = vpop.f32.mrf.mxu0
    %v2811 = vadd.f32 %v60, %v2810
    %2812 = vmatmul.f32.gmra.mxu0 %v72
    %v2813 = vpop.f32.mrf.mxu0
    %v2814 = vadd.f32 %v65, %v2813
    %2815 = vdwg.mxu0
    %2816 = vmatpush.msra.mxu0 0.0
    %2817 = vmatpush.msra.mxu0 0.0
    %2818 = vmatpush.msra.mxu0 0.0
    %2819 = vmatpush.msra.mxu0 0.0
    %2820 = vmatpush.msra.mxu0 0.0
    %2821 = vmatpush.msra.mxu0 0.0
    %2822 = vmatpush.msra.mxu0 %v2791
    %2823 = vmatpush.msra.mxu0 %v2784
    %2824 = vmatpush.msra.mxu0 %v2782
    %2825 = vmatpush.msra.mxu0 %v2780
    %2826 = vmatpush.msra.mxu0 %v2778
    %2827 = vmatpush.msra.mxu0 %v2776
    %2828 = vmatpush.msra.mxu0 %v2774
    %2829 = vmatpush.msra.mxu0 %v2772
    %2830 = vmatpush.msra.mxu0 %v2770
    %2831 = vmatpush.msra.mxu0 %v2768
    %2832 = vmatmul.f32.gmra.mxu0 %v69
    %v2833 = vpop.f32.mrf.mxu0
    %v2834 = vadd.f32 %v60, %v2833
    %2835 = vmatmul.f32.gmra.mxu0 %v72
    %v2836 = vpop.f32.mrf.mxu0
    %v2837 = vadd.f32 %v65, %v2836
    %2838 = vdwg.mxu0
    %v2839 = vmax.f32 %v2811, 0.0
    %v2840 = vmax.f32 %v2834, 0.0
    %v2841 = vmax.f32 %v2814, 0.0
    %v2842 = vmax.f32 %v2837, 0.0
    %s2843 = scalar_lea.vmem %s3, 320
    %v2844 = vld [vmem:[%s2843] sm:$0xff]
    %v2845 = vld [vmem:[%s2843 + $0x8] sm:$0xff]
    %v2847 = vsel %vm213, %v2844, 0
    %v2850 = vsel %vm213, %v2845, 0
    %2852 = vmatpush.msra.mxu0 0.0
    %2853 = vmatpush.msra.mxu0 0.0
    %2854 = vmatpush.msra.mxu0 0.0
    %2855 = vmatpush.msra.mxu0 0.0
    %2856 = vmatpush.msra.mxu0 0.0
    %2857 = vmatpush.msra.mxu0 0.0
    %2858 = vmatpush.msra.mxu0 0.0
    %2859 = vmatpush.msra.mxu0 0.0
    %2860 = vmatpush.msra.mxu0 0.0
    %2861 = vmatpush.msra.mxu0 0.0
    %2862 = vmatpush.msra.mxu0 0.0
    %2863 = vmatpush.msra.mxu0 0.0
    %2864 = vmatpush.msra.mxu0 0.0
    %2865 = vmatpush.msra.mxu0 0.0
    %2866 = vmatpush.msra.mxu0 %v2841
    %2867 = vmatpush.msra.mxu0 %v2839
    %2868 = vmatmul.f32.gmra.mxu0 %v2847
    %v2869 = vpop.f32.mrf.mxu0
    %v2870 = vadd.f32 0.0, %v2869
    %2871 = vmatmul.f32.gmra.mxu0 %v2850
    %v2872 = vpop.f32.mrf.mxu0
    %v2873 = vadd.f32 0.0, %v2872
    %2874 = vdwg.mxu0
    %2875 = vmatpush.msra.mxu0 0.0
    %2876 = vmatpush.msra.mxu0 0.0
    %2877 = vmatpush.msra.mxu0 0.0
    %2878 = vmatpush.msra.mxu0 0.0
    %2879 = vmatpush.msra.mxu0 0.0
    %2880 = vmatpush.msra.mxu0 0.0
    %2881 = vmatpush.msra.mxu0 0.0
    %2882 = vmatpush.msra.mxu0 0.0
    %2883 = vmatpush.msra.mxu0 0.0
    %2884 = vmatpush.msra.mxu0 0.0
    %2885 = vmatpush.msra.mxu0 0.0
    %2886 = vmatpush.msra.mxu0 0.0
    %2887 = vmatpush.msra.mxu0 0.0
    %2888 = vmatpush.msra.mxu0 0.0
    %2889 = vmatpush.msra.mxu0 %v2842
    %2890 = vmatpush.msra.mxu0 %v2840
    %2891 = vmatmul.f32.gmra.mxu0 %v2847
    %v2892 = vpop.f32.mrf.mxu0
    %v2893 = vadd.f32 0.0, %v2892
    %2894 = vmatmul.f32.gmra.mxu0 %v2850
    %v2895 = vpop.f32.mrf.mxu0
    %v2896 = vadd.f32 0.0, %v2895
    %2897 = vdwg.mxu0
    %v2898 = vadd.f32 %v2762, %v2870
    %v2899 = vadd.f32 %v2763, %v2893
    %v2900 = vadd.f32 %v2764, %v2873
    %v2901 = vadd.f32 %v2765, %v2896
    %s2902 = scalar_lea.vmem %s0, 3360
    %v2903 = vld [vmem:[%s2902] sm:$0xff]
    %v2904 = vld [vmem:[%s2902 + $0x8] sm:$0xff]
    %v2905 = vld [vmem:[%s2902 + $0x10] sm:$0xff]
    %v2906 = vld [vmem:[%s2902 + $0x18] sm:$0xff]
    %v2907 = vld [vmem:[%s2902 + $0x20] sm:$0xff]
    %v2908 = vld [vmem:[%s2902 + $0x28] sm:$0xff]
    %v2909 = vld [vmem:[%s2902 + $0x30] sm:$0xff]
    %v2910 = vld [vmem:[%s2902 + $0x38] sm:$0xff]
    %v2911 = vld [vmem:[%s2902 + $0x40] sm:$0xff]
    %v2912 = vld [vmem:[%s2902 + $0x48] sm:$0xff]
    %v2913 = vld [vmem:[%s2902 + $0x50] sm:$0xff]
    %v2914 = vld [vmem:[%s2902 + $0x58] sm:$0xff]
    %v2915 = vld [vmem:[%s2902 + $0x60] sm:$0xff]
    %v2916 = vld [vmem:[%s2902 + $0x68] sm:$0xff]
    %v2917 = vld [vmem:[%s2902 + $0x70] sm:$0xff]
    %v2918 = vld [vmem:[%s2902 + $0x78] sm:$0xff]
    %v2919 = vld [vmem:[%s2902 + $0x80] sm:$0xff]
    %v2920 = vld [vmem:[%s2902 + $0x88] sm:$0xff]
    %v2921 = vld [vmem:[%s2902 + $0x90] sm:$0x7]
    %v2922 = vld [vmem:[%s2902 + $0x98] sm:$0x7]
    %v2924 = vsel %vm74, %v2921, 0
    %v2927 = vsel %vm74, %v2922, 0
    %2929 = vmatpush.msra.mxu0 0.0
    %2930 = vmatpush.msra.mxu0 0.0
    %2931 = vmatpush.msra.mxu0 0.0
    %2932 = vmatpush.msra.mxu0 0.0
    %2933 = vmatpush.msra.mxu0 0.0
    %2934 = vmatpush.msra.mxu0 0.0
    %2935 = vmatpush.msra.mxu0 %v2924
    %2936 = vmatpush.msra.mxu0 %v2919
    %2937 = vmatpush.msra.mxu0 %v2917
    %2938 = vmatpush.msra.mxu0 %v2915
    %2939 = vmatpush.msra.mxu0 %v2913
    %2940 = vmatpush.msra.mxu0 %v2911
    %2941 = vmatpush.msra.mxu0 %v2909
    %2942 = vmatpush.msra.mxu0 %v2907
    %2943 = vmatpush.msra.mxu0 %v2905
    %2944 = vmatpush.msra.mxu0 %v2903
    %2945 = vmatmul.f32.gmra.mxu0 %v69
    %v2946 = vpop.f32.mrf.mxu0
    %v2947 = vadd.f32 %v60, %v2946
    %2948 = vmatmul.f32.gmra.mxu0 %v72
    %v2949 = vpop.f32.mrf.mxu0
    %v2950 = vadd.f32 %v65, %v2949
    %2951 = vdwg.mxu0
    %2952 = vmatpush.msra.mxu0 0.0
    %2953 = vmatpush.msra.mxu0 0.0
    %2954 = vmatpush.msra.mxu0 0.0
    %2955 = vmatpush.msra.mxu0 0.0
    %2956 = vmatpush.msra.mxu0 0.0
    %2957 = vmatpush.msra.mxu0 0.0
    %2958 = vmatpush.msra.mxu0 %v2927
    %2959 = vmatpush.msra.mxu0 %v2920
    %2960 = vmatpush.msra.mxu0 %v2918
    %2961 = vmatpush.msra.mxu0 %v2916
    %2962 = vmatpush.msra.mxu0 %v2914
    %2963 = vmatpush.msra.mxu0 %v2912
    %2964 = vmatpush.msra.mxu0 %v2910
    %2965 = vmatpush.msra.mxu0 %v2908
    %2966 = vmatpush.msra.mxu0 %v2906
    %2967 = vmatpush.msra.mxu0 %v2904
    %2968 = vmatmul.f32.gmra.mxu0 %v69
    %v2969 = vpop.f32.mrf.mxu0
    %v2970 = vadd.f32 %v60, %v2969
    %2971 = vmatmul.f32.gmra.mxu0 %v72
    %v2972 = vpop.f32.mrf.mxu0
    %v2973 = vadd.f32 %v65, %v2972
    %2974 = vdwg.mxu0
    %v2975 = vmax.f32 %v2947, 0.0
    %v2976 = vmax.f32 %v2970, 0.0
    %v2977 = vmax.f32 %v2950, 0.0
    %v2978 = vmax.f32 %v2973, 0.0
    %s2979 = scalar_lea.vmem %s3, 336
    %v2980 = vld [vmem:[%s2979] sm:$0xff]
    %v2981 = vld [vmem:[%s2979 + $0x8] sm:$0xff]
    %v2983 = vsel %vm213, %v2980, 0
    %v2986 = vsel %vm213, %v2981, 0
    %2988 = vmatpush.msra.mxu0 0.0
    %2989 = vmatpush.msra.mxu0 0.0
    %2990 = vmatpush.msra.mxu0 0.0
    %2991 = vmatpush.msra.mxu0 0.0
    %2992 = vmatpush.msra.mxu0 0.0
    %2993 = vmatpush.msra.mxu0 0.0
    %2994 = vmatpush.msra.mxu0 0.0
    %2995 = vmatpush.msra.mxu0 0.0
    %2996 = vmatpush.msra.mxu0 0.0
    %2997 = vmatpush.msra.mxu0 0.0
    %2998 = vmatpush.msra.mxu0 0.0
    %2999 = vmatpush.msra.mxu0 0.0
    %3000 = vmatpush.msra.mxu0 0.0
    %3001 = vmatpush.msra.mxu0 0.0
    %3002 = vmatpush.msra.mxu0 %v2977
    %3003 = vmatpush.msra.mxu0 %v2975
    %3004 = vmatmul.f32.gmra.mxu0 %v2983
    %v3005 = vpop.f32.mrf.mxu0
    %v3006 = vadd.f32 0.0, %v3005
    %3007 = vmatmul.f32.gmra.mxu0 %v2986
    %v3008 = vpop.f32.mrf.mxu0
    %v3009 = vadd.f32 0.0, %v3008
    %3010 = vdwg.mxu0
    %3011 = vmatpush.msra.mxu0 0.0
    %3012 = vmatpush.msra.mxu0 0.0
    %3013 = vmatpush.msra.mxu0 0.0
    %3014 = vmatpush.msra.mxu0 0.0
    %3015 = vmatpush.msra.mxu0 0.0
    %3016 = vmatpush.msra.mxu0 0.0
    %3017 = vmatpush.msra.mxu0 0.0
    %3018 = vmatpush.msra.mxu0 0.0
    %3019 = vmatpush.msra.mxu0 0.0
    %3020 = vmatpush.msra.mxu0 0.0
    %3021 = vmatpush.msra.mxu0 0.0
    %3022 = vmatpush.msra.mxu0 0.0
    %3023 = vmatpush.msra.mxu0 0.0
    %3024 = vmatpush.msra.mxu0 0.0
    %3025 = vmatpush.msra.mxu0 %v2978
    %3026 = vmatpush.msra.mxu0 %v2976
    %3027 = vmatmul.f32.gmra.mxu0 %v2983
    %v3028 = vpop.f32.mrf.mxu0
    %v3029 = vadd.f32 0.0, %v3028
    %3030 = vmatmul.f32.gmra.mxu0 %v2986
    %v3031 = vpop.f32.mrf.mxu0
    %v3032 = vadd.f32 0.0, %v3031
    %3033 = vdwg.mxu0
    %v3034 = vadd.f32 %v2898, %v3006
    %v3035 = vadd.f32 %v2899, %v3029
    %v3036 = vadd.f32 %v2900, %v3009
    %v3037 = vadd.f32 %v2901, %v3032
    %s3038 = scalar_lea.vmem %s0, 3520
    %v3039 = vld [vmem:[%s3038] sm:$0xff]
    %v3040 = vld [vmem:[%s3038 + $0x8] sm:$0xff]
    %v3041 = vld [vmem:[%s3038 + $0x10] sm:$0xff]
    %v3042 = vld [vmem:[%s3038 + $0x18] sm:$0xff]
    %v3043 = vld [vmem:[%s3038 + $0x20] sm:$0xff]
    %v3044 = vld [vmem:[%s3038 + $0x28] sm:$0xff]
    %v3045 = vld [vmem:[%s3038 + $0x30] sm:$0xff]
    %v3046 = vld [vmem:[%s3038 + $0x38] sm:$0xff]
    %v3047 = vld [vmem:[%s3038 + $0x40] sm:$0xff]
    %v3048 = vld [vmem:[%s3038 + $0x48] sm:$0xff]
    %v3049 = vld [vmem:[%s3038 + $0x50] sm:$0xff]
    %v3050 = vld [vmem:[%s3038 + $0x58] sm:$0xff]
    %v3051 = vld [vmem:[%s3038 + $0x60] sm:$0xff]
    %v3052 = vld [vmem:[%s3038 + $0x68] sm:$0xff]
    %v3053 = vld [vmem:[%s3038 + $0x70] sm:$0xff]
    %v3054 = vld [vmem:[%s3038 + $0x78] sm:$0xff]
    %v3055 = vld [vmem:[%s3038 + $0x80] sm:$0xff]
    %v3056 = vld [vmem:[%s3038 + $0x88] sm:$0xff]
    %v3057 = vld [vmem:[%s3038 + $0x90] sm:$0x7]
    %v3058 = vld [vmem:[%s3038 + $0x98] sm:$0x7]
    %v3060 = vsel %vm74, %v3057, 0
    %v3063 = vsel %vm74, %v3058, 0
    %3065 = vmatpush.msra.mxu0 0.0
    %3066 = vmatpush.msra.mxu0 0.0
    %3067 = vmatpush.msra.mxu0 0.0
    %3068 = vmatpush.msra.mxu0 0.0
    %3069 = vmatpush.msra.mxu0 0.0
    %3070 = vmatpush.msra.mxu0 0.0
    %3071 = vmatpush.msra.mxu0 %v3060
    %3072 = vmatpush.msra.mxu0 %v3055
    %3073 = vmatpush.msra.mxu0 %v3053
    %3074 = vmatpush.msra.mxu0 %v3051
    %3075 = vmatpush.msra.mxu0 %v3049
    %3076 = vmatpush.msra.mxu0 %v3047
    %3077 = vmatpush.msra.mxu0 %v3045
    %3078 = vmatpush.msra.mxu0 %v3043
    %3079 = vmatpush.msra.mxu0 %v3041
    %3080 = vmatpush.msra.mxu0 %v3039
    %3081 = vmatmul.f32.gmra.mxu0 %v69
    %v3082 = vpop.f32.mrf.mxu0
    %v3083 = vadd.f32 %v60, %v3082
    %3084 = vmatmul.f32.gmra.mxu0 %v72
    %v3085 = vpop.f32.mrf.mxu0
    %v3086 = vadd.f32 %v65, %v3085
    %3087 = vdwg.mxu0
    %3088 = vmatpush.msra.mxu0 0.0
    %3089 = vmatpush.msra.mxu0 0.0
    %3090 = vmatpush.msra.mxu0 0.0
    %3091 = vmatpush.msra.mxu0 0.0
    %3092 = vmatpush.msra.mxu0 0.0
    %3093 = vmatpush.msra.mxu0 0.0
    %3094 = vmatpush.msra.mxu0 %v3063
    %3095 = vmatpush.msra.mxu0 %v3056
    %3096 = vmatpush.msra.mxu0 %v3054
    %3097 = vmatpush.msra.mxu0 %v3052
    %3098 = vmatpush.msra.mxu0 %v3050
    %3099 = vmatpush.msra.mxu0 %v3048
    %3100 = vmatpush.msra.mxu0 %v3046
    %3101 = vmatpush.msra.mxu0 %v3044
    %3102 = vmatpush.msra.mxu0 %v3042
    %3103 = vmatpush.msra.mxu0 %v3040
    %3104 = vmatmul.f32.gmra.mxu0 %v69
    %v3105 = vpop.f32.mrf.mxu0
    %v3106 = vadd.f32 %v60, %v3105
    %3107 = vmatmul.f32.gmra.mxu0 %v72
    %v3108 = vpop.f32.mrf.mxu0
    %v3109 = vadd.f32 %v65, %v3108
    %3110 = vdwg.mxu0
    %v3111 = vmax.f32 %v3083, 0.0
    %v3112 = vmax.f32 %v3106, 0.0
    %v3113 = vmax.f32 %v3086, 0.0
    %v3114 = vmax.f32 %v3109, 0.0
    %s3115 = scalar_lea.vmem %s3, 352
    %v3116 = vld [vmem:[%s3115] sm:$0xff]
    %v3117 = vld [vmem:[%s3115 + $0x8] sm:$0xff]
    %v3119 = vsel %vm213, %v3116, 0
    %v3122 = vsel %vm213, %v3117, 0
    %3124 = vmatpush.msra.mxu0 0.0
    %3125 = vmatpush.msra.mxu0 0.0
    %3126 = vmatpush.msra.mxu0 0.0
    %3127 = vmatpush.msra.mxu0 0.0
    %3128 = vmatpush.msra.mxu0 0.0
    %3129 = vmatpush.msra.mxu0 0.0
    %3130 = vmatpush.msra.mxu0 0.0
    %3131 = vmatpush.msra.mxu0 0.0
    %3132 = vmatpush.msra.mxu0 0.0
    %3133 = vmatpush.msra.mxu0 0.0
    %3134 = vmatpush.msra.mxu0 0.0
    %3135 = vmatpush.msra.mxu0 0.0
    %3136 = vmatpush.msra.mxu0 0.0
    %3137 = vmatpush.msra.mxu0 0.0
    %3138 = vmatpush.msra.mxu0 %v3113
    %3139 = vmatpush.msra.mxu0 %v3111
    %3140 = vmatmul.f32.gmra.mxu0 %v3119
    %v3141 = vpop.f32.mrf.mxu0
    %v3142 = vadd.f32 0.0, %v3141
    %3143 = vmatmul.f32.gmra.mxu0 %v3122
    %v3144 = vpop.f32.mrf.mxu0
    %v3145 = vadd.f32 0.0, %v3144
    %3146 = vdwg.mxu0
    %3147 = vmatpush.msra.mxu0 0.0
    %3148 = vmatpush.msra.mxu0 0.0
    %3149 = vmatpush.msra.mxu0 0.0
    %3150 = vmatpush.msra.mxu0 0.0
    %3151 = vmatpush.msra.mxu0 0.0
    %3152 = vmatpush.msra.mxu0 0.0
    %3153 = vmatpush.msra.mxu0 0.0
    %3154 = vmatpush.msra.mxu0 0.0
    %3155 = vmatpush.msra.mxu0 0.0
    %3156 = vmatpush.msra.mxu0 0.0
    %3157 = vmatpush.msra.mxu0 0.0
    %3158 = vmatpush.msra.mxu0 0.0
    %3159 = vmatpush.msra.mxu0 0.0
    %3160 = vmatpush.msra.mxu0 0.0
    %3161 = vmatpush.msra.mxu0 %v3114
    %3162 = vmatpush.msra.mxu0 %v3112
    %3163 = vmatmul.f32.gmra.mxu0 %v3119
    %v3164 = vpop.f32.mrf.mxu0
    %v3165 = vadd.f32 0.0, %v3164
    %3166 = vmatmul.f32.gmra.mxu0 %v3122
    %v3167 = vpop.f32.mrf.mxu0
    %v3168 = vadd.f32 0.0, %v3167
    %3169 = vdwg.mxu0
    %v3170 = vadd.f32 %v3034, %v3142
    %v3171 = vadd.f32 %v3035, %v3165
    %v3172 = vadd.f32 %v3036, %v3145
    %v3173 = vadd.f32 %v3037, %v3168
    %s3174 = scalar_lea.vmem %s0, 3680
    %v3175 = vld [vmem:[%s3174] sm:$0xff]
    %v3176 = vld [vmem:[%s3174 + $0x8] sm:$0xff]
    %v3177 = vld [vmem:[%s3174 + $0x10] sm:$0xff]
    %v3178 = vld [vmem:[%s3174 + $0x18] sm:$0xff]
    %v3179 = vld [vmem:[%s3174 + $0x20] sm:$0xff]
    %v3180 = vld [vmem:[%s3174 + $0x28] sm:$0xff]
    %v3181 = vld [vmem:[%s3174 + $0x30] sm:$0xff]
    %v3182 = vld [vmem:[%s3174 + $0x38] sm:$0xff]
    %v3183 = vld [vmem:[%s3174 + $0x40] sm:$0xff]
    %v3184 = vld [vmem:[%s3174 + $0x48] sm:$0xff]
    %v3185 = vld [vmem:[%s3174 + $0x50] sm:$0xff]
    %v3186 = vld [vmem:[%s3174 + $0x58] sm:$0xff]
    %v3187 = vld [vmem:[%s3174 + $0x60] sm:$0xff]
    %v3188 = vld [vmem:[%s3174 + $0x68] sm:$0xff]
    %v3189 = vld [vmem:[%s3174 + $0x70] sm:$0xff]
    %v3190 = vld [vmem:[%s3174 + $0x78] sm:$0xff]
    %v3191 = vld [vmem:[%s3174 + $0x80] sm:$0xff]
    %v3192 = vld [vmem:[%s3174 + $0x88] sm:$0xff]
    %v3193 = vld [vmem:[%s3174 + $0x90] sm:$0x7]
    %v3194 = vld [vmem:[%s3174 + $0x98] sm:$0x7]
    %v3196 = vsel %vm74, %v3193, 0
    %v3199 = vsel %vm74, %v3194, 0
    %3201 = vmatpush.msra.mxu0 0.0
    %3202 = vmatpush.msra.mxu0 0.0
    %3203 = vmatpush.msra.mxu0 0.0
    %3204 = vmatpush.msra.mxu0 0.0
    %3205 = vmatpush.msra.mxu0 0.0
    %3206 = vmatpush.msra.mxu0 0.0
    %3207 = vmatpush.msra.mxu0 %v3196
    %3208 = vmatpush.msra.mxu0 %v3191
    %3209 = vmatpush.msra.mxu0 %v3189
    %3210 = vmatpush.msra.mxu0 %v3187
    %3211 = vmatpush.msra.mxu0 %v3185
    %3212 = vmatpush.msra.mxu0 %v3183
    %3213 = vmatpush.msra.mxu0 %v3181
    %3214 = vmatpush.msra.mxu0 %v3179
    %3215 = vmatpush.msra.mxu0 %v3177
    %3216 = vmatpush.msra.mxu0 %v3175
    %3217 = vmatmul.f32.gmra.mxu0 %v69
    %v3218 = vpop.f32.mrf.mxu0
    %v3219 = vadd.f32 %v60, %v3218
    %3220 = vmatmul.f32.gmra.mxu0 %v72
    %v3221 = vpop.f32.mrf.mxu0
    %v3222 = vadd.f32 %v65, %v3221
    %3223 = vdwg.mxu0
    %3224 = vmatpush.msra.mxu0 0.0
    %3225 = vmatpush.msra.mxu0 0.0
    %3226 = vmatpush.msra.mxu0 0.0
    %3227 = vmatpush.msra.mxu0 0.0
    %3228 = vmatpush.msra.mxu0 0.0
    %3229 = vmatpush.msra.mxu0 0.0
    %3230 = vmatpush.msra.mxu0 %v3199
    %3231 = vmatpush.msra.mxu0 %v3192
    %3232 = vmatpush.msra.mxu0 %v3190
    %3233 = vmatpush.msra.mxu0 %v3188
    %3234 = vmatpush.msra.mxu0 %v3186
    %3235 = vmatpush.msra.mxu0 %v3184
    %3236 = vmatpush.msra.mxu0 %v3182
    %3237 = vmatpush.msra.mxu0 %v3180
    %3238 = vmatpush.msra.mxu0 %v3178
    %3239 = vmatpush.msra.mxu0 %v3176
    %3240 = vmatmul.f32.gmra.mxu0 %v69
    %v3241 = vpop.f32.mrf.mxu0
    %v3242 = vadd.f32 %v60, %v3241
    %3243 = vmatmul.f32.gmra.mxu0 %v72
    %v3244 = vpop.f32.mrf.mxu0
    %v3245 = vadd.f32 %v65, %v3244
    %3246 = vdwg.mxu0
    %v3247 = vmax.f32 %v3219, 0.0
    %v3248 = vmax.f32 %v3242, 0.0
    %v3249 = vmax.f32 %v3222, 0.0
    %v3250 = vmax.f32 %v3245, 0.0
    %s3251 = scalar_lea.vmem %s3, 368
    %v3252 = vld [vmem:[%s3251] sm:$0xff]
    %v3253 = vld [vmem:[%s3251 + $0x8] sm:$0xff]
    %v3255 = vsel %vm213, %v3252, 0
    %v3258 = vsel %vm213, %v3253, 0
    %3260 = vmatpush.msra.mxu0 0.0
    %3261 = vmatpush.msra.mxu0 0.0
    %3262 = vmatpush.msra.mxu0 0.0
    %3263 = vmatpush.msra.mxu0 0.0
    %3264 = vmatpush.msra.mxu0 0.0
    %3265 = vmatpush.msra.mxu0 0.0
    %3266 = vmatpush.msra.mxu0 0.0
    %3267 = vmatpush.msra.mxu0 0.0
    %3268 = vmatpush.msra.mxu0 0.0
    %3269 = vmatpush.msra.mxu0 0.0
    %3270 = vmatpush.msra.mxu0 0.0
    %3271 = vmatpush.msra.mxu0 0.0
    %3272 = vmatpush.msra.mxu0 0.0
    %3273 = vmatpush.msra.mxu0 0.0
    %3274 = vmatpush.msra.mxu0 %v3249
    %3275 = vmatpush.msra.mxu0 %v3247
    %3276 = vmatmul.f32.gmra.mxu0 %v3255
    %v3277 = vpop.f32.mrf.mxu0
    %v3278 = vadd.f32 0.0, %v3277
    %3279 = vmatmul.f32.gmra.mxu0 %v3258
    %v3280 = vpop.f32.mrf.mxu0
    %v3281 = vadd.f32 0.0, %v3280
    %3282 = vdwg.mxu0
    %3283 = vmatpush.msra.mxu0 0.0
    %3284 = vmatpush.msra.mxu0 0.0
    %3285 = vmatpush.msra.mxu0 0.0
    %3286 = vmatpush.msra.mxu0 0.0
    %3287 = vmatpush.msra.mxu0 0.0
    %3288 = vmatpush.msra.mxu0 0.0
    %3289 = vmatpush.msra.mxu0 0.0
    %3290 = vmatpush.msra.mxu0 0.0
    %3291 = vmatpush.msra.mxu0 0.0
    %3292 = vmatpush.msra.mxu0 0.0
    %3293 = vmatpush.msra.mxu0 0.0
    %3294 = vmatpush.msra.mxu0 0.0
    %3295 = vmatpush.msra.mxu0 0.0
    %3296 = vmatpush.msra.mxu0 0.0
    %3297 = vmatpush.msra.mxu0 %v3250
    %3298 = vmatpush.msra.mxu0 %v3248
    %3299 = vmatmul.f32.gmra.mxu0 %v3255
    %v3300 = vpop.f32.mrf.mxu0
    %v3301 = vadd.f32 0.0, %v3300
    %3302 = vmatmul.f32.gmra.mxu0 %v3258
    %v3303 = vpop.f32.mrf.mxu0
    %v3304 = vadd.f32 0.0, %v3303
    %3305 = vdwg.mxu0
    %v3306 = vadd.f32 %v3170, %v3278
    %v3307 = vadd.f32 %v3171, %v3301
    %v3308 = vadd.f32 %v3172, %v3281
    %v3309 = vadd.f32 %v3173, %v3304
    %s3310 = scalar_lea.vmem %s0, 3840
    %v3311 = vld [vmem:[%s3310] sm:$0xff]
    %v3312 = vld [vmem:[%s3310 + $0x8] sm:$0xff]
    %v3313 = vld [vmem:[%s3310 + $0x10] sm:$0xff]
    %v3314 = vld [vmem:[%s3310 + $0x18] sm:$0xff]
    %v3315 = vld [vmem:[%s3310 + $0x20] sm:$0xff]
    %v3316 = vld [vmem:[%s3310 + $0x28] sm:$0xff]
    %v3317 = vld [vmem:[%s3310 + $0x30] sm:$0xff]
    %v3318 = vld [vmem:[%s3310 + $0x38] sm:$0xff]
    %v3319 = vld [vmem:[%s3310 + $0x40] sm:$0xff]
    %v3320 = vld [vmem:[%s3310 + $0x48] sm:$0xff]
    %v3321 = vld [vmem:[%s3310 + $0x50] sm:$0xff]
    %v3322 = vld [vmem:[%s3310 + $0x58] sm:$0xff]
    %v3323 = vld [vmem:[%s3310 + $0x60] sm:$0xff]
    %v3324 = vld [vmem:[%s3310 + $0x68] sm:$0xff]
    %v3325 = vld [vmem:[%s3310 + $0x70] sm:$0xff]
    %v3326 = vld [vmem:[%s3310 + $0x78] sm:$0xff]
    %v3327 = vld [vmem:[%s3310 + $0x80] sm:$0xff]
    %v3328 = vld [vmem:[%s3310 + $0x88] sm:$0xff]
    %v3329 = vld [vmem:[%s3310 + $0x90] sm:$0x7]
    %v3330 = vld [vmem:[%s3310 + $0x98] sm:$0x7]
    %v3332 = vsel %vm74, %v3329, 0
    %v3335 = vsel %vm74, %v3330, 0
    %3337 = vmatpush.msra.mxu0 0.0
    %3338 = vmatpush.msra.mxu0 0.0
    %3339 = vmatpush.msra.mxu0 0.0
    %3340 = vmatpush.msra.mxu0 0.0
    %3341 = vmatpush.msra.mxu0 0.0
    %3342 = vmatpush.msra.mxu0 0.0
    %3343 = vmatpush.msra.mxu0 %v3332
    %3344 = vmatpush.msra.mxu0 %v3327
    %3345 = vmatpush.msra.mxu0 %v3325
    %3346 = vmatpush.msra.mxu0 %v3323
    %3347 = vmatpush.msra.mxu0 %v3321
    %3348 = vmatpush.msra.mxu0 %v3319
    %3349 = vmatpush.msra.mxu0 %v3317
    %3350 = vmatpush.msra.mxu0 %v3315
    %3351 = vmatpush.msra.mxu0 %v3313
    %3352 = vmatpush.msra.mxu0 %v3311
    %3353 = vmatmul.f32.gmra.mxu0 %v69
    %v3354 = vpop.f32.mrf.mxu0
    %v3355 = vadd.f32 %v60, %v3354
    %3356 = vmatmul.f32.gmra.mxu0 %v72
    %v3357 = vpop.f32.mrf.mxu0
    %v3358 = vadd.f32 %v65, %v3357
    %3359 = vdwg.mxu0
    %3360 = vmatpush.msra.mxu0 0.0
    %3361 = vmatpush.msra.mxu0 0.0
    %3362 = vmatpush.msra.mxu0 0.0
    %3363 = vmatpush.msra.mxu0 0.0
    %3364 = vmatpush.msra.mxu0 0.0
    %3365 = vmatpush.msra.mxu0 0.0
    %3366 = vmatpush.msra.mxu0 %v3335
    %3367 = vmatpush.msra.mxu0 %v3328
    %3368 = vmatpush.msra.mxu0 %v3326
    %3369 = vmatpush.msra.mxu0 %v3324
    %3370 = vmatpush.msra.mxu0 %v3322
    %3371 = vmatpush.msra.mxu0 %v3320
    %3372 = vmatpush.msra.mxu0 %v3318
    %3373 = vmatpush.msra.mxu0 %v3316
    %3374 = vmatpush.msra.mxu0 %v3314
    %3375 = vmatpush.msra.mxu0 %v3312
    %3376 = vmatmul.f32.gmra.mxu0 %v69
    %v3377 = vpop.f32.mrf.mxu0
    %v3378 = vadd.f32 %v60, %v3377
    %3379 = vmatmul.f32.gmra.mxu0 %v72
    %v3380 = vpop.f32.mrf.mxu0
    %v3381 = vadd.f32 %v65, %v3380
    %3382 = vdwg.mxu0
    %v3383 = vmax.f32 %v3355, 0.0
    %v3384 = vmax.f32 %v3378, 0.0
    %v3385 = vmax.f32 %v3358, 0.0
    %v3386 = vmax.f32 %v3381, 0.0
    %s3387 = scalar_lea.vmem %s3, 384
    %v3388 = vld [vmem:[%s3387] sm:$0xff]
    %v3389 = vld [vmem:[%s3387 + $0x8] sm:$0xff]
    %v3391 = vsel %vm213, %v3388, 0
    %v3394 = vsel %vm213, %v3389, 0
    %3396 = vmatpush.msra.mxu0 0.0
    %3397 = vmatpush.msra.mxu0 0.0
    %3398 = vmatpush.msra.mxu0 0.0
    %3399 = vmatpush.msra.mxu0 0.0
    %3400 = vmatpush.msra.mxu0 0.0
    %3401 = vmatpush.msra.mxu0 0.0
    %3402 = vmatpush.msra.mxu0 0.0
    %3403 = vmatpush.msra.mxu0 0.0
    %3404 = vmatpush.msra.mxu0 0.0
    %3405 = vmatpush.msra.mxu0 0.0
    %3406 = vmatpush.msra.mxu0 0.0
    %3407 = vmatpush.msra.mxu0 0.0
    %3408 = vmatpush.msra.mxu0 0.0
    %3409 = vmatpush.msra.mxu0 0.0
    %3410 = vmatpush.msra.mxu0 %v3385
    %3411 = vmatpush.msra.mxu0 %v3383
    %3412 = vmatmul.f32.gmra.mxu0 %v3391
    %v3413 = vpop.f32.mrf.mxu0
    %v3414 = vadd.f32 0.0, %v3413
    %3415 = vmatmul.f32.gmra.mxu0 %v3394
    %v3416 = vpop.f32.mrf.mxu0
    %v3417 = vadd.f32 0.0, %v3416
    %3418 = vdwg.mxu0
    %3419 = vmatpush.msra.mxu0 0.0
    %3420 = vmatpush.msra.mxu0 0.0
    %3421 = vmatpush.msra.mxu0 0.0
    %3422 = vmatpush.msra.mxu0 0.0
    %3423 = vmatpush.msra.mxu0 0.0
    %3424 = vmatpush.msra.mxu0 0.0
    %3425 = vmatpush.msra.mxu0 0.0
    %3426 = vmatpush.msra.mxu0 0.0
    %3427 = vmatpush.msra.mxu0 0.0
    %3428 = vmatpush.msra.mxu0 0.0
    %3429 = vmatpush.msra.mxu0 0.0
    %3430 = vmatpush.msra.mxu0 0.0
    %3431 = vmatpush.msra.mxu0 0.0
    %3432 = vmatpush.msra.mxu0 0.0
    %3433 = vmatpush.msra.mxu0 %v3386
    %3434 = vmatpush.msra.mxu0 %v3384
    %3435 = vmatmul.f32.gmra.mxu0 %v3391
    %v3436 = vpop.f32.mrf.mxu0
    %v3437 = vadd.f32 0.0, %v3436
    %3438 = vmatmul.f32.gmra.mxu0 %v3394
    %v3439 = vpop.f32.mrf.mxu0
    %v3440 = vadd.f32 0.0, %v3439
    %3441 = vdwg.mxu0
    %v3442 = vadd.f32 %v3306, %v3414
    %v3443 = vadd.f32 %v3307, %v3437
    %v3444 = vadd.f32 %v3308, %v3417
    %v3445 = vadd.f32 %v3309, %v3440
    %v3446 = vld [vmem:[%s4] sm:$0xff]
    %v3447 = vld [vmem:[%s4 + $0x8] sm:$0xff]
    %3449 = vset.pattern.permute.xlu0 0
    %3450 = vperm.xlu0 %3449, %v3446
    %v3451 = vpop.permute.xlu0 %3450
    %3454 = vset.pattern.permute.xlu0 0
    %3455 = vperm.xlu0 %3454, %v3447
    %v3456 = vpop.permute.xlu0 %3455
    %v3458 = vadd.f32 %v3442, %v3451
    %v3459 = vadd.f32 %v3443, %v3451
    %v3460 = vadd.f32 %v3444, %v3456
    %v3461 = vadd.f32 %v3445, %v3456
    %v3462 = vmax.f32 %v3458, 0.0
    %v3463 = vmax.f32 %v3459, 0.0
    %v3464 = vmax.f32 %v3460, 0.0
    %v3465 = vmax.f32 %v3461, 0.0
    %vm3466 = vcmask 811008
    %3467 = vst.msk [vmem:[#allocation2] sm:$0x1] %vm3466, %v3462
    %v3469 = vrot.slane %v3462, 7
    %v3470 = vrot.slane %v3469, 2
    %3471 = vrot.lane.b32.xlu0 %v3470, 100
    %v3472 = vpop.permute.xlu0 %3471
    %v3473 = vrot.slane %v3472, 6
    %vm3474 = vcmask 818176
    %v3475 = vsel %vm3474, %v3473, %v3472
    %vm3477 = vcmask 1041184
    %vm3478 = vcmask 583682
    %vm3479 = vmor %vm3478, %vm3477
    %3480 = vst.msk [vmem:[#allocation2] sm:$0x5] %vm3479, %v3475
    %3481 = vst.sshfl [vmem:[#allocation1] sm:$0xff pattern:$0x73625140] %v3462
    %s3482 = scalar_lea.vmem [#allocation1], 1
    %v3483 = vld [vmem:[%s3482] ss:$4 sm:$0xff]
    %3484 = vrot.lane.b32.xlu0 %v3483, 72
    %v3485 = vpop.permute.xlu0 %3484
    %v3486 = vrot.slane %v3485, 6
    %vm3487 = vcmask 588800
    %v3488 = vsel %vm3487, %v3486, %v3485
    %vm3490 = vcmask 1040960
    %vm3491 = vcmask 354306
    %vm3492 = vmor %vm3491, %vm3490
    %3493 = vst.msk [vmem:[#allocation2 + $0x2] sm:$0x5] %vm3492, %v3488
    %3494 = vst.sshfl [vmem:[#allocation1] sm:$0xff pattern:$0x73625140] %v3462
    %s3495 = scalar_lea.vmem [#allocation1], 1
    %v3496 = vld [vmem:[%s3495] ss:$4 sm:$0xff]
    %v3497 = vrot.slane %v3496, 7
    %v3498 = vrot.slane %v3497, 2
    %3499 = vrot.lane.b32.xlu0 %v3498, 44
    %v3500 = vpop.permute.xlu0 %3499
    %v3501 = vrot.slane %v3500, 6
    %vm3502 = vcmask 359424
    %v3503 = vsel %vm3502, %v3501, %v3500
    %vm3505 = vcmask 1040736
    %vm3506 = vcmask 124930
    %vm3507 = vmor %vm3506, %vm3505
    %3508 = vst.msk [vmem:[#allocation2 + $0x4] sm:$0x5] %vm3507, %v3503
    %3509 = vst.sshfl [vmem:[#allocation1] sm:$0xff pattern:$0x73625140] %v3462
    %s3510 = scalar_lea.vmem [#allocation1], 2
    %v3511 = vld [vmem:[%s3510] ss:$4 sm:$0xff]
    %3512 = vrot.lane.b32.xlu0 %v3511, 16
    %v3513 = vpop.permute.xlu0 %3512
    %vm3515 = vcmask 942208
    %3516 = vst.msk [vmem:[#allocation2 + $0x6] sm:$0x1] %vm3515, %v3513
    %3517 = vst.sshfl [vmem:[#allocation1] sm:$0xff pattern:$0x73625140] %v3462
    %s3518 = scalar_lea.vmem [#allocation1], 2
    %v3519 = vld [vmem:[%s3518] ss:$4 sm:$0xff]
    %v3520 = vrot.slane %v3519, 7
    %v3521 = vrot.slane %v3520, 2
    %3522 = vrot.lane.b32.xlu0 %v3521, 116
    %v3523 = vpop.permute.xlu0 %3522
    %v3524 = vrot.slane %v3523, 6
    %vm3525 = vcmask 949248
    %v3526 = vsel %vm3525, %v3524, %v3523
    %vm3528 = vcmask 1041312
    %vm3529 = vcmask 714754
    %vm3530 = vmor %vm3529, %vm3528
    %3531 = vst.msk [vmem:[#allocation2 + $0x6] sm:$0x5] %vm3530, %v3526
    %3532 = vst.sshfl [vmem:[#allocation1] sm:$0xff pattern:$0x73625140] %v3462
    %s3533 = scalar_lea.vmem [#allocation1], 3
    %v3534 = vld [vmem:[%s3533] ss:$4 sm:$0xff]
    %3535 = vrot.lane.b32.xlu0 %v3534, 88
    %v3536 = vpop.permute.xlu0 %3535
    %v3537 = vrot.slane %v3536, 6
    %vm3538 = vcmask 719872
    %v3539 = vsel %vm3538, %v3537, %v3536
    %vm3541 = vcmask 1041088
    %vm3542 = vcmask 485378
    %vm3543 = vmor %vm3542, %vm3541
    %3544 = vst.msk [vmem:[#allocation2 + $0x8] sm:$0x5] %vm3543, %v3539
    %3545 = vst.sshfl [vmem:[#allocation1] sm:$0xff pattern:$0x73625140] %v3462
    %s3546 = scalar_lea.vmem [#allocation1], 3
    %v3547 = vld [vmem:[%s3546] ss:$4 sm:$0xff]
    %v3548 = vrot.slane %v3547, 7
    %v3549 = vrot.slane %v3548, 2
    %3550 = vrot.lane.b32.xlu0 %v3549, 60
    %v3551 = vpop.permute.xlu0 %3550
    %v3552 = vrot.slane %v3551, 6
    %vm3553 = vcmask 490496
    %v3554 = vsel %vm3553, %v3552, %v3551
    %vm3556 = vcmask 1040864
    %vm3557 = vcmask 256002
    %vm3558 = vmor %vm3557, %vm3556
    %3559 = vst.msk [vmem:[#allocation2 + $0xa] sm:$0x5] %vm3558, %v3554
    %3561 = vrot.lane.b32.xlu0 %v3464, 32
    %v3562 = vpop.permute.xlu0 %3561
    %v3563 = vrot.slane %v3562, 6
    %vm3564 = vcmask 261120
    %v3565 = vsel %vm3564, %v3563, %v3562
    %vm3567 = vcmask 1040640
    %vm3568 = vcmask 26626
    %vm3569 = vmor %vm3568, %vm3567
    %3570 = vst.msk [vmem:[#allocation2 + $0xc] sm:$0x5] %vm3569, %v3565
    %v3571 = vrot.slane %v3464, 7
    %v3572 = vrot.slane %v3571, 2
    %3573 = vrot.lane.b32.xlu0 %v3572, 4
    %v3574 = vpop.permute.xlu0 %3573
    %vm3576 = vcmask 843808
    %3577 = vst.msk [vmem:[#allocation2 + $0xe] sm:$0x1] %vm3576, %v3574
    %3578 = vst.sshfl [vmem:[#allocation1] sm:$0xff pattern:$0x73625140] %v3464
    %s3579 = scalar_lea.vmem [#allocation1], 1
    %v3580 = vld [vmem:[%s3579] ss:$4 sm:$0xff]
    %3581 = vrot.lane.b32.xlu0 %v3580, 104
    %v3582 = vpop.permute.xlu0 %3581
    %v3583 = vrot.slane %v3582, 6
    %vm3584 = vcmask 850944
    %v3585 = vsel %vm3584, %v3583, %v3582
    %vm3587 = vcmask 1041216
    %vm3588 = vcmask 616450
    %vm3589 = vmor %vm3588, %vm3587
    %3590 = vst.msk [vmem:[#allocation2 + $0xe] sm:$0x5] %vm3589, %v3585
    %3591 = vst.sshfl [vmem:[#allocation1] sm:$0xff pattern:$0x73625140] %v3464
    %s3592 = scalar_lea.vmem [#allocation1], 1
    %v3593 = vld [vmem:[%s3592] ss:$4 sm:$0xff]
    %v3594 = vrot.slane %v3593, 7
    %v3595 = vrot.slane %v3594, 2
    %3596 = vrot.lane.b32.xlu0 %v3595, 76
    %v3597 = vpop.permute.xlu0 %3596
    %v3598 = vrot.slane %v3597, 6
    %vm3599 = vcmask 621568
    %v3600 = vsel %vm3599, %v3598, %v3597
    %vm3602 = vcmask 1040992
    %vm3603 = vcmask 387074
    %vm3604 = vmor %vm3603, %vm3602
    %3605 = vst.msk [vmem:[#allocation2 + $0x10] sm:$0x5] %vm3604, %v3600
    %3606 = vst.sshfl [vmem:[#allocation1] sm:$0xff pattern:$0x73625140] %v3464
    %s3607 = scalar_lea.vmem [#allocation1], 2
    %v3608 = vld [vmem:[%s3607] ss:$4 sm:$0xff]
    %3609 = vrot.lane.b32.xlu0 %v3608, 48
    %v3610 = vpop.permute.xlu0 %3609
    %v3611 = vrot.slane %v3610, 6
    %vm3612 = vcmask 392192
    %v3613 = vsel %vm3612, %v3611, %v3610
    %vm3615 = vcmask 1040768
    %vm3616 = vcmask 157698
    %vm3617 = vmor %vm3616, %vm3615
    %3618 = vst.msk [vmem:[#allocation2 + $0x12] sm:$0x5] %vm3617, %v3613
    %3619 = vst.sshfl [vmem:[#allocation1] sm:$0xff pattern:$0x73625140] %v3464
    %s3620 = scalar_lea.vmem [#allocation1], 2
    %v3621 = vld [vmem:[%s3620] ss:$4 sm:$0xff]
    %v3622 = vrot.slane %v3621, 7
    %v3623 = vrot.slane %v3622, 2
    %3624 = vrot.lane.b32.xlu0 %v3623, 20
    %v3625 = vpop.permute.xlu0 %3624
    %vm3627 = vcmask 975008
    %3628 = vst.msk [vmem:[#allocation2 + $0x14] sm:$0x1] %vm3627, %v3625
    %3629 = vst.sshfl [vmem:[#allocation1] sm:$0xff pattern:$0x73625140] %v3464
    %s3630 = scalar_lea.vmem [#allocation1], 3
    %v3631 = vld [vmem:[%s3630] ss:$4 sm:$0xff]
    %3632 = vrot.lane.b32.xlu0 %v3631, 120
    %v3633 = vpop.permute.xlu0 %3632
    %v3634 = vrot.slane %v3633, 6
    %vm3635 = vcmask 982016
    %v3636 = vsel %vm3635, %v3634, %v3633
    %vm3638 = vcmask 1041344
    %vm3639 = vcmask 747522
    %vm3640 = vmor %vm3639, %vm3638
    %3641 = vst.msk [vmem:[#allocation2 + $0x14] sm:$0x5] %vm3640, %v3636
    %3642 = vst.sshfl [vmem:[#allocation1] sm:$0xff pattern:$0x73625140] %v3464
    %s3643 = scalar_lea.vmem [#allocation1], 3
    %v3644 = vld [vmem:[%s3643] ss:$4 sm:$0xff]
    %v3645 = vrot.slane %v3644, 7
    %v3646 = vrot.slane %v3645, 2
    %3647 = vrot.lane.b32.xlu0 %v3646, 92
    %v3648 = vpop.permute.xlu0 %3647
    %v3649 = vrot.slane %v3648, 6
    %vm3650 = vcmask 752640
    %v3651 = vsel %vm3650, %v3649, %v3648
    %vm3653 = vcmask 1041120
    %vm3654 = vcmask 518146
    %vm3655 = vmor %vm3654, %vm3653
    %3656 = vst.msk [vmem:[#allocation2 + $0x16] sm:$0x5] %vm3655, %v3651
    %v3658 = vrot.slane %v3463, 6
    %vm3659 = vcmask 1041408
    %v3660 = vsel %vm3659, %v3462, %v3658
    %3661 = vrot.lane.b32.xlu0 %v3660, 28
    %v3662 = vpop.permute.xlu0 %3661
    %v3663 = vrot.slane %v3662, 2
    %vm3664 = vcmask 228352
    %v3665 = vsel %vm3664, %v3662, %v3663
    %3667 = vst.msk [vmem:[#allocation2 + $0x1] sm:$0x1] %vm3466, %v3665
    %v3668 = vrot.slane %v3660, 7
    %v3669 = vrot.slane %v3668, 2
    %3671 = vst.msk [vmem:[#allocation2 + $0x1] sm:$0x5] %vm3479, %v3669
    %3672 = vst.sshfl [vmem:[#allocation1] sm:$0xff pattern:$0x73625140] %v3462
    %3673 = vst.sshfl [vmem:[#allocation1 + $0x8] sm:$0xff pattern:$0x73625140] %v3463
    %s3674 = scalar_lea.vmem [#allocation1], 1
    %v3675 = vld [vmem:[%s3674] ss:$4 sm:$0xff]
    %3676 = vrot.lane.b32.xlu0 %v3675, 100
    %v3677 = vpop.permute.xlu0 %3676
    %v3678 = vrot.slane %v3677, 2
    %v3679 = vsel %vm3474, %v3677, %v3678
    %3681 = vst.msk [vmem:[#allocation2 + $0x3] sm:$0x5] %vm3492, %v3679
    %3682 = vst.sshfl [vmem:[#allocation1] sm:$0xff pattern:$0x73625140] %v3462
    %3683 = vst.sshfl [vmem:[#allocation1 + $0x8] sm:$0xff pattern:$0x73625140] %v3463
    %s3684 = scalar_lea.vmem [#allocation1], 1
    %v3685 = vld [vmem:[%s3684] ss:$4 sm:$0xff]
    %v3686 = vrot.slane %v3685, 7
    %v3687 = vrot.slane %v3686, 2
    %3688 = vrot.lane.b32.xlu0 %v3687, 72
    %v3689 = vpop.permute.xlu0 %3688
    %v3690 = vrot.slane %v3689, 2
    %v3691 = vsel %vm3487, %v3689, %v3690
    %3693 = vst.msk [vmem:[#allocation2 + $0x5] sm:$0x5] %vm3507, %v3691
    %3694 = vst.sshfl [vmem:[#allocation1] sm:$0xff pattern:$0x73625140] %v3462
    %3695 = vst.sshfl [vmem:[#allocation1 + $0x8] sm:$0xff pattern:$0x73625140] %v3463
    %s3696 = scalar_lea.vmem [#allocation1], 2
    %v3697 = vld [vmem:[%s3696] ss:$4 sm:$0xff]
    %3698 = vrot.lane.b32.xlu0 %v3697, 44
    %v3699 = vpop.permute.xlu0 %3698
    %v3700 = vrot.slane %v3699, 2
    %v3701 = vsel %vm3502, %v3699, %v3700
    %3703 = vst.msk [vmem:[#allocation2 + $0x7] sm:$0x1] %vm3515, %v3701
    %3704 = vst.sshfl [vmem:[#allocation1] sm:$0xff pattern:$0x73625140] %v3462
    %3705 = vst.sshfl [vmem:[#allocation1 + $0x8] sm:$0xff pattern:$0x73625140] %v3463
    %s3706 = scalar_lea.vmem [#allocation1], 2
    %v3707 = vld [vmem:[%s3706] ss:$4 sm:$0xff]
    %v3708 = vrot.slane %v3707, 7
    %v3709 = vrot.slane %v3708, 2
    %3710 = vrot.lane.b32.xlu0 %v3709, 16
    %v3711 = vpop.permute.xlu0 %3710
    %v3712 = vrot.slane %v3711, 6
    %v3713 = vsel %vm213, %v3712, %v3711
    %3715 = vst.msk [vmem:[#allocation2 + $0x7] sm:$0x5] %vm3530, %v3713
    %3716 = vst.sshfl [vmem:[#allocation1] sm:$0xff pattern:$0x73625140] %v3462
    %3717 = vst.sshfl [vmem:[#allocation1 + $0x8] sm:$0xff pattern:$0x73625140] %v3463
    %s3718 = scalar_lea.vmem [#allocation1], 3
    %v3719 = vld [vmem:[%s3718] ss:$4 sm:$0xff]
    %3720 = vrot.lane.b32.xlu0 %v3719, 116
    %v3721 = vpop.permute.xlu0 %3720
    %v3722 = vrot.slane %v3721, 2
    %v3723 = vsel %vm3525, %v3721, %v3722
    %3725 = vst.msk [vmem:[#allocation2 + $0x9] sm:$0x5] %vm3543, %v3723
    %3726 = vst.sshfl [vmem:[#allocation1] sm:$0xff pattern:$0x73625140] %v3462
    %3727 = vst.sshfl [vmem:[#allocation1 + $0x8] sm:$0xff pattern:$0x73625140] %v3463
    %s3728 = scalar_lea.vmem [#allocation1], 3
    %v3729 = vld [vmem:[%s3728] ss:$4 sm:$0xff]
    %v3730 = vrot.slane %v3729, 7
    %v3731 = vrot.slane %v3730, 2
    %3732 = vrot.lane.b32.xlu0 %v3731, 88
    %v3733 = vpop.permute.xlu0 %3732
    %v3734 = vrot.slane %v3733, 2
    %v3735 = vsel %vm3538, %v3733, %v3734
    %3737 = vst.msk [vmem:[#allocation2 + $0xb] sm:$0x5] %vm3558, %v3735
    %v3739 = vrot.slane %v3465, 6
    %v3740 = vsel %vm3659, %v3464, %v3739
    %3741 = vrot.lane.b32.xlu0 %v3740, 60
    %v3742 = vpop.permute.xlu0 %3741
    %v3743 = vrot.slane %v3742, 2
    %v3744 = vsel %vm3553, %v3742, %v3743
    %3746 = vst.msk [vmem:[#allocation2 + $0xd] sm:$0x5] %vm3569, %v3744
    %v3747 = vrot.slane %v3740, 7
    %v3748 = vrot.slane %v3747, 2
    %3749 = vrot.lane.b32.xlu0 %v3748, 32
    %v3750 = vpop.permute.xlu0 %3749
    %v3751 = vrot.slane %v3750, 2
    %v3752 = vsel %vm3564, %v3750, %v3751
    %3754 = vst.msk [vmem:[#allocation2 + $0xf] sm:$0x1] %vm3576, %v3752
    %3755 = vst.sshfl [vmem:[#allocation1] sm:$0xff pattern:$0x73625140] %v3464
    %3756 = vst.sshfl [vmem:[#allocation1 + $0x8] sm:$0xff pattern:$0x73625140] %v3465
    %s3757 = scalar_lea.vmem [#allocation1], 1
    %v3758 = vld [vmem:[%s3757] ss:$4 sm:$0xff]
    %3759 = vrot.lane.b32.xlu0 %v3758, 4
    %v3760 = vpop.permute.xlu0 %3759
    %v3761 = vrot.slane %v3760, 6
    %vm3762 = vcmask 31744
    %v3763 = vsel %vm3762, %v3761, %v3760
    %3765 = vst.msk [vmem:[#allocation2 + $0xf] sm:$0x5] %vm3589, %v3763
    %3766 = vst.sshfl [vmem:[#allocation1] sm:$0xff pattern:$0x73625140] %v3464
    %3767 = vst.sshfl [vmem:[#allocation1 + $0x8] sm:$0xff pattern:$0x73625140] %v3465
    %s3768 = scalar_lea.vmem [#allocation1], 1
    %v3769 = vld [vmem:[%s3768] ss:$4 sm:$0xff]
    %v3770 = vrot.slane %v3769, 7
    %v3771 = vrot.slane %v3770, 2
    %3772 = vrot.lane.b32.xlu0 %v3771, 104
    %v3773 = vpop.permute.xlu0 %3772
    %v3774 = vrot.slane %v3773, 2
    %v3775 = vsel %vm3584, %v3773, %v3774
    %3777 = vst.msk [vmem:[#allocation2 + $0x11] sm:$0x5] %vm3604, %v3775
    %3778 = vst.sshfl [vmem:[#allocation1] sm:$0xff pattern:$0x73625140] %v3464
    %3779 = vst.sshfl [vmem:[#allocation1 + $0x8] sm:$0xff pattern:$0x73625140] %v3465
    %s3780 = scalar_lea.vmem [#allocation1], 2
    %v3781 = vld [vmem:[%s3780] ss:$4 sm:$0xff]
    %3782 = vrot.lane.b32.xlu0 %v3781, 76
    %v3783 = vpop.permute.xlu0 %3782
    %v3784 = vrot.slane %v3783, 2
    %v3785 = vsel %vm3599, %v3783, %v3784
    %3787 = vst.msk [vmem:[#allocation2 + $0x13] sm:$0x5] %vm3617, %v3785
    %3788 = vst.sshfl [vmem:[#allocation1] sm:$0xff pattern:$0x73625140] %v3464
    %3789 = vst.sshfl [vmem:[#allocation1 + $0x8] sm:$0xff pattern:$0x73625140] %v3465
    %s3790 = scalar_lea.vmem [#allocation1], 2
    %v3791 = vld [vmem:[%s3790] ss:$4 sm:$0xff]
    %v3792 = vrot.slane %v3791, 7
    %v3793 = vrot.slane %v3792, 2
    %3794 = vrot.lane.b32.xlu0 %v3793, 48
    %v3795 = vpop.permute.xlu0 %3794
    %v3796 = vrot.slane %v3795, 2
    %v3797 = vsel %vm3612, %v3795, %v3796
    %3799 = vst.msk [vmem:[#allocation2 + $0x15] sm:$0x1] %vm3627, %v3797
    %3800 = vst.sshfl [vmem:[#allocation1] sm:$0xff pattern:$0x73625140] %v3464
    %3801 = vst.sshfl [vmem:[#allocation1 + $0x8] sm:$0xff pattern:$0x73625140] %v3465
    %s3802 = scalar_lea.vmem [#allocation1], 3
    %v3803 = vld [vmem:[%s3802] ss:$4 sm:$0xff]
    %3804 = vrot.lane.b32.xlu0 %v3803, 20
    %v3805 = vpop.permute.xlu0 %3804
    %v3806 = vrot.slane %v3805, 6
    %vm3807 = vcmask 162816
    %v3808 = vsel %vm3807, %v3806, %v3805
    %3810 = vst.msk [vmem:[#allocation2 + $0x15] sm:$0x5] %vm3640, %v3808
    %3811 = vst.sshfl [vmem:[#allocation1] sm:$0xff pattern:$0x73625140] %v3464
    %3812 = vst.sshfl [vmem:[#allocation1 + $0x8] sm:$0xff pattern:$0x73625140] %v3465
    %s3813 = scalar_lea.vmem [#allocation1], 3
    %v3814 = vld [vmem:[%s3813] ss:$4 sm:$0xff]
    %v3815 = vrot.slane %v3814, 7
    %v3816 = vrot.slane %v3815, 2
    %3817 = vrot.lane.b32.xlu0 %v3816, 120
    %v3818 = vpop.permute.xlu0 %3817
    %v3819 = vrot.slane %v3818, 2
    %v3820 = vsel %vm3635, %v3818, %v3819
    %3822 = vst.msk [vmem:[#allocation2 + $0x17] sm:$0x5] %vm3655, %v3820
    %v3823 = vld [vmem:[#allocation2] sm:$0xff]
    %v3824 = vld [vmem:[#allocation2 + $0x8] sm:$0xff]
    %v3825 = vld [vmem:[#allocation2 + $0x10] sm:$0xff]
    %v3826 = vld [vmem:[#allocation2 + $0x18] sm:$0x3]
    %v3827 = vld [vmem:[%s5] sm:$0xff]
    %v3828 = vld [vmem:[%s5 + $0x8] sm:$0xff]
    %v3829 = vld [vmem:[%s5 + $0x10] sm:$0xff]
    %v3830 = vld [vmem:[%s5 + $0x18] sm:$0xff]
    %v3831 = vld [vmem:[%s5 + $0x20] sm:$0xff]
    %v3832 = vld [vmem:[%s5 + $0x28] sm:$0xff]
    %v3833 = vld [vmem:[%s5 + $0x30] sm:$0xff]
    %v3834 = vld [vmem:[%s5 + $0x38] sm:$0xff]
    %v3835 = vld [vmem:[%s5 + $0x40] sm:$0xff]
    %v3836 = vld [vmem:[%s5 + $0x48] sm:$0xff]
    %v3837 = vld [vmem:[%s5 + $0x50] sm:$0xff]
    %v3838 = vld [vmem:[%s5 + $0x58] sm:$0xff]
    %v3839 = vld [vmem:[%s5 + $0x60] sm:$0xff]
    %v3840 = vld [vmem:[%s5 + $0x68] sm:$0xff]
    %v3841 = vld [vmem:[%s5 + $0x70] sm:$0xff]
    %v3842 = vld [vmem:[%s5 + $0x78] sm:$0xff]
    %v3843 = vld [vmem:[%s5 + $0x80] sm:$0xff]
    %v3844 = vld [vmem:[%s5 + $0x88] sm:$0xff]
    %v3845 = vld [vmem:[%s5 + $0x90] sm:$0xff]
    %v3846 = vld [vmem:[%s5 + $0x98] sm:$0xff]
    %v3847 = vld [vmem:[%s5 + $0xa0] sm:$0xff]
    %v3848 = vld [vmem:[%s5 + $0xa8] sm:$0xff]
    %v3849 = vld [vmem:[%s5 + $0xb0] sm:$0xff]
    %v3850 = vld [vmem:[%s5 + $0xb8] sm:$0xff]
    %v3851 = vld [vmem:[%s5 + $0xc0] sm:$0xff]
    %v3852 = vld [vmem:[%s5 + $0xc8] sm:$0xff]
    %v3853 = vld [vmem:[%s5 + $0xd0] sm:$0xff]
    %v3854 = vld [vmem:[%s5 + $0xd8] sm:$0xff]
    %v3855 = vld [vmem:[%s5 + $0xe0] sm:$0xff]
    %v3856 = vld [vmem:[%s5 + $0xe8] sm:$0xff]
    %v3857 = vld [vmem:[%s5 + $0xf0] sm:$0xff]
    %v3858 = vld [vmem:[%s5 + $0xf8] sm:$0xff]
    %v3859 = vld [vmem:[%s5 + $0x100] sm:$0xff]
    %v3860 = vld [vmem:[%s5 + $0x108] sm:$0xff]
    %v3861 = vld [vmem:[%s5 + $0x110] sm:$0xff]
    %v3862 = vld [vmem:[%s5 + $0x118] sm:$0xff]
    %v3863 = vld [vmem:[%s5 + $0x120] sm:$0xff]
    %v3864 = vld [vmem:[%s5 + $0x128] sm:$0xff]
    %v3865 = vld [vmem:[%s5 + $0x130] sm:$0xff]
    %v3866 = vld [vmem:[%s5 + $0x138] sm:$0xff]
    %v3867 = vld [vmem:[%s5 + $0x140] sm:$0xff]
    %v3868 = vld [vmem:[%s5 + $0x148] sm:$0xff]
    %v3869 = vld [vmem:[%s5 + $0x150] sm:$0xff]
    %v3870 = vld [vmem:[%s5 + $0x158] sm:$0xff]
    %v3871 = vld [vmem:[%s5 + $0x160] sm:$0xff]
    %v3872 = vld [vmem:[%s5 + $0x168] sm:$0xff]
    %v3873 = vld [vmem:[%s5 + $0x170] sm:$0xff]
    %v3874 = vld [vmem:[%s5 + $0x178] sm:$0xff]
    %v3875 = vld [vmem:[%s5 + $0x180] sm:$0xff]
    %v3876 = vld [vmem:[%s5 + $0x188] sm:$0xff]
    %v3877 = vld [vmem:[%s5 + $0x190] sm:$0xff]
    %v3878 = vld [vmem:[%s5 + $0x198] sm:$0xff]
    %v3879 = vld [vmem:[%s5 + $0x1a0] sm:$0xff]
    %v3880 = vld [vmem:[%s5 + $0x1a8] sm:$0xff]
    %v3881 = vld [vmem:[%s5 + $0x1b0] sm:$0xff]
    %v3882 = vld [vmem:[%s5 + $0x1b8] sm:$0xff]
    %v3883 = vld [vmem:[%s5 + $0x1c0] sm:$0xff]
    %v3884 = vld [vmem:[%s5 + $0x1c8] sm:$0xff]
    %v3885 = vld [vmem:[%s5 + $0x1d0] sm:$0xff]
    %v3886 = vld [vmem:[%s5 + $0x1d8] sm:$0xff]
    %v3887 = vld [vmem:[%s5 + $0x1e0] sm:$0xff]
    %v3888 = vld [vmem:[%s5 + $0x1e8] sm:$0xff]
    %v3889 = vld [vmem:[%s5 + $0x1f0] sm:$0xff]
    %v3890 = vld [vmem:[%s5 + $0x1f8] sm:$0xff]
    %v3891 = vld [vmem:[%s5 + $0x200] sm:$0xff]
    %v3892 = vld [vmem:[%s5 + $0x208] sm:$0xff]
    %v3893 = vld [vmem:[%s5 + $0x210] sm:$0xff]
    %v3894 = vld [vmem:[%s5 + $0x218] sm:$0xff]
    %v3895 = vld [vmem:[%s5 + $0x220] sm:$0xff]
    %v3896 = vld [vmem:[%s5 + $0x228] sm:$0xff]
    %v3897 = vld [vmem:[%s5 + $0x230] sm:$0xff]
    %v3898 = vld [vmem:[%s5 + $0x238] sm:$0xff]
    %v3899 = vld [vmem:[%s5 + $0x240] sm:$0xff]
    %v3900 = vld [vmem:[%s5 + $0x248] sm:$0xff]
    %v3901 = vld [vmem:[%s5 + $0x250] sm:$0xff]
    %v3902 = vld [vmem:[%s5 + $0x258] sm:$0xff]
    %v3903 = vld [vmem:[%s5 + $0x260] sm:$0xff]
    %v3904 = vld [vmem:[%s5 + $0x268] sm:$0xff]
    %v3905 = vld [vmem:[%s5 + $0x270] sm:$0xff]
    %v3906 = vld [vmem:[%s5 + $0x278] sm:$0xff]
    %v3907 = vld [vmem:[%s5 + $0x280] sm:$0xff]
    %v3908 = vld [vmem:[%s5 + $0x288] sm:$0xff]
    %v3909 = vld [vmem:[%s5 + $0x290] sm:$0xff]
    %v3910 = vld [vmem:[%s5 + $0x298] sm:$0xff]
    %v3911 = vld [vmem:[%s5 + $0x2a0] sm:$0xff]
    %v3912 = vld [vmem:[%s5 + $0x2a8] sm:$0xff]
    %v3913 = vld [vmem:[%s5 + $0x2b0] sm:$0xff]
    %v3914 = vld [vmem:[%s5 + $0x2b8] sm:$0xff]
    %v3915 = vld [vmem:[%s5 + $0x2c0] sm:$0xff]
    %v3916 = vld [vmem:[%s5 + $0x2c8] sm:$0xff]
    %v3917 = vld [vmem:[%s5 + $0x2d0] sm:$0xff]
    %v3918 = vld [vmem:[%s5 + $0x2d8] sm:$0xff]
    %v3919 = vld [vmem:[%s5 + $0x2e0] sm:$0xff]
    %v3920 = vld [vmem:[%s5 + $0x2e8] sm:$0xff]
    %v3921 = vld [vmem:[%s5 + $0x2f0] sm:$0xff]
    %v3922 = vld [vmem:[%s5 + $0x2f8] sm:$0xff]
    %v3923 = vld [vmem:[%s5 + $0x300] sm:$0xff]
    %v3924 = vld [vmem:[%s5 + $0x308] sm:$0xff]
    %v3925 = vld [vmem:[%s5 + $0x310] sm:$0xff]
    %v3926 = vld [vmem:[%s5 + $0x318] sm:$0xff]
    %v3927 = vld [vmem:[%s5 + $0x320] sm:$0xff]
    %v3928 = vld [vmem:[%s5 + $0x328] sm:$0xff]
    %v3929 = vld [vmem:[%s5 + $0x330] sm:$0xff]
    %v3930 = vld [vmem:[%s5 + $0x338] sm:$0xff]
    %v3931 = vld [vmem:[%s5 + $0x340] sm:$0xff]
    %v3932 = vld [vmem:[%s5 + $0x348] sm:$0xff]
    %v3933 = vld [vmem:[%s5 + $0x350] sm:$0xff]
    %v3934 = vld [vmem:[%s5 + $0x358] sm:$0xff]
    %v3935 = vld [vmem:[%s5 + $0x360] sm:$0xff]
    %v3936 = vld [vmem:[%s5 + $0x368] sm:$0xff]
    %v3937 = vld [vmem:[%s5 + $0x370] sm:$0xff]
    %v3938 = vld [vmem:[%s5 + $0x378] sm:$0xff]
    %v3939 = vld [vmem:[%s5 + $0x380] sm:$0xff]
    %v3940 = vld [vmem:[%s5 + $0x388] sm:$0xff]
    %v3941 = vld [vmem:[%s5 + $0x390] sm:$0xff]
    %v3942 = vld [vmem:[%s5 + $0x398] sm:$0xff]
    %v3943 = vld [vmem:[%s5 + $0x3a0] sm:$0xff]
    %v3944 = vld [vmem:[%s5 + $0x3a8] sm:$0xff]
    %v3945 = vld [vmem:[%s5 + $0x3b0] sm:$0xff]
    %v3946 = vld [vmem:[%s5 + $0x3b8] sm:$0xff]
    %v3947 = vld [vmem:[%s5 + $0x3c0] sm:$0xff]
    %v3948 = vld [vmem:[%s5 + $0x3c8] sm:$0xff]
    %v3949 = vld [vmem:[%s5 + $0x3d0] sm:$0xff]
    %v3950 = vld [vmem:[%s5 + $0x3d8] sm:$0xff]
    %v3951 = vld [vmem:[%s5 + $0x3e0] sm:$0xff]
    %v3952 = vld [vmem:[%s5 + $0x3e8] sm:$0xff]
    %v3953 = vld [vmem:[%s5 + $0x3f0] sm:$0xff]
    %v3954 = vld [vmem:[%s5 + $0x3f8] sm:$0xff]
    %v3955 = vld [vmem:[%s5 + $0x400] sm:$0xff]
    %v3956 = vld [vmem:[%s5 + $0x408] sm:$0xff]
    %v3957 = vld [vmem:[%s5 + $0x410] sm:$0xff]
    %v3958 = vld [vmem:[%s5 + $0x418] sm:$0xff]
    %v3959 = vld [vmem:[%s5 + $0x420] sm:$0xff]
    %v3960 = vld [vmem:[%s5 + $0x428] sm:$0xff]
    %v3961 = vld [vmem:[%s5 + $0x430] sm:$0xff]
    %v3962 = vld [vmem:[%s5 + $0x438] sm:$0xff]
    %v3963 = vld [vmem:[%s5 + $0x440] sm:$0xff]
    %v3964 = vld [vmem:[%s5 + $0x448] sm:$0xff]
    %v3965 = vld [vmem:[%s5 + $0x450] sm:$0xff]
    %v3966 = vld [vmem:[%s5 + $0x458] sm:$0xff]
    %v3967 = vld [vmem:[%s5 + $0x460] sm:$0xff]
    %v3968 = vld [vmem:[%s5 + $0x468] sm:$0xff]
    %v3969 = vld [vmem:[%s5 + $0x470] sm:$0xff]
    %v3970 = vld [vmem:[%s5 + $0x478] sm:$0xff]
    %v3971 = vld [vmem:[%s5 + $0x480] sm:$0xff]
    %v3972 = vld [vmem:[%s5 + $0x488] sm:$0xff]
    %v3973 = vld [vmem:[%s5 + $0x490] sm:$0xff]
    %v3974 = vld [vmem:[%s5 + $0x498] sm:$0xff]
    %v3975 = vld [vmem:[%s5 + $0x4a0] sm:$0xff]
    %v3976 = vld [vmem:[%s5 + $0x4a8] sm:$0xff]
    %v3977 = vld [vmem:[%s5 + $0x4b0] sm:$0xff]
    %v3978 = vld [vmem:[%s5 + $0x4b8] sm:$0xff]
    %v3979 = vld [vmem:[%s5 + $0x4c0] sm:$0xff]
    %v3980 = vld [vmem:[%s5 + $0x4c8] sm:$0xff]
    %v3981 = vld [vmem:[%s5 + $0x4d0] sm:$0xff]
    %v3982 = vld [vmem:[%s5 + $0x4d8] sm:$0xff]
    %v3983 = vld [vmem:[%s5 + $0x4e0] sm:$0xff]
    %v3984 = vld [vmem:[%s5 + $0x4e8] sm:$0xff]
    %v3985 = vld [vmem:[%s5 + $0x4f0] sm:$0xff]
    %v3986 = vld [vmem:[%s5 + $0x4f8] sm:$0xff]
    %v3987 = vld [vmem:[%s5 + $0x500] sm:$0xff]
    %v3988 = vld [vmem:[%s5 + $0x508] sm:$0xff]
    %v3989 = vld [vmem:[%s5 + $0x510] sm:$0xff]
    %v3990 = vld [vmem:[%s5 + $0x518] sm:$0xff]
    %v3991 = vld [vmem:[%s5 + $0x520] sm:$0xff]
    %v3992 = vld [vmem:[%s5 + $0x528] sm:$0xff]
    %v3993 = vld [vmem:[%s5 + $0x530] sm:$0xff]
    %v3994 = vld [vmem:[%s5 + $0x538] sm:$0xff]
    %v3995 = vld [vmem:[%s5 + $0x540] sm:$0xff]
    %v3996 = vld [vmem:[%s5 + $0x548] sm:$0xff]
    %v3997 = vld [vmem:[%s5 + $0x550] sm:$0xff]
    %v3998 = vld [vmem:[%s5 + $0x558] sm:$0xff]
    %v3999 = vld [vmem:[%s5 + $0x560] sm:$0xff]
    %v4000 = vld [vmem:[%s5 + $0x568] sm:$0xff]
    %v4001 = vld [vmem:[%s5 + $0x570] sm:$0xff]
    %v4002 = vld [vmem:[%s5 + $0x578] sm:$0xff]
    %v4003 = vld [vmem:[%s5 + $0x580] sm:$0xff]
    %v4004 = vld [vmem:[%s5 + $0x588] sm:$0xff]
    %v4005 = vld [vmem:[%s5 + $0x590] sm:$0xff]
    %v4006 = vld [vmem:[%s5 + $0x598] sm:$0xff]
    %v4007 = vld [vmem:[%s5 + $0x5a0] sm:$0xff]
    %v4008 = vld [vmem:[%s5 + $0x5a8] sm:$0xff]
    %v4009 = vld [vmem:[%s5 + $0x5b0] sm:$0xff]
    %v4010 = vld [vmem:[%s5 + $0x5b8] sm:$0xff]
    %v4011 = vld [vmem:[%s5 + $0x5c0] sm:$0xff]
    %v4012 = vld [vmem:[%s5 + $0x5c8] sm:$0xff]
    %v4013 = vld [vmem:[%s5 + $0x5d0] sm:$0xff]
    %v4014 = vld [vmem:[%s5 + $0x5d8] sm:$0xff]
    %v4015 = vld [vmem:[%s5 + $0x5e0] sm:$0xff]
    %v4016 = vld [vmem:[%s5 + $0x5e8] sm:$0xff]
    %v4017 = vld [vmem:[%s5 + $0x5f0] sm:$0xff]
    %v4018 = vld [vmem:[%s5 + $0x5f8] sm:$0xff]
    %v4019 = vld [vmem:[%s5 + $0x600] sm:$0xff]
    %v4020 = vld [vmem:[%s5 + $0x608] sm:$0xff]
    %v4021 = vld [vmem:[%s5 + $0x610] sm:$0xff]
    %v4022 = vld [vmem:[%s5 + $0x618] sm:$0xff]
    %v4023 = vld [vmem:[%s5 + $0x620] sm:$0xff]
    %v4024 = vld [vmem:[%s5 + $0x628] sm:$0xff]
    %v4025 = vld [vmem:[%s5 + $0x630] sm:$0xff]
    %v4026 = vld [vmem:[%s5 + $0x638] sm:$0xff]
    %v4027 = vld [vmem:[%s6] sm:$0x1]
    %v4029 = vperm.slane %v4027, 0
    %4035 = vst [vmem:[#allocation1] ss:$4 sm:$0xff] %v3823
    %s4036 = scalar_lea.vmem [#allocation1], 32
    %4037 = vst [vmem:[%s4036] ss:$4 sm:$0xff] %v3824
    %v4038 = vld.sshfl [vmem:[#allocation1] sm:$0xff pattern:$0x73625140]
    %v4039 = vld.sshfl [vmem:[#allocation1 + $0x8] sm:$0xff pattern:$0x73625140]
    %v4040 = vld.sshfl [vmem:[#allocation1 + $0x10] sm:$0xff pattern:$0x73625140]
    %v4041 = vld.sshfl [vmem:[#allocation1 + $0x18] sm:$0xff pattern:$0x73625140]
    %v4042 = vld.sshfl [vmem:[#allocation1 + $0x20] sm:$0xff pattern:$0x73625140]
    %v4043 = vld.sshfl [vmem:[#allocation1 + $0x28] sm:$0xff pattern:$0x73625140]
    %v4044 = vld.sshfl [vmem:[#allocation1 + $0x30] sm:$0xff pattern:$0x73625140]
    %v4045 = vld.sshfl [vmem:[#allocation1 + $0x38] sm:$0xff pattern:$0x73625140]
    %4046 = vst [vmem:[#allocation1] ss:$4 sm:$0xff] %v3825
    %4047 = vst [vmem:[%s4036] ss:$4 sm:$0xff] %v3826
    %v4048 = vld.sshfl [vmem:[#allocation1] sm:$0xff pattern:$0x73625140]
    %v4049 = vld.sshfl [vmem:[#allocation1 + $0x8] sm:$0xff pattern:$0x73625140]
    %v4050 = vld.sshfl [vmem:[#allocation1 + $0x10] sm:$0xff pattern:$0x73625140]
    %v4051 = vld.sshfl [vmem:[#allocation1 + $0x18] sm:$0xff pattern:$0x73625140]
    %v4052 = vld.sshfl [vmem:[#allocation1 + $0x20] sm:$0xff pattern:$0x73625140]
    %vm4065 = vcmask 523264
    %v4066 = vsel %vm4065, %v4052, 0
    %4068 = vmatpush.msra.mxu0 %v3842
    %4069 = vmatpush.msra.mxu0 %v3841
    %4070 = vmatpush.msra.mxu0 %v3840
    %4071 = vmatpush.msra.mxu0 %v3839
    %4072 = vmatpush.msra.mxu0 %v3838
    %4073 = vmatpush.msra.mxu0 %v3837
    %4074 = vmatpush.msra.mxu0 %v3836
    %4075 = vmatpush.msra.mxu0 %v3835
    %4076 = vmatpush.msra.mxu0 %v3834
    %4077 = vmatpush.msra.mxu0 %v3833
    %4078 = vmatpush.msra.mxu0 %v3832
    %4079 = vmatpush.msra.mxu0 %v3831
    %4080 = vmatpush.msra.mxu0 %v3830
    %4081 = vmatpush.msra.mxu0 %v3829
    %4082 = vmatpush.msra.mxu0 %v3828
    %4083 = vmatpush.msra.mxu0 %v3827
    %4084 = vmatmul.f32.gmra.mxu0 %v4038
    %v4085 = vpop.f32.mrf.mxu0
    %v4086 = vadd.f32 %v4029, %v4085
    %4087 = vdwg.mxu0
    %4088 = vmatpush.msra.mxu0 %v3858
    %4089 = vmatpush.msra.mxu0 %v3857
    %4090 = vmatpush.msra.mxu0 %v3856
    %4091 = vmatpush.msra.mxu0 %v3855
    %4092 = vmatpush.msra.mxu0 %v3854
    %4093 = vmatpush.msra.mxu0 %v3853
    %4094 = vmatpush.msra.mxu0 %v3852
    %4095 = vmatpush.msra.mxu0 %v3851
    %4096 = vmatpush.msra.mxu0 %v3850
    %4097 = vmatpush.msra.mxu0 %v3849
    %4098 = vmatpush.msra.mxu0 %v3848
    %4099 = vmatpush.msra.mxu0 %v3847
    %4100 = vmatpush.msra.mxu0 %v3846
    %4101 = vmatpush.msra.mxu0 %v3845
    %4102 = vmatpush.msra.mxu0 %v3844
    %4103 = vmatpush.msra.mxu0 %v3843
    %4104 = vmatmul.f32.gmra.mxu0 %v4039
    %v4105 = vpop.f32.mrf.mxu0
    %v4106 = vadd.f32 %v4086, %v4105
    %4107 = vdwg.mxu0
    %4108 = vmatpush.msra.mxu0 %v3874
    %4109 = vmatpush.msra.mxu0 %v3873
    %4110 = vmatpush.msra.mxu0 %v3872
    %4111 = vmatpush.msra.mxu0 %v3871
    %4112 = vmatpush.msra.mxu0 %v3870
    %4113 = vmatpush.msra.mxu0 %v3869
    %4114 = vmatpush.msra.mxu0 %v3868
    %4115 = vmatpush.msra.mxu0 %v3867
    %4116 = vmatpush.msra.mxu0 %v3866
    %4117 = vmatpush.msra.mxu0 %v3865
    %4118 = vmatpush.msra.mxu0 %v3864
    %4119 = vmatpush.msra.mxu0 %v3863
    %4120 = vmatpush.msra.mxu0 %v3862
    %4121 = vmatpush.msra.mxu0 %v3861
    %4122 = vmatpush.msra.mxu0 %v3860
    %4123 = vmatpush.msra.mxu0 %v3859
    %4124 = vmatmul.f32.gmra.mxu0 %v4040
    %v4125 = vpop.f32.mrf.mxu0
    %v4126 = vadd.f32 %v4106, %v4125
    %4127 = vdwg.mxu0
    %4128 = vmatpush.msra.mxu0 %v3890
    %4129 = vmatpush.msra.mxu0 %v3889
    %4130 = vmatpush.msra.mxu0 %v3888
    %4131 = vmatpush.msra.mxu0 %v3887
    %4132 = vmatpush.msra.mxu0 %v3886
    %4133 = vmatpush.msra.mxu0 %v3885
    %4134 = vmatpush.msra.mxu0 %v3884
    %4135 = vmatpush.msra.mxu0 %v3883
    %4136 = vmatpush.msra.mxu0 %v3882
    %4137 = vmatpush.msra.mxu0 %v3881
    %4138 = vmatpush.msra.mxu0 %v3880
    %4139 = vmatpush.msra.mxu0 %v3879
    %4140 = vmatpush.msra.mxu0 %v3878
    %4141 = vmatpush.msra.mxu0 %v3877
    %4142 = vmatpush.msra.mxu0 %v3876
    %4143 = vmatpush.msra.mxu0 %v3875
    %4144 = vmatmul.f32.gmra.mxu0 %v4041
    %v4145 = vpop.f32.mrf.mxu0
    %v4146 = vadd.f32 %v4126, %v4145
    %4147 = vdwg.mxu0
    %4148 = vmatpush.msra.mxu0 %v3906
    %4149 = vmatpush.msra.mxu0 %v3905
    %4150 = vmatpush.msra.mxu0 %v3904
    %4151 = vmatpush.msra.mxu0 %v3903
    %4152 = vmatpush.msra.mxu0 %v3902
    %4153 = vmatpush.msra.mxu0 %v3901
    %4154 = vmatpush.msra.mxu0 %v3900
    %4155 = vmatpush.msra.mxu0 %v3899
    %4156 = vmatpush.msra.mxu0 %v3898
    %4157 = vmatpush.msra.mxu0 %v3897
    %4158 = vmatpush.msra.mxu0 %v3896
    %4159 = vmatpush.msra.mxu0 %v3895
    %4160 = vmatpush.msra.mxu0 %v3894
    %4161 = vmatpush.msra.mxu0 %v3893
    %4162 = vmatpush.msra.mxu0 %v3892
    %4163 = vmatpush.msra.mxu0 %v3891
    %4164 = vmatmul.f32.gmra.mxu0 %v4042
    %v4165 = vpop.f32.mrf.mxu0
    %v4166 = vadd.f32 %v4146, %v4165
    %4167 = vdwg.mxu0
    %4168 = vmatpush.msra.mxu0 %v3922
    %4169 = vmatpush.msra.mxu0 %v3921
    %4170 = vmatpush.msra.mxu0 %v3920
    %4171 = vmatpush.msra.mxu0 %v3919
    %4172 = vmatpush.msra.mxu0 %v3918
    %4173 = vmatpush.msra.mxu0 %v3917
    %4174 = vmatpush.msra.mxu0 %v3916
    %4175 = vmatpush.msra.mxu0 %v3915
    %4176 = vmatpush.msra.mxu0 %v3914
    %4177 = vmatpush.msra.mxu0 %v3913
    %4178 = vmatpush.msra.mxu0 %v3912
    %4179 = vmatpush.msra.mxu0 %v3911
    %4180 = vmatpush.msra.mxu0 %v3910
    %4181 = vmatpush.msra.mxu0 %v3909
    %4182 = vmatpush.msra.mxu0 %v3908
    %4183 = vmatpush.msra.mxu0 %v3907
    %4184 = vmatmul.f32.gmra.mxu0 %v4043
    %v4185 = vpop.f32.mrf.mxu0
    %v4186 = vadd.f32 %v4166, %v4185
    %4187 = vdwg.mxu0
    %4188 = vmatpush.msra.mxu0 %v3938
    %4189 = vmatpush.msra.mxu0 %v3937
    %4190 = vmatpush.msra.mxu0 %v3936
    %4191 = vmatpush.msra.mxu0 %v3935
    %4192 = vmatpush.msra.mxu0 %v3934
    %4193 = vmatpush.msra.mxu0 %v3933
    %4194 = vmatpush.msra.mxu0 %v3932
    %4195 = vmatpush.msra.mxu0 %v3931
    %4196 = vmatpush.msra.mxu0 %v3930
    %4197 = vmatpush.msra.mxu0 %v3929
    %4198 = vmatpush.msra.mxu0 %v3928
    %4199 = vmatpush.msra.mxu0 %v3927
    %4200 = vmatpush.msra.mxu0 %v3926
    %4201 = vmatpush.msra.mxu0 %v3925
    %4202 = vmatpush.msra.mxu0 %v3924
    %4203 = vmatpush.msra.mxu0 %v3923
    %4204 = vmatmul.f32.gmra.mxu0 %v4044
    %v4205 = vpop.f32.mrf.mxu0
    %v4206 = vadd.f32 %v4186, %v4205
    %4207 = vdwg.mxu0
    %4208 = vmatpush.msra.mxu0 %v3954
    %4209 = vmatpush.msra.mxu0 %v3953
    %4210 = vmatpush.msra.mxu0 %v3952
    %4211 = vmatpush.msra.mxu0 %v3951
    %4212 = vmatpush.msra.mxu0 %v3950
    %4213 = vmatpush.msra.mxu0 %v3949
    %4214 = vmatpush.msra.mxu0 %v3948
    %4215 = vmatpush.msra.mxu0 %v3947
    %4216 = vmatpush.msra.mxu0 %v3946
    %4217 = vmatpush.msra.mxu0 %v3945
    %4218 = vmatpush.msra.mxu0 %v3944
    %4219 = vmatpush.msra.mxu0 %v3943
    %4220 = vmatpush.msra.mxu0 %v3942
    %4221 = vmatpush.msra.mxu0 %v3941
    %4222 = vmatpush.msra.mxu0 %v3940
    %4223 = vmatpush.msra.mxu0 %v3939
    %4224 = vmatmul.f32.gmra.mxu0 %v4045
    %v4225 = vpop.f32.mrf.mxu0
    %v4226 = vadd.f32 %v4206, %v4225
    %4227 = vdwg.mxu0
    %4228 = vmatpush.msra.mxu0 %v3970
    %4229 = vmatpush.msra.mxu0 %v3969
    %4230 = vmatpush.msra.mxu0 %v3968
    %4231 = vmatpush.msra.mxu0 %v3967
    %4232 = vmatpush.msra.mxu0 %v3966
    %4233 = vmatpush.msra.mxu0 %v3965
    %4234 = vmatpush.msra.mxu0 %v3964
    %4235 = vmatpush.msra.mxu0 %v3963
    %4236 = vmatpush.msra.mxu0 %v3962
    %4237 = vmatpush.msra.mxu0 %v3961
    %4238 = vmatpush.msra.mxu0 %v3960
    %4239 = vmatpush.msra.mxu0 %v3959
    %4240 = vmatpush.msra.mxu0 %v3958
    %4241 = vmatpush.msra.mxu0 %v3957
    %4242 = vmatpush.msra.mxu0 %v3956
    %4243 = vmatpush.msra.mxu0 %v3955
    %4244 = vmatmul.f32.gmra.mxu0 %v4048
    %v4245 = vpop.f32.mrf.mxu0
    %v4246 = vadd.f32 %v4226, %v4245
    %4247 = vdwg.mxu0
    %4248 = vmatpush.msra.mxu0 %v3986
    %4249 = vmatpush.msra.mxu0 %v3985
    %4250 = vmatpush.msra.mxu0 %v3984
    %4251 = vmatpush.msra.mxu0 %v3983
    %4252 = vmatpush.msra.mxu0 %v3982
    %4253 = vmatpush.msra.mxu0 %v3981
    %4254 = vmatpush.msra.mxu0 %v3980
    %4255 = vmatpush.msra.mxu0 %v3979
    %4256 = vmatpush.msra.mxu0 %v3978
    %4257 = vmatpush.msra.mxu0 %v3977
    %4258 = vmatpush.msra.mxu0 %v3976
    %4259 = vmatpush.msra.mxu0 %v3975
    %4260 = vmatpush.msra.mxu0 %v3974
    %4261 = vmatpush.msra.mxu0 %v3973
    %4262 = vmatpush.msra.mxu0 %v3972
    %4263 = vmatpush.msra.mxu0 %v3971
    %4264 = vmatmul.f32.gmra.mxu0 %v4049
    %v4265 = vpop.f32.mrf.mxu0
    %v4266 = vadd.f32 %v4246, %v4265
    %4267 = vdwg.mxu0
    %4268 = vmatpush.msra.mxu0 %v4002
    %4269 = vmatpush.msra.mxu0 %v4001
    %4270 = vmatpush.msra.mxu0 %v4000
    %4271 = vmatpush.msra.mxu0 %v3999
    %4272 = vmatpush.msra.mxu0 %v3998
    %4273 = vmatpush.msra.mxu0 %v3997
    %4274 = vmatpush.msra.mxu0 %v3996
    %4275 = vmatpush.msra.mxu0 %v3995
    %4276 = vmatpush.msra.mxu0 %v3994
    %4277 = vmatpush.msra.mxu0 %v3993
    %4278 = vmatpush.msra.mxu0 %v3992
    %4279 = vmatpush.msra.mxu0 %v3991
    %4280 = vmatpush.msra.mxu0 %v3990
    %4281 = vmatpush.msra.mxu0 %v3989
    %4282 = vmatpush.msra.mxu0 %v3988
    %4283 = vmatpush.msra.mxu0 %v3987
    %4284 = vmatmul.f32.gmra.mxu0 %v4050
    %v4285 = vpop.f32.mrf.mxu0
    %v4286 = vadd.f32 %v4266, %v4285
    %4287 = vdwg.mxu0
    %4288 = vmatpush.msra.mxu0 %v4018
    %4289 = vmatpush.msra.mxu0 %v4017
    %4290 = vmatpush.msra.mxu0 %v4016
    %4291 = vmatpush.msra.mxu0 %v4015
    %4292 = vmatpush.msra.mxu0 %v4014
    %4293 = vmatpush.msra.mxu0 %v4013
    %4294 = vmatpush.msra.mxu0 %v4012
    %4295 = vmatpush.msra.mxu0 %v4011
    %4296 = vmatpush.msra.mxu0 %v4010
    %4297 = vmatpush.msra.mxu0 %v4009
    %4298 = vmatpush.msra.mxu0 %v4008
    %4299 = vmatpush.msra.mxu0 %v4007
    %4300 = vmatpush.msra.mxu0 %v4006
    %4301 = vmatpush.msra.mxu0 %v4005
    %4302 = vmatpush.msra.mxu0 %v4004
    %4303 = vmatpush.msra.mxu0 %v4003
    %4304 = vmatmul.f32.gmra.mxu0 %v4051
    %v4305 = vpop.f32.mrf.mxu0
    %v4306 = vadd.f32 %v4286, %v4305
    %4307 = vdwg.mxu0
    %4308 = vmatpush.msra.mxu0 0.0
    %4309 = vmatpush.msra.mxu0 0.0
    %4310 = vmatpush.msra.mxu0 0.0
    %4311 = vmatpush.msra.mxu0 0.0
    %4312 = vmatpush.msra.mxu0 0.0
    %4313 = vmatpush.msra.mxu0 0.0
    %4314 = vmatpush.msra.mxu0 0.0
    %4315 = vmatpush.msra.mxu0 0.0
    %4316 = vmatpush.msra.mxu0 %v4026
    %4317 = vmatpush.msra.mxu0 %v4025
    %4318 = vmatpush.msra.mxu0 %v4024
    %4319 = vmatpush.msra.mxu0 %v4023
    %4320 = vmatpush.msra.mxu0 %v4022
    %4321 = vmatpush.msra.mxu0 %v4021
    %4322 = vmatpush.msra.mxu0 %v4020
    %4323 = vmatpush.msra.mxu0 %v4019
    %4324 = vmatmul.f32.gmra.mxu0 %v4066
    %v4325 = vpop.f32.mrf.mxu0
    %v4326 = vadd.f32 %v4306, %v4325
    %4327 = vdwg.mxu0
    %v4328 = vmax.f32 %v4326, 0.0
    %v4329 = vld [vmem:[%s7] sm:$0xff]
    %v4330 = vld [vmem:[%s7 + $0x8] sm:$0xff]
    %v4331 = vld [vmem:[%s7 + $0x10] sm:$0xff]
    %v4332 = vld [vmem:[%s7 + $0x18] sm:$0xff]
    %v4333 = vld [vmem:[%s7 + $0x20] sm:$0xff]
    %v4334 = vld [vmem:[%s7 + $0x28] sm:$0xff]
    %v4335 = vld [vmem:[%s7 + $0x30] sm:$0xff]
    %v4336 = vld [vmem:[%s7 + $0x38] sm:$0xff]
    %v4337 = vld [vmem:[%s8] sm:$0x1]
    %v4339 = vperm.slane %v4337, 0
    %v4342 = vsel %vm4065, %v4328, 0
    %4344 = vmatpush.msra.mxu0 0.0
    %4345 = vmatpush.msra.mxu0 0.0
    %4346 = vmatpush.msra.mxu0 0.0
    %4347 = vmatpush.msra.mxu0 0.0
    %4348 = vmatpush.msra.mxu0 0.0
    %4349 = vmatpush.msra.mxu0 0.0
    %4350 = vmatpush.msra.mxu0 0.0
    %4351 = vmatpush.msra.mxu0 0.0
    %4352 = vmatpush.msra.mxu0 %v4336
    %4353 = vmatpush.msra.mxu0 %v4335
    %4354 = vmatpush.msra.mxu0 %v4334
    %4355 = vmatpush.msra.mxu0 %v4333
    %4356 = vmatpush.msra.mxu0 %v4332
    %4357 = vmatpush.msra.mxu0 %v4331
    %4358 = vmatpush.msra.mxu0 %v4330
    %4359 = vmatpush.msra.mxu0 %v4329
    %4360 = vmatmul.f32.gmra.mxu0 %v4342
    %v4361 = vpop.f32.mrf.mxu0
    %v4362 = vadd.f32 %v4339, %v4361
    %4363 = vdwg.mxu0
    %vm4364 = vcmask 82944
    %4365 = vst.msk [vmem:[#allocation3] sm:$0x3] %vm4364, %v4362
    // Predicated region
    $region38: #{simple_cnn_forward.1} parent=1 // pred_check
      _
    $region39: #{simple_cnn_forward.1} parent=1 // pred_check_branch
      %4367 = sbr.rel (0) target = $region41
    $region40: #{simple_cnn_forward.1} parent=1 // pred_region
      %4369 = vsyncadd [#allocation4], 0
      %s4371 = sshll.u32 [#allocation3], 4
      %s4372 = int_to_ptr.vmem [resolvable:$true] %s4371
      %s4373 = sshll.u32 %s9, 4
      %s4374 = int_to_ptr.hbm [resolvable:$true] %s4373
      %4376 = dma.vmem_to_hbm [thread:$0]  %s4372, 32, %s4374, [#allocation4]
    $region41: #{simple_cnn_forward.1} parent=1 // pred_fallthru
      _
    // Predicated region
    $region42: #{simple_cnn_forward.1} parent=1 // pred_check
      _
    $region43: #{simple_cnn_forward.1} parent=1 // pred_check_branch
      %4378 = sbr.rel (0) target = $region45
    $region44: #{simple_cnn_forward.1} parent=1 // pred_region
      %4380 = dma.done [#allocation4], 32
    $region45: #{simple_cnn_forward.1} parent=1 // pred_fallthru
      _
    %4381 = vsyncpa [#allocation4], 1

</llo_original>
